<compile_context>
chip_gen: v7x
topology: tpu7x:2x2x1
jax: 0.10.0
libtpu: 0.0.40
codegen_flags: <defaults>
</compile_context>

<pallas_src>
import functools
import math

import jax
import jax.numpy as jnp
from jax import lax
from jax.experimental import pallas as pl
from jax.experimental.pallas import tpu as pltpu


# ----------------------------------------------------------------------------
# Fused kernel factory
# ----------------------------------------------------------------------------
def _make_fused_kernel(hl, wl, up, ci, cs, co, n_rep, has_proj, out_dtype):
    """One batch element (full spatial extent) per grid step.

    Hi-res tensors are held polyphase: plane[pi, pj][i0, j0] = T[i0*up+pi, j0*up+pj],
    each plane with a 1-pixel zero halo (VMEM scratch (up, up, hl+2, wl+2, C)).
    Nearest upsample in phase space is trivial: every phase sees x itself.
    """
    P = hl * wl
    nph = up * up
    phases = [(pi, pj) for pi in range(up) for pj in range(up)]

    def kernel(*refs):
        refs = list(refs)
        x_ref = refs.pop(0)          # (1, P, ci)            bf16 low-res input
        skip_ref = refs.pop(0)       # (1, nph*P, cs)        bf16 phase-major skip
        wp_ref = bp_ref = None
        if has_proj:
            wp_ref = refs.pop(0)     # (cs, ci)   bf16
            bp_ref = refs.pop(0)     # (1, ci)    f32
        wc1_ref = refs.pop(0)        # (9*ci, co) bf16
        bc1_ref = refs.pop(0)        # (1, co)    f32
        wr_ref = br_ref = None
        if n_rep > 1:
            wr_ref = refs.pop(0)     # (n_rep-1, 9*co, co) bf16
            br_ref = refs.pop(0)     # (n_rep-1, 1, co)    f32
        out_ref = refs.pop(0)        # (1, nph*P, co)
        s_in = refs.pop(0)           # (up, up, hl+2, wl+2, ci) f32
        s_a = refs.pop(0) if n_rep >= 2 else None
        s_b = refs.pop(0) if n_rep >= 3 else None

        # --- bulk halo zero (the zero ring == the conv's zero padding).
        s_in[...] = jnp.zeros_like(s_in)
        if s_a is not None:
            s_a[...] = jnp.zeros_like(s_a)
        if s_b is not None:
            s_b[...] = jnp.zeros_like(s_b)

        # --- stage 1: S = nearest_upsample(x) + proj(skip), all phases in one matmul.
        x_f32 = x_ref[0].astype(jnp.float32)                    # (P, ci)
        skip_all = skip_ref[0]                                  # (nph*P, cs) bf16
        if has_proj:
            s = jnp.dot(skip_all, wp_ref[...],
                        preferred_element_type=jnp.float32)     # (nph*P, ci)
            s = s + bp_ref[...]                                 # one bias broadcast
        else:
            s = skip_all.astype(jnp.float32)
        s = s.reshape(nph, P, ci) + x_f32[None]                 # up(x): same x per phase
        for idx, (pi, pj) in enumerate(phases):
            s_in[pi, pj, 1:hl + 1, 1:wl + 1, :] = s[idx].reshape(hl, wl, ci)

        # --- 3x3 conv (+bias+ReLU): ONE im2col matmul per layer covering all phases.
        def conv3x3(src, c_in, w_mat, b_row, dst):
            phase_patches = []
            for pi, pj in phases:
                taps = []
                for dy in range(3):
                    qi = pi + dy - 1              # hi-res row offset in [-1, up]
                    spi, si = qi % up, qi // up   # source phase / low-res shift
                    for dx in range(3):
                        qj = pj + dx - 1
                        spj, sj = qj % up, qj // up
                        taps.append(src[spi, spj,
                                        1 + si:1 + si + hl,
                                        1 + sj:1 + sj + wl, :])
                # im2col for this phase: (P, 9*c_in)
                phase_patches.append(
                    jnp.concatenate(taps, axis=-1).reshape(P, 9 * c_in))
            # TODO(synk): if this lane-concat shows up as relayout copies in the MLIR
            # dump, switch to 9 accumulating K=c_in matmuls into an f32 accumulator.
            patches = jnp.concatenate(phase_patches, axis=0)    # (nph*P, 9*c_in)
            y = jnp.dot(patches.astype(jnp.bfloat16), w_mat,
                        preferred_element_type=jnp.float32)     # (nph*P, co)
            y = jnp.maximum(y + b_row, 0.0)                     # one bias+ReLU per layer
            if dst is None:
                out_ref[0] = y.astype(out_dtype)                # single output store
            else:
                for idx, (pi, pj) in enumerate(phases):
                    dst[pi, pj, 1:hl + 1, 1:wl + 1, :] = (
                        y[idx * P:(idx + 1) * P].reshape(hl, wl, co))

        if n_rep == 1:
            conv3x3(s_in, ci, wc1_ref[...], bc1_ref[...], None)
        else:
            conv3x3(s_in, ci, wc1_ref[...], bc1_ref[...], s_a)
            src, other = s_a, s_b
            for r in range(n_rep - 1):
                last = (r == n_rep - 2)
                conv3x3(src, co, wr_ref[r], br_ref[r], None if last else other)
                if not last:
                    src, other = other, src

    return kernel


# ----------------------------------------------------------------------------
# UpSumBlock forward: one pallas_call, gridded over batch.
# ----------------------------------------------------------------------------
def up_sum_block_forward(x_nchw, skip_nchw, params, up_factor):
    B, ci, hl, wl = x_nchw.shape
    _, cs, H, W = skip_nchw.shape
    up = up_factor
    assert H == hl * up and W == wl * up, "skip must be up_factor x larger than x"
    assert wl % 8 == 0, "low-res width must be a multiple of 8 (sublane tiling)"

    has_proj = params["proj_w"] is not None
    convs = params["convs"]
    n_rep = len(convs)
    co = convs[0][1].shape[-1]
    P = hl * wl
    nph = up * up

    cdt = jnp.bfloat16   # MXU / activation-DMA dtype
    odt = jnp.float32

    # Layout plumbing (one XLA transpose each, same cost class as the NCHW<->NHWC
    # conversion that is needed anyway) + bf16 casts (halve activation DMA bytes):
    #   x:    NCHW -> (B, hl*wl, ci)
    #   skip: NCHW -> phase-major (B, up*up*hl*wl, cs)
    x = jnp.transpose(x_nchw, (0, 2, 3, 1)).reshape(B, P, ci).astype(cdt)
    skip_ph = jnp.transpose(
        skip_nchw.reshape(B, cs, hl, up, wl, up),
        (0, 3, 5, 2, 4, 1)).reshape(B, nph * P, cs).astype(cdt)

    inputs = [x, skip_ph]
    in_specs = [
        pl.BlockSpec((1, P, ci), lambda b: (b, 0, 0)),
        pl.BlockSpec((1, nph * P, cs), lambda b: (b, 0, 0)),
    ]
    if has_proj:
        inputs += [params["proj_w"].astype(cdt), params["proj_b"].reshape(1, ci)]
        in_specs += [pl.BlockSpec((cs, ci), lambda b: (0, 0)),
                     pl.BlockSpec((1, ci), lambda b: (0, 0))]

    wc1, bc1 = convs[0]
    inputs += [wc1.reshape(9 * ci, co).astype(cdt), bc1.reshape(1, co)]
    in_specs += [pl.BlockSpec((9 * ci, co), lambda b: (0, 0)),
                 pl.BlockSpec((1, co), lambda b: (0, 0))]
    if n_rep > 1:
        wr = jnp.stack([wk.reshape(9 * co, co) for wk, _ in convs[1:]]).astype(cdt)
        br = jnp.stack([bk.reshape(1, co) for _, bk in convs[1:]])
        inputs += [wr, br]
        in_specs += [pl.BlockSpec((n_rep - 1, 9 * co, co), lambda b: (0, 0, 0)),
                     pl.BlockSpec((n_rep - 1, 1, co), lambda b: (0, 0, 0))]

    scratch = [pltpu.VMEM((up, up, hl + 2, wl + 2, ci), jnp.float32)]
    if n_rep >= 2:
        scratch.append(pltpu.VMEM((up, up, hl + 2, wl + 2, co), jnp.float32))
    if n_rep >= 3:
        scratch.append(pltpu.VMEM((up, up, hl + 2, wl + 2, co), jnp.float32))

    # ---- size-derived VMEM budget (no hard-coded 64 MiB cap / request). ----
    block_bytes = (P * ci + nph * P * cs) * jnp.dtype(cdt).itemsize \
        + nph * P * co * jnp.dtype(odt).itemsize
    weight_bytes = sum(int(a.size) * a.dtype.itemsize for a in inputs[2:])
    scratch_elems = nph * (hl + 2) * (wl + 2) * ci
    if n_rep >= 2:
        scratch_elems += nph * (hl + 2) * (wl + 2) * co
    if n_rep >= 3:
        scratch_elems += nph * (hl + 2) * (wl + 2) * co
    est = 2 * block_bytes + 2 * weight_bytes + 4 * scratch_elems  # 2x = double buffers
    try:
        phys = getattr(pltpu.get_tpu_info(), "vmem_capacity_bytes", 128 * 1024 * 1024)
    except Exception:  # pragma: no cover - conservative fallback
        phys = 128 * 1024 * 1024
    vmem_limit = int(min(max(2 * est + (4 << 20), 32 << 20), int(phys * 0.75)))

    kernel = _make_fused_kernel(hl, wl, up, ci, cs, co, n_rep, has_proj, odt)

    out_flat = pl.pallas_call(
        kernel,
        out_shape=jax.ShapeDtypeStruct((B, nph * P, co), odt),
        grid_spec=pltpu.PrefetchScalarGridSpec(
            num_scalar_prefetch=0,
            grid=(B,),
            in_specs=in_specs,
            out_specs=pl.BlockSpec((1, nph * P, co), lambda b: (b, 0, 0)),
            scratch_shapes=scratch),
        compiler_params=pltpu.CompilerParams(
            dimension_semantics=("parallel",),
            vmem_limit_bytes=vmem_limit),
    )(*inputs)

    # phase-major -> NCHW in one XLA transpose.
    # TODO(synk): for very large decoder maps, add an H row-tile grid axis with
    # 1-row halo BlockSpecs instead of whole-image blocks (v7x 64 MiB VMEM).
    out = out_flat.reshape(B, up, up, hl, wl, co)
    out = jnp.transpose(out, (0, 5, 3, 1, 4, 2)).reshape(B, co, H, W)
    return out


# ----------------------------------------------------------------------------
# Deterministic parameter construction (ConvBNReLU with BN folded, eval mode)
# ----------------------------------------------------------------------------
def _fold_bn(w_oihw, gamma, beta, mean, var, eps=1e-5):
    scale = gamma / jnp.sqrt(var + eps)
    w = w_oihw * scale[:, None, None, None]
    b = beta - mean * scale
    return w, b


def make_params(key, in_ch, skip_ch, out_ch, num_repeats):
    ks = jax.random.split(key, 2 + num_repeats)

    def bn_stats(k, c):
        k1, k2, k3, k4 = jax.random.split(k, 4)
        gamma = 1.0 + 0.1 * jax.random.normal(k1, (c,), jnp.float32)
        beta = 0.1 * jax.random.normal(k2, (c,), jnp.float32)
        mean = 0.1 * jax.random.normal(k3, (c,), jnp.float32)
        var = 1.0 + 0.1 * jnp.abs(jax.random.normal(k4, (c,), jnp.float32))
        return gamma, beta, mean, var

    params = {}
    if skip_ch == in_ch:
        params["proj_w"] = None   # nn.Identity()
        params["proj_b"] = None
    else:
        kw, kb = jax.random.split(ks[0])
        w = 0.2 * jax.random.normal(kw, (in_ch, skip_ch, 1, 1), jnp.float32)
        w, b = _fold_bn(w, *bn_stats(kb, in_ch))
        params["proj_w"] = w[:, :, 0, 0].T   # (skip_ch, in_ch)
        params["proj_b"] = b

    convs = []
    cin = in_ch
    for r in range(num_repeats):
        kw, kb = jax.random.split(ks[1 + r])
        w = 0.2 * jax.random.normal(kw, (out_ch, cin, 3, 3), jnp.float32)
        w, b = _fold_bn(w, *bn_stats(kb, out_ch))
        w_kio = jnp.transpose(w, (2, 3, 1, 0)).reshape(9, cin, out_ch)  # (9,Cin,Cout)
        convs.append((w_kio, b))
        cin = out_ch
    params["convs"] = convs
    return params


# ----------------------------------------------------------------------------
# Pure-JAX reference (lax.conv, f32) for verification
# ----------------------------------------------------------------------------
def reference_forward(x_nchw, skip_nchw, params, up_factor):
    dn = ("NHWC", "HWIO", "NHWC")
    x = jnp.transpose(x_nchw, (0, 2, 3, 1))
    skip = jnp.transpose(skip_nchw, (0, 2, 3, 1))

    if params["proj_w"] is not None:
        w1 = params["proj_w"][None, None]  # (1,1,Cin,Cout)
        skip = lax.conv_general_dilated(skip, w1, (1, 1), "VALID",
                                        dimension_numbers=dn)
        skip = skip + params["proj_b"]

    x = jnp.repeat(jnp.repeat(x, up_factor, axis=1), up_factor, axis=2)
    y = x + skip
    for w_kio, b in params["convs"]:
        cin, cout = w_kio.shape[1], w_kio.shape[2]
        w_hwio = w_kio.reshape(3, 3, cin, cout)
        y = lax.conv_general_dilated(y, w_hwio, (1, 1), "SAME",
                                     dimension_numbers=dn)
        y = jnp.maximum(y + b, 0.0)
    return jnp.transpose(y, (0, 3, 1, 2))


# ----------------------------------------------------------------------------
if __name__ == "__main__":
    # Module config (skip_ch != in_ch so proj_conv is a real ConvBN)
    in_channels, skip_channels, out_channels = 4, 8, 8
    up_factor, num_repeats = 2, 2
    B, H, W = 2, 8, 8  # x spatial; skip spatial = (H*up, W*up)

    key = jax.random.PRNGKey(0)
    kx, ks, kp = jax.random.split(key, 3)
    x = jax.random.normal(kx, (B, in_channels, H, W), jnp.float32)
    skip = jax.random.normal(
        ks, (B, skip_channels, H * up_factor, W * up_factor), jnp.float32)
    # Pre-round activations to bf16-representable values so the bf16 cast inside
    # the wrapper is lossless; the remaining kernel/reference delta is bf16 MXU
    # rounding of weights/patches (tolerance loosened per the perf review).
    x = x.astype(jnp.bfloat16).astype(jnp.float32)
    skip = skip.astype(jnp.bfloat16).astype(jnp.float32)
    params = make_params(kp, in_channels, skip_channels, out_channels, num_repeats)

    fwd = jax.jit(functools.partial(up_sum_block_forward, up_factor=up_factor))
    out = fwd(x, skip, params)
    out = jax.block_until_ready(out)

    ref = reference_forward(x, skip, params, up_factor)
    assert out.shape == (B, out_channels, H * up_factor, W * up_factor), out.shape
    max_err = float(jnp.max(jnp.abs(out - ref)))
    assert jnp.allclose(out, ref, atol=7e-2, rtol=7e-2), max_err

    print("KERNEL_OK")
</pallas_src>

<mosaic_0001>
module attributes {stable_mosaic.version = 11 : i64} {
  func.func @kernel(%arg0: i32, %arg1: memref<1x64x4xbf16, #tpu.memory_space<vmem>>, %arg2: memref<1x256x8xbf16, #tpu.memory_space<vmem>>, %arg3: memref<8x4xbf16, #tpu.memory_space<vmem>>, %arg4: memref<1x4xf32, #tpu.memory_space<vmem>>, %arg5: memref<36x8xbf16, #tpu.memory_space<vmem>>, %arg6: memref<1x8xf32, #tpu.memory_space<vmem>>, %arg7: memref<1x72x8xbf16, #tpu.memory_space<vmem>>, %arg8: memref<1x1x8xf32, #tpu.memory_space<vmem>>, %arg9: memref<1x256x8xf32, #tpu.memory_space<vmem>>, %arg10: memref<2x2x10x10x4xf32, #tpu.memory_space<vmem>>, %arg11: memref<2x2x10x10x8xf32, #tpu.memory_space<vmem>>) attributes {dimension_semantics = [#tpu.dimension_semantics<parallel>], iteration_bounds = array<i64: 2>, scalar_prefetch = 0 : i64, scratch_operands = 2 : i64, tpu.core_type = #tpu.core_type<tc>, window_params = [{transform_indices = @transform_0, window_bounds = array<i64: 1, 64, 4>}, {transform_indices = @transform_1, window_bounds = array<i64: 1, 256, 8>}, {pipeline_mode = #tpu.pipeline_mode<synchronous>, transform_indices = @transform_2, window_bounds = array<i64: 8, 4>}, {pipeline_mode = #tpu.pipeline_mode<synchronous>, transform_indices = @transform_3, window_bounds = array<i64: 1, 4>}, {pipeline_mode = #tpu.pipeline_mode<synchronous>, transform_indices = @transform_4, window_bounds = array<i64: 36, 8>}, {pipeline_mode = #tpu.pipeline_mode<synchronous>, transform_indices = @transform_5, window_bounds = array<i64: 1, 8>}, {pipeline_mode = #tpu.pipeline_mode<synchronous>, transform_indices = @transform_6, window_bounds = array<i64: 1, 72, 8>}, {pipeline_mode = #tpu.pipeline_mode<synchronous>, transform_indices = @transform_7, window_bounds = array<i64: 1, 1, 8>}, {transform_indices = @transform_8, window_bounds = array<i64: 1, 256, 8>}]} {
    %cst = arith.constant 0.000000e+00 : f32
    %0 = vector.broadcast %cst : f32 to vector<2x2x10x10x4xf32>
    %c0 = arith.constant 0 : index
    %c0_0 = arith.constant 0 : index
    %c0_1 = arith.constant 0 : index
    %c0_2 = arith.constant 0 : index
    %c0_3 = arith.constant 0 : index
    %1 = vector.load %arg10[%c0, %c0_0, %c0_1, %c0_2, %c0_3] : memref<2x2x10x10x4xf32, #tpu.memory_space<vmem>>, vector<2x2x10x10x4xf32>
    tpu.vector_store %arg10[%c0, %c0_0, %c0_1, %c0_2, %c0_3], %0 {strides = array<i32>} : memref<2x2x10x10x4xf32, #tpu.memory_space<vmem>>, vector<2x2x10x10x4xf32>,
    %cst_4 = arith.constant 0.000000e+00 : f32
    %2 = vector.broadcast %cst_4 : f32 to vector<2x2x10x10x8xf32>
    %c0_5 = arith.constant 0 : index
    %c0_6 = arith.constant 0 : index
    %c0_7 = arith.constant 0 : index
    %c0_8 = arith.constant 0 : index
    %c0_9 = arith.constant 0 : index
    %3 = vector.load %arg11[%c0_5, %c0_6, %c0_7, %c0_8, %c0_9] : memref<2x2x10x10x8xf32, #tpu.memory_space<vmem>>, vector<2x2x10x10x8xf32>
    tpu.vector_store %arg11[%c0_5, %c0_6, %c0_7, %c0_8, %c0_9], %2 {strides = array<i32>} : memref<2x2x10x10x8xf32, #tpu.memory_space<vmem>>, vector<2x2x10x10x8xf32>,
    %c0_10 = arith.constant 0 : index
    %c0_11 = arith.constant 0 : index
    %c0_12 = arith.constant 0 : index
    %4 = vector.load %arg1[%c0_10, %c0_11, %c0_12] : memref<1x64x4xbf16, #tpu.memory_space<vmem>>, vector<1x64x4xbf16>
    %5 = vector.shape_cast %4 : vector<1x64x4xbf16> to vector<64x4xbf16>
    %6 = arith.extf %5 : vector<64x4xbf16> to vector<64x4xf32>
    %c0_13 = arith.constant 0 : index
    %c0_14 = arith.constant 0 : index
    %c0_15 = arith.constant 0 : index
    %7 = vector.load %arg2[%c0_13, %c0_14, %c0_15] : memref<1x256x8xbf16, #tpu.memory_space<vmem>>, vector<1x256x8xbf16>
    %8 = vector.shape_cast %7 : vector<1x256x8xbf16> to vector<256x8xbf16>
    %c0_16 = arith.constant 0 : index
    %c0_17 = arith.constant 0 : index
    %9 = vector.load %arg3[%c0_16, %c0_17] : memref<8x4xbf16, #tpu.memory_space<vmem>>, vector<8x4xbf16>
    %cst_18 = arith.constant dense<0.000000e+00> : vector<256x4xf32>
    %10 = tpu.matmul %8, %9, %cst_18 {dimension_numbers = #tpu.dot_dimension_numbers<[1], [0], [0], [1], [0, 0, 1, 1], [], []>} : vector<256x8xbf16>, vector<8x4xbf16>, vector<256x4xf32> -> vector<256x4xf32>
    %c0_19 = arith.constant 0 : index
    %c0_20 = arith.constant 0 : index
    %11 = vector.load %arg4[%c0_19, %c0_20] : memref<1x4xf32, #tpu.memory_space<vmem>>, vector<1x4xf32>
    %12 = vector.broadcast %11 : vector<1x4xf32> to vector<256x4xf32>
    %13 = arith.addf %10, %12 : vector<256x4xf32>
    %14 = vector.shape_cast %13 : vector<256x4xf32> to vector<4x64x4xf32>
    %15 = vector.shape_cast %6 : vector<64x4xf32> to vector<1x64x4xf32>
    %16 = vector.broadcast %15 : vector<1x64x4xf32> to vector<4x64x4xf32>
    %17 = arith.addf %14, %16 : vector<4x64x4xf32>
    %18 = vector.extract_strided_slice %17 {offsets = [0, 0, 0], sizes = [1, 64, 4], strides = [1, 1, 1]} : vector<4x64x4xf32> to vector<1x64x4xf32>
    %19 = vector.shape_cast %18 : vector<1x64x4xf32> to vector<64x4xf32>
    %20 = vector.shape_cast %19 : vector<64x4xf32> to vector<8x8x4xf32>
    %c0_21 = arith.constant 0 : index
    %c0_22 = arith.constant 0 : index
    %c1 = arith.constant 1 : index
    %c1_23 = arith.constant 1 : index
    %c0_24 = arith.constant 0 : index
    %21 = vector.load %arg10[%c0_21, %c0_22, %c1, %c1_23, %c0_24] : memref<2x2x10x10x4xf32, #tpu.memory_space<vmem>>, vector<1x1x8x8x4xf32>
    %22 = vector.shape_cast %21 : vector<1x1x8x8x4xf32> to vector<8x8x4xf32>
    %23 = vector.shape_cast %20 : vector<8x8x4xf32> to vector<1x1x8x8x4xf32>
    tpu.vector_store %arg10[%c0_21, %c0_22, %c1, %c1_23, %c0_24], %23 {strides = array<i32>} : memref<2x2x10x10x4xf32, #tpu.memory_space<vmem>>, vector<1x1x8x8x4xf32>,
    %24 = vector.extract_strided_slice %17 {offsets = [1, 0, 0], sizes = [1, 64, 4], strides = [1, 1, 1]} : vector<4x64x4xf32> to vector<1x64x4xf32>
    %25 = vector.shape_cast %24 : vector<1x64x4xf32> to vector<64x4xf32>
    %26 = vector.shape_cast %25 : vector<64x4xf32> to vector<8x8x4xf32>
    %c0_25 = arith.constant 0 : index
    %c1_26 = arith.constant 1 : index
    %c1_27 = arith.constant 1 : index
    %c1_28 = arith.constant 1 : index
    %c0_29 = arith.constant 0 : index
    %27 = vector.load %arg10[%c0_25, %c1_26, %c1_27, %c1_28, %c0_29] : memref<2x2x10x10x4xf32, #tpu.memory_space<vmem>>, vector<1x1x8x8x4xf32>
    %28 = vector.shape_cast %27 : vector<1x1x8x8x4xf32> to vector<8x8x4xf32>
    %29 = vector.shape_cast %26 : vector<8x8x4xf32> to vector<1x1x8x8x4xf32>
    tpu.vector_store %arg10[%c0_25, %c1_26, %c1_27, %c1_28, %c0_29], %29 {strides = array<i32>} : memref<2x2x10x10x4xf32, #tpu.memory_space<vmem>>, vector<1x1x8x8x4xf32>,
    %30 = vector.extract_strided_slice %17 {offsets = [2, 0, 0], sizes = [1, 64, 4], strides = [1, 1, 1]} : vector<4x64x4xf32> to vector<1x64x4xf32>
    %31 = vector.shape_cast %30 : vector<1x64x4xf32> to vector<64x4xf32>
    %32 = vector.shape_cast %31 : vector<64x4xf32> to vector<8x8x4xf32>
    %c1_30 = arith.constant 1 : index
    %c0_31 = arith.constant 0 : index
    %c1_32 = arith.constant 1 : index
    %c1_33 = arith.constant 1 : index
    %c0_34 = arith.constant 0 : index
    %33 = vector.load %arg10[%c1_30, %c0_31, %c1_32, %c1_33, %c0_34] : memref<2x2x10x10x4xf32, #tpu.memory_space<vmem>>, vector<1x1x8x8x4xf32>
    %34 = vector.shape_cast %33 : vector<1x1x8x8x4xf32> to vector<8x8x4xf32>
    %35 = vector.shape_cast %32 : vector<8x8x4xf32> to vector<1x1x8x8x4xf32>
    tpu.vector_store %arg10[%c1_30, %c0_31, %c1_32, %c1_33, %c0_34], %35 {strides = array<i32>} : memref<2x2x10x10x4xf32, #tpu.memory_space<vmem>>, vector<1x1x8x8x4xf32>,
    %36 = vector.extract_strided_slice %17 {offsets = [3, 0, 0], sizes = [1, 64, 4], strides = [1, 1, 1]} : vector<4x64x4xf32> to vector<1x64x4xf32>
    %37 = vector.shape_cast %36 : vector<1x64x4xf32> to vector<64x4xf32>
    %38 = vector.shape_cast %37 : vector<64x4xf32> to vector<8x8x4xf32>
    %c1_35 = arith.constant 1 : index
    %c1_36 = arith.constant 1 : index
    %c1_37 = arith.constant 1 : index
    %c1_38 = arith.constant 1 : index
    %c0_39 = arith.constant 0 : index
    %39 = vector.load %arg10[%c1_35, %c1_36, %c1_37, %c1_38, %c0_39] : memref<2x2x10x10x4xf32, #tpu.memory_space<vmem>>, vector<1x1x8x8x4xf32>
    %40 = vector.shape_cast %39 : vector<1x1x8x8x4xf32> to vector<8x8x4xf32>
    %41 = vector.shape_cast %38 : vector<8x8x4xf32> to vector<1x1x8x8x4xf32>
    tpu.vector_store %arg10[%c1_35, %c1_36, %c1_37, %c1_38, %c0_39], %41 {strides = array<i32>} : memref<2x2x10x10x4xf32, #tpu.memory_space<vmem>>, vector<1x1x8x8x4xf32>,
    %c0_40 = arith.constant 0 : index
    %c0_41 = arith.constant 0 : index
    %42 = vector.load %arg5[%c0_40, %c0_41] : memref<36x8xbf16, #tpu.memory_space<vmem>>, vector<36x8xbf16>
    %c0_42 = arith.constant 0 : index
    %c0_43 = arith.constant 0 : index
    %43 = vector.load %arg6[%c0_42, %c0_43] : memref<1x8xf32, #tpu.memory_space<vmem>>, vector<1x8xf32>
    %c1_44 = arith.constant 1 : index
    %c1_45 = arith.constant 1 : index
    %c0_46 = arith.constant 0 : index
    %c0_47 = arith.constant 0 : index
    %c0_48 = arith.constant 0 : index
    %44 = vector.load %arg10[%c1_44, %c1_45, %c0_46, %c0_47, %c0_48] : memref<2x2x10x10x4xf32, #tpu.memory_space<vmem>>, vector<1x1x8x8x4xf32>
    %45 = vector.shape_cast %44 : vector<1x1x8x8x4xf32> to vector<8x8x4xf32>
    %c1_49 = arith.constant 1 : index
    %c0_50 = arith.constant 0 : index
    %c0_51 = arith.constant 0 : index
    %c1_52 = arith.constant 1 : index
    %c0_53 = arith.constant 0 : index
    %46 = vector.load %arg10[%c1_49, %c0_50, %c0_51, %c1_52, %c0_53] : memref<2x2x10x10x4xf32, #tpu.memory_space<vmem>>, vector<1x1x8x8x4xf32>
    %47 = vector.shape_cast %46 : vector<1x1x8x8x4xf32> to vector<8x8x4xf32>
    %c1_54 = arith.constant 1 : index
    %c1_55 = arith.constant 1 : index
    %c0_56 = arith.constant 0 : index
    %c1_57 = arith.constant 1 : index
    %c0_58 = arith.constant 0 : index
    %48 = vector.load %arg10[%c1_54, %c1_55, %c0_56, %c1_57, %c0_58] : memref<2x2x10x10x4xf32, #tpu.memory_space<vmem>>, vector<1x1x8x8x4xf32>
    %49 = vector.shape_cast %48 : vector<1x1x8x8x4xf32> to vector<8x8x4xf32>
    %c0_59 = arith.constant 0 : index
    %c1_60 = arith.constant 1 : index
    %c1_61 = arith.constant 1 : index
    %c0_62 = arith.constant 0 : index
    %c0_63 = arith.constant 0 : index
    %50 = vector.load %arg10[%c0_59, %c1_60, %c1_61, %c0_62, %c0_63] : memref<2x2x10x10x4xf32, #tpu.memory_space<vmem>>, vector<1x1x8x8x4xf32>
    %51 = vector.shape_cast %50 : vector<1x1x8x8x4xf32> to vector<8x8x4xf32>
    %c0_64 = arith.constant 0 : index
    %c0_65 = arith.constant 0 : index
    %c1_66 = arith.constant 1 : index
    %c1_67 = arith.constant 1 : index
    %c0_68 = arith.constant 0 : index
    %52 = vector.load %arg10[%c0_64, %c0_65, %c1_66, %c1_67, %c0_68] : memref<2x2x10x10x4xf32, #tpu.memory_space<vmem>>, vector<1x1x8x8x4xf32>
    %53 = vector.shape_cast %52 : vector<1x1x8x8x4xf32> to vector<8x8x4xf32>
    %c0_69 = arith.constant 0 : index
    %c1_70 = arith.constant 1 : index
    %c1_71 = arith.constant 1 : index
    %c1_72 = arith.constant 1 : index
    %c0_73 = arith.constant 0 : index
    %54 = vector.load %arg10[%c0_69, %c1_70, %c1_71, %c1_72, %c0_73] : memref<2x2x10x10x4xf32, #tpu.memory_space<vmem>>, vector<1x1x8x8x4xf32>
    %55 = vector.shape_cast %54 : vector<1x1x8x8x4xf32> to vector<8x8x4xf32>
    %c1_74 = arith.constant 1 : index
    %c1_75 = arith.constant 1 : index
    %c1_76 = arith.constant 1 : index
    %c0_77 = arith.constant 0 : index
    %c0_78 = arith.constant 0 : index
    %56 = vector.load %arg10[%c1_74, %c1_75, %c1_76, %c0_77, %c0_78] : memref<2x2x10x10x4xf32, #tpu.memory_space<vmem>>, vector<1x1x8x8x4xf32>
    %57 = vector.shape_cast %56 : vector<1x1x8x8x4xf32> to vector<8x8x4xf32>
    %c1_79 = arith.constant 1 : index
    %c0_80 = arith.constant 0 : index
    %c1_81 = arith.constant 1 : index
    %c1_82 = arith.constant 1 : index
    %c0_83 = arith.constant 0 : index
    %58 = vector.load %arg10[%c1_79, %c0_80, %c1_81, %c1_82, %c0_83] : memref<2x2x10x10x4xf32, #tpu.memory_space<vmem>>, vector<1x1x8x8x4xf32>
    %59 = vector.shape_cast %58 : vector<1x1x8x8x4xf32> to vector<8x8x4xf32>
    %c1_84 = arith.constant 1 : index
    %c1_85 = arith.constant 1 : index
    %c1_86 = arith.constant 1 : index
    %c1_87 = arith.constant 1 : index
    %c0_88 = arith.constant 0 : index
    %60 = vector.load %arg10[%c1_84, %c1_85, %c1_86, %c1_87, %c0_88] : memref<2x2x10x10x4xf32, #tpu.memory_space<vmem>>, vector<1x1x8x8x4xf32>
    %61 = vector.shape_cast %60 : vector<1x1x8x8x4xf32> to vector<8x8x4xf32>
    %62 = tpu.concatenate %45, %47, %49, %51, %53, %55, %57, %59, %61 in 2 : vector<8x8x4xf32>, vector<8x8x4xf32>, vector<8x8x4xf32>, vector<8x8x4xf32>, vector<8x8x4xf32>, vector<8x8x4xf32>, vector<8x8x4xf32>, vector<8x8x4xf32>, vector<8x8x4xf32> -> vector<8x8x36xf32>
    %63 = vector.shape_cast %62 : vector<8x8x36xf32> to vector<64x36xf32>
    %c1_89 = arith.constant 1 : index
    %c0_90 = arith.constant 0 : index
    %c0_91 = arith.constant 0 : index
    %c1_92 = arith.constant 1 : index
    %c0_93 = arith.constant 0 : index
    %64 = vector.load %arg10[%c1_89, %c0_90, %c0_91, %c1_92, %c0_93] : memref<2x2x10x10x4xf32, #tpu.memory_space<vmem>>, vector<1x1x8x8x4xf32>
    %65 = vector.shape_cast %64 : vector<1x1x8x8x4xf32> to vector<8x8x4xf32>
    %c1_94 = arith.constant 1 : index
    %c1_95 = arith.constant 1 : index
    %c0_96 = arith.constant 0 : index
    %c1_97 = arith.constant 1 : index
    %c0_98 = arith.constant 0 : index
    %66 = vector.load %arg10[%c1_94, %c1_95, %c0_96, %c1_97, %c0_98] : memref<2x2x10x10x4xf32, #tpu.memory_space<vmem>>, vector<1x1x8x8x4xf32>
    %67 = vector.shape_cast %66 : vector<1x1x8x8x4xf32> to vector<8x8x4xf32>
    %c1_99 = arith.constant 1 : index
    %c0_100 = arith.constant 0 : index
    %c0_101 = arith.constant 0 : index
    %c2 = arith.constant 2 : index
    %c0_102 = arith.constant 0 : index
    %68 = vector.load %arg10[%c1_99, %c0_100, %c0_101, %c2, %c0_102] : memref<2x2x10x10x4xf32, #tpu.memory_space<vmem>>, vector<1x1x8x8x4xf32>
    %69 = vector.shape_cast %68 : vector<1x1x8x8x4xf32> to vector<8x8x4xf32>
    %c0_103 = arith.constant 0 : index
    %c0_104 = arith.constant 0 : index
    %c1_105 = arith.constant 1 : index
    %c1_106 = arith.constant 1 : index
    %c0_107 = arith.constant 0 : index
    %70 = vector.load %arg10[%c0_103, %c0_104, %c1_105, %c1_106, %c0_107] : memref<2x2x10x10x4xf32, #tpu.memory_space<vmem>>, vector<1x1x8x8x4xf32>
    %71 = vector.shape_cast %70 : vector<1x1x8x8x4xf32> to vector<8x8x4xf32>
    %c0_108 = arith.constant 0 : index
    %c1_109 = arith.constant 1 : index
    %c1_110 = arith.constant 1 : index
    %c1_111 = arith.constant 1 : index
    %c0_112 = arith.constant 0 : index
    %72 = vector.load %arg10[%c0_108, %c1_109, %c1_110, %c1_111, %c0_112] : memref<2x2x10x10x4xf32, #tpu.memory_space<vmem>>, vector<1x1x8x8x4xf32>
    %73 = vector.shape_cast %72 : vector<1x1x8x8x4xf32> to vector<8x8x4xf32>
    %c0_113 = arith.constant 0 : index
    %c0_114 = arith.constant 0 : index
    %c1_115 = arith.constant 1 : index
    %c2_116 = arith.constant 2 : index
    %c0_117 = arith.constant 0 : index
    %74 = vector.load %arg10[%c0_113, %c0_114, %c1_115, %c2_116, %c0_117] : memref<2x2x10x10x4xf32, #tpu.memory_space<vmem>>, vector<1x1x8x8x4xf32>
    %75 = vector.shape_cast %74 : vector<1x1x8x8x4xf32> to vector<8x8x4xf32>
    %c1_118 = arith.constant 1 : index
    %c0_119 = arith.constant 0 : index
    %c1_120 = arith.constant 1 : index
    %c1_121 = arith.constant 1 : index
    %c0_122 = arith.constant 0 : index
    %76 = vector.load %arg10[%c1_118, %c0_119, %c1_120, %c1_121, %c0_122] : memref<2x2x10x10x4xf32, #tpu.memory_space<vmem>>, vector<1x1x8x8x4xf32>
    %77 = vector.shape_cast %76 : vector<1x1x8x8x4xf32> to vector<8x8x4xf32>
    %c1_123 = arith.constant 1 : index
    %c1_124 = arith.constant 1 : index
    %c1_125 = arith.constant 1 : index
    %c1_126 = arith.constant 1 : index
    %c0_127 = arith.constant 0 : index
    %78 = vector.load %arg10[%c1_123, %c1_124, %c1_125, %c1_126, %c0_127] : memref<2x2x10x10x4xf32, #tpu.memory_space<vmem>>, vector<1x1x8x8x4xf32>
    %79 = vector.shape_cast %78 : vector<1x1x8x8x4xf32> to vector<8x8x4xf32>
    %c1_128 = arith.constant 1 : index
    %c0_129 = arith.constant 0 : index
    %c1_130 = arith.constant 1 : index
    %c2_131 = arith.constant 2 : index
    %c0_132 = arith.constant 0 : index
    %80 = vector.load %arg10[%c1_128, %c0_129, %c1_130, %c2_131, %c0_132] : memref<2x2x10x10x4xf32, #tpu.memory_space<vmem>>, vector<1x1x8x8x4xf32>
    %81 = vector.shape_cast %80 : vector<1x1x8x8x4xf32> to vector<8x8x4xf32>
    %82 = tpu.concatenate %65, %67, %69, %71, %73, %75, %77, %79, %81 in 2 : vector<8x8x4xf32>, vector<8x8x4xf32>, vector<8x8x4xf32>, vector<8x8x4xf32>, vector<8x8x4xf32>, vector<8x8x4xf32>, vector<8x8x4xf32>, vector<8x8x4xf32>, vector<8x8x4xf32> -> vector<8x8x36xf32>
    %83 = vector.shape_cast %82 : vector<8x8x36xf32> to vector<64x36xf32>
    %c0_133 = arith.constant 0 : index
    %c1_134 = arith.constant 1 : index
    %c1_135 = arith.constant 1 : index
    %c0_136 = arith.constant 0 : index
    %c0_137 = arith.constant 0 : index
    %84 = vector.load %arg10[%c0_133, %c1_134, %c1_135, %c0_136, %c0_137] : memref<2x2x10x10x4xf32, #tpu.memory_space<vmem>>, vector<1x1x8x8x4xf32>
    %85 = vector.shape_cast %84 : vector<1x1x8x8x4xf32> to vector<8x8x4xf32>
    %c0_138 = arith.constant 0 : index
    %c0_139 = arith.constant 0 : index
    %c1_140 = arith.constant 1 : index
    %c1_141 = arith.constant 1 : index
    %c0_142 = arith.constant 0 : index
    %86 = vector.load %arg10[%c0_138, %c0_139, %c1_140, %c1_141, %c0_142] : memref<2x2x10x10x4xf32, #tpu.memory_space<vmem>>, vector<1x1x8x8x4xf32>
    %87 = vector.shape_cast %86 : vector<1x1x8x8x4xf32> to vector<8x8x4xf32>
    %c0_143 = arith.constant 0 : index
    %c1_144 = arith.constant 1 : index
    %c1_145 = arith.constant 1 : index
    %c1_146 = arith.constant 1 : index
    %c0_147 = arith.constant 0 : index
    %88 = vector.load %arg10[%c0_143, %c1_144, %c1_145, %c1_146, %c0_147] : memref<2x2x10x10x4xf32, #tpu.memory_space<vmem>>, vector<1x1x8x8x4xf32>
    %89 = vector.shape_cast %88 : vector<1x1x8x8x4xf32> to vector<8x8x4xf32>
    %c1_148 = arith.constant 1 : index
    %c1_149 = arith.constant 1 : index
    %c1_150 = arith.constant 1 : index
    %c0_151 = arith.constant 0 : index
    %c0_152 = arith.constant 0 : index
    %90 = vector.load %arg10[%c1_148, %c1_149, %c1_150, %c0_151, %c0_152] : memref<2x2x10x10x4xf32, #tpu.memory_space<vmem>>, vector<1x1x8x8x4xf32>
    %91 = vector.shape_cast %90 : vector<1x1x8x8x4xf32> to vector<8x8x4xf32>
    %c1_153 = arith.constant 1 : index
    %c0_154 = arith.constant 0 : index
    %c1_155 = arith.constant 1 : index
    %c1_156 = arith.constant 1 : index
    %c0_157 = arith.constant 0 : index
    %92 = vector.load %arg10[%c1_153, %c0_154, %c1_155, %c1_156, %c0_157] : memref<2x2x10x10x4xf32, #tpu.memory_space<vmem>>, vector<1x1x8x8x4xf32>
    %93 = vector.shape_cast %92 : vector<1x1x8x8x4xf32> to vector<8x8x4xf32>
    %c1_158 = arith.constant 1 : index
    %c1_159 = arith.constant 1 : index
    %c1_160 = arith.constant 1 : index
    %c1_161 = arith.constant 1 : index
    %c0_162 = arith.constant 0 : index
    %94 = vector.load %arg10[%c1_158, %c1_159, %c1_160, %c1_161, %c0_162] : memref<2x2x10x10x4xf32, #tpu.memory_space<vmem>>, vector<1x1x8x8x4xf32>
    %95 = vector.shape_cast %94 : vector<1x1x8x8x4xf32> to vector<8x8x4xf32>
    %c0_163 = arith.constant 0 : index
    %c1_164 = arith.constant 1 : index
    %c2_165 = arith.constant 2 : index
    %c0_166 = arith.constant 0 : index
    %c0_167 = arith.constant 0 : index
    %96 = vector.load %arg10[%c0_163, %c1_164, %c2_165, %c0_166, %c0_167] : memref<2x2x10x10x4xf32, #tpu.memory_space<vmem>>, vector<1x1x8x8x4xf32>
    %97 = vector.shape_cast %96 : vector<1x1x8x8x4xf32> to vector<8x8x4xf32>
    %c0_168 = arith.constant 0 : index
    %c0_169 = arith.constant 0 : index
    %c2_170 = arith.constant 2 : index
    %c1_171 = arith.constant 1 : index
    %c0_172 = arith.constant 0 : index
    %98 = vector.load %arg10[%c0_168, %c0_169, %c2_170, %c1_171, %c0_172] : memref<2x2x10x10x4xf32, #tpu.memory_space<vmem>>, vector<1x1x8x8x4xf32>
    %99 = vector.shape_cast %98 : vector<1x1x8x8x4xf32> to vector<8x8x4xf32>
    %c0_173 = arith.constant 0 : index
    %c1_174 = arith.constant 1 : index
    %c2_175 = arith.constant 2 : index
    %c1_176 = arith.constant 1 : index
    %c0_177 = arith.constant 0 : index
    %100 = vector.load %arg10[%c0_173, %c1_174, %c2_175, %c1_176, %c0_177] : memref<2x2x10x10x4xf32, #tpu.memory_space<vmem>>, vector<1x1x8x8x4xf32>
    %101 = vector.shape_cast %100 : vector<1x1x8x8x4xf32> to vector<8x8x4xf32>
    %102 = tpu.concatenate %85, %87, %89, %91, %93, %95, %97, %99, %101 in 2 : vector<8x8x4xf32>, vector<8x8x4xf32>, vector<8x8x4xf32>, vector<8x8x4xf32>, vector<8x8x4xf32>, vector<8x8x4xf32>, vector<8x8x4xf32>, vector<8x8x4xf32>, vector<8x8x4xf32> -> vector<8x8x36xf32>
    %103 = vector.shape_cast %102 : vector<8x8x36xf32> to vector<64x36xf32>
    %c0_178 = arith.constant 0 : index
    %c0_179 = arith.constant 0 : index
    %c1_180 = arith.constant 1 : index
    %c1_181 = arith.constant 1 : index
    %c0_182 = arith.constant 0 : index
    %104 = vector.load %arg10[%c0_178, %c0_179, %c1_180, %c1_181, %c0_182] : memref<2x2x10x10x4xf32, #tpu.memory_space<vmem>>, vector<1x1x8x8x4xf32>
    %105 = vector.shape_cast %104 : vector<1x1x8x8x4xf32> to vector<8x8x4xf32>
    %c0_183 = arith.constant 0 : index
    %c1_184 = arith.constant 1 : index
    %c1_185 = arith.constant 1 : index
    %c1_186 = arith.constant 1 : index
    %c0_187 = arith.constant 0 : index
    %106 = vector.load %arg10[%c0_183, %c1_184, %c1_185, %c1_186, %c0_187] : memref<2x2x10x10x4xf32, #tpu.memory_space<vmem>>, vector<1x1x8x8x4xf32>
    %107 = vector.shape_cast %106 : vector<1x1x8x8x4xf32> to vector<8x8x4xf32>
    %c0_188 = arith.constant 0 : index
    %c0_189 = arith.constant 0 : index
    %c1_190 = arith.constant 1 : index
    %c2_191 = arith.constant 2 : index
    %c0_192 = arith.constant 0 : index
    %108 = vector.load %arg10[%c0_188, %c0_189, %c1_190, %c2_191, %c0_192] : memref<2x2x10x10x4xf32, #tpu.memory_space<vmem>>, vector<1x1x8x8x4xf32>
    %109 = vector.shape_cast %108 : vector<1x1x8x8x4xf32> to vector<8x8x4xf32>
    %c1_193 = arith.constant 1 : index
    %c0_194 = arith.constant 0 : index
    %c1_195 = arith.constant 1 : index
    %c1_196 = arith.constant 1 : index
    %c0_197 = arith.constant 0 : index
    %110 = vector.load %arg10[%c1_193, %c0_194, %c1_195, %c1_196, %c0_197] : memref<2x2x10x10x4xf32, #tpu.memory_space<vmem>>, vector<1x1x8x8x4xf32>
    %111 = vector.shape_cast %110 : vector<1x1x8x8x4xf32> to vector<8x8x4xf32>
    %c1_198 = arith.constant 1 : index
    %c1_199 = arith.constant 1 : index
    %c1_200 = arith.constant 1 : index
    %c1_201 = arith.constant 1 : index
    %c0_202 = arith.constant 0 : index
    %112 = vector.load %arg10[%c1_198, %c1_199, %c1_200, %c1_201, %c0_202] : memref<2x2x10x10x4xf32, #tpu.memory_space<vmem>>, vector<1x1x8x8x4xf32>
    %113 = vector.shape_cast %112 : vector<1x1x8x8x4xf32> to vector<8x8x4xf32>
    %c1_203 = arith.constant 1 : index
    %c0_204 = arith.constant 0 : index
    %c1_205 = arith.constant 1 : index
    %c2_206 = arith.constant 2 : index
    %c0_207 = arith.constant 0 : index
    %114 = vector.load %arg10[%c1_203, %c0_204, %c1_205, %c2_206, %c0_207] : memref<2x2x10x10x4xf32, #tpu.memory_space<vmem>>, vector<1x1x8x8x4xf32>
    %115 = vector.shape_cast %114 : vector<1x1x8x8x4xf32> to vector<8x8x4xf32>
    %c0_208 = arith.constant 0 : index
    %c0_209 = arith.constant 0 : index
    %c2_210 = arith.constant 2 : index
    %c1_211 = arith.constant 1 : index
    %c0_212 = arith.constant 0 : index
    %116 = vector.load %arg10[%c0_208, %c0_209, %c2_210, %c1_211, %c0_212] : memref<2x2x10x10x4xf32, #tpu.memory_space<vmem>>, vector<1x1x8x8x4xf32>
    %117 = vector.shape_cast %116 : vector<1x1x8x8x4xf32> to vector<8x8x4xf32>
    %c0_213 = arith.constant 0 : index
    %c1_214 = arith.constant 1 : index
    %c2_215 = arith.constant 2 : index
    %c1_216 = arith.constant 1 : index
    %c0_217 = arith.constant 0 : index
    %118 = vector.load %arg10[%c0_213, %c1_214, %c2_215, %c1_216, %c0_217] : memref<2x2x10x10x4xf32, #tpu.memory_space<vmem>>, vector<1x1x8x8x4xf32>
    %119 = vector.shape_cast %118 : vector<1x1x8x8x4xf32> to vector<8x8x4xf32>
    %c0_218 = arith.constant 0 : index
    %c0_219 = arith.constant 0 : index
    %c2_220 = arith.constant 2 : index
    %c2_221 = arith.constant 2 : index
    %c0_222 = arith.constant 0 : index
    %120 = vector.load %arg10[%c0_218, %c0_219, %c2_220, %c2_221, %c0_222] : memref<2x2x10x10x4xf32, #tpu.memory_space<vmem>>, vector<1x1x8x8x4xf32>
    %121 = vector.shape_cast %120 : vector<1x1x8x8x4xf32> to vector<8x8x4xf32>
    %122 = tpu.concatenate %105, %107, %109, %111, %113, %115, %117, %119, %121 in 2 : vector<8x8x4xf32>, vector<8x8x4xf32>, vector<8x8x4xf32>, vector<8x8x4xf32>, vector<8x8x4xf32>, vector<8x8x4xf32>, vector<8x8x4xf32>, vector<8x8x4xf32>, vector<8x8x4xf32> -> vector<8x8x36xf32>
    %123 = vector.shape_cast %122 : vector<8x8x36xf32> to vector<64x36xf32>
    %124 = tpu.concatenate %63, %83, %103, %123 in 0 : vector<64x36xf32>, vector<64x36xf32>, vector<64x36xf32>, vector<64x36xf32> -> vector<256x36xf32>
    %125 = arith.truncf %124 : vector<256x36xf32> to vector<256x36xbf16>
    %cst_223 = arith.constant dense<0.000000e+00> : vector<256x8xf32>
    %126 = tpu.matmul %125, %42, %cst_223 {dimension_numbers = #tpu.dot_dimension_numbers<[1], [0], [0], [1], [0, 0, 1, 1], [], []>} : vector<256x36xbf16>, vector<36x8xbf16>, vector<256x8xf32> -> vector<256x8xf32>
    %127 = vector.broadcast %43 : vector<1x8xf32> to vector<256x8xf32>
    %128 = arith.addf %126, %127 : vector<256x8xf32>
    %cst_224 = arith.constant 0.000000e+00 : f32
    %129 = vector.broadcast %cst_224 : f32 to vector<256x8xf32>
    %130 = arith.maximumf %128, %129 : vector<256x8xf32>
    %131 = vector.extract_strided_slice %130 {offsets = [0, 0], sizes = [64, 8], strides = [1, 1]} : vector<256x8xf32> to vector<64x8xf32>
    %132 = vector.shape_cast %131 : vector<64x8xf32> to vector<8x8x8xf32>
    %c0_225 = arith.constant 0 : index
    %c0_226 = arith.constant 0 : index
    %c1_227 = arith.constant 1 : index
    %c1_228 = arith.constant 1 : index
    %c0_229 = arith.constant 0 : index
    %133 = vector.load %arg11[%c0_225, %c0_226, %c1_227, %c1_228, %c0_229] : memref<2x2x10x10x8xf32, #tpu.memory_space<vmem>>, vector<1x1x8x8x8xf32>
    %134 = vector.shape_cast %133 : vector<1x1x8x8x8xf32> to vector<8x8x8xf32>
    %135 = vector.shape_cast %132 : vector<8x8x8xf32> to vector<1x1x8x8x8xf32>
    tpu.vector_store %arg11[%c0_225, %c0_226, %c1_227, %c1_228, %c0_229], %135 {strides = array<i32>} : memref<2x2x10x10x8xf32, #tpu.memory_space<vmem>>, vector<1x1x8x8x8xf32>,
    %136 = vector.extract_strided_slice %130 {offsets = [64, 0], sizes = [64, 8], strides = [1, 1]} : vector<256x8xf32> to vector<64x8xf32>
    %137 = vector.shape_cast %136 : vector<64x8xf32> to vector<8x8x8xf32>
    %c0_230 = arith.constant 0 : index
    %c1_231 = arith.constant 1 : index
    %c1_232 = arith.constant 1 : index
    %c1_233 = arith.constant 1 : index
    %c0_234 = arith.constant 0 : index
    %138 = vector.load %arg11[%c0_230, %c1_231, %c1_232, %c1_233, %c0_234] : memref<2x2x10x10x8xf32, #tpu.memory_space<vmem>>, vector<1x1x8x8x8xf32>
    %139 = vector.shape_cast %138 : vector<1x1x8x8x8xf32> to vector<8x8x8xf32>
    %140 = vector.shape_cast %137 : vector<8x8x8xf32> to vector<1x1x8x8x8xf32>
    tpu.vector_store %arg11[%c0_230, %c1_231, %c1_232, %c1_233, %c0_234], %140 {strides = array<i32>} : memref<2x2x10x10x8xf32, #tpu.memory_space<vmem>>, vector<1x1x8x8x8xf32>,
    %141 = vector.extract_strided_slice %130 {offsets = [128, 0], sizes = [64, 8], strides = [1, 1]} : vector<256x8xf32> to vector<64x8xf32>
    %142 = vector.shape_cast %141 : vector<64x8xf32> to vector<8x8x8xf32>
    %c1_235 = arith.constant 1 : index
    %c0_236 = arith.constant 0 : index
    %c1_237 = arith.constant 1 : index
    %c1_238 = arith.constant 1 : index
    %c0_239 = arith.constant 0 : index
    %143 = vector.load %arg11[%c1_235, %c0_236, %c1_237, %c1_238, %c0_239] : memref<2x2x10x10x8xf32, #tpu.memory_space<vmem>>, vector<1x1x8x8x8xf32>
    %144 = vector.shape_cast %143 : vector<1x1x8x8x8xf32> to vector<8x8x8xf32>
    %145 = vector.shape_cast %142 : vector<8x8x8xf32> to vector<1x1x8x8x8xf32>
    tpu.vector_store %arg11[%c1_235, %c0_236, %c1_237, %c1_238, %c0_239], %145 {strides = array<i32>} : memref<2x2x10x10x8xf32, #tpu.memory_space<vmem>>, vector<1x1x8x8x8xf32>,
    %146 = vector.extract_strided_slice %130 {offsets = [192, 0], sizes = [64, 8], strides = [1, 1]} : vector<256x8xf32> to vector<64x8xf32>
    %147 = vector.shape_cast %146 : vector<64x8xf32> to vector<8x8x8xf32>
    %c1_240 = arith.constant 1 : index
    %c1_241 = arith.constant 1 : index
    %c1_242 = arith.constant 1 : index
    %c1_243 = arith.constant 1 : index
    %c0_244 = arith.constant 0 : index
    %148 = vector.load %arg11[%c1_240, %c1_241, %c1_242, %c1_243, %c0_244] : memref<2x2x10x10x8xf32, #tpu.memory_space<vmem>>, vector<1x1x8x8x8xf32>
    %149 = vector.shape_cast %148 : vector<1x1x8x8x8xf32> to vector<8x8x8xf32>
    %150 = vector.shape_cast %147 : vector<8x8x8xf32> to vector<1x1x8x8x8xf32>
    tpu.vector_store %arg11[%c1_240, %c1_241, %c1_242, %c1_243, %c0_244], %150 {strides = array<i32>} : memref<2x2x10x10x8xf32, #tpu.memory_space<vmem>>, vector<1x1x8x8x8xf32>,
    %c0_245 = arith.constant 0 : index
    %c0_246 = arith.constant 0 : index
    %c0_247 = arith.constant 0 : index
    %151 = vector.load %arg7[%c0_245, %c0_246, %c0_247] : memref<1x72x8xbf16, #tpu.memory_space<vmem>>, vector<1x72x8xbf16>
    %152 = vector.shape_cast %151 : vector<1x72x8xbf16> to vector<72x8xbf16>
    %c0_248 = arith.constant 0 : index
    %c0_249 = arith.constant 0 : index
    %c0_250 = arith.constant 0 : index
    %153 = vector.load %arg8[%c0_248, %c0_249, %c0_250] : memref<1x1x8xf32, #tpu.memory_space<vmem>>, vector<1x1x8xf32>
    %154 = vector.shape_cast %153 : vector<1x1x8xf32> to vector<1x8xf32>
    %c1_251 = arith.constant 1 : index
    %c1_252 = arith.constant 1 : index
    %c0_253 = arith.constant 0 : index
    %c0_254 = arith.constant 0 : index
    %c0_255 = arith.constant 0 : index
    %155 = vector.load %arg11[%c1_251, %c1_252, %c0_253, %c0_254, %c0_255] : memref<2x2x10x10x8xf32, #tpu.memory_space<vmem>>, vector<1x1x8x8x8xf32>
    %156 = vector.shape_cast %155 : vector<1x1x8x8x8xf32> to vector<8x8x8xf32>
    %c1_256 = arith.constant 1 : index
    %c0_257 = arith.constant 0 : index
    %c0_258 = arith.constant 0 : index
    %c1_259 = arith.constant 1 : index
    %c0_260 = arith.constant 0 : index
    %157 = vector.load %arg11[%c1_256, %c0_257, %c0_258, %c1_259, %c0_260] : memref<2x2x10x10x8xf32, #tpu.memory_space<vmem>>, vector<1x1x8x8x8xf32>
    %158 = vector.shape_cast %157 : vector<1x1x8x8x8xf32> to vector<8x8x8xf32>
    %c1_261 = arith.constant 1 : index
    %c1_262 = arith.constant 1 : index
    %c0_263 = arith.constant 0 : index
    %c1_264 = arith.constant 1 : index
    %c0_265 = arith.constant 0 : index
    %159 = vector.load %arg11[%c1_261, %c1_262, %c0_263, %c1_264, %c0_265] : memref<2x2x10x10x8xf32, #tpu.memory_space<vmem>>, vector<1x1x8x8x8xf32>
    %160 = vector.shape_cast %159 : vector<1x1x8x8x8xf32> to vector<8x8x8xf32>
    %c0_266 = arith.constant 0 : index
    %c1_267 = arith.constant 1 : index
    %c1_268 = arith.constant 1 : index
    %c0_269 = arith.constant 0 : index
    %c0_270 = arith.constant 0 : index
    %161 = vector.load %arg11[%c0_266, %c1_267, %c1_268, %c0_269, %c0_270] : memref<2x2x10x10x8xf32, #tpu.memory_space<vmem>>, vector<1x1x8x8x8xf32>
    %162 = vector.shape_cast %161 : vector<1x1x8x8x8xf32> to vector<8x8x8xf32>
    %c0_271 = arith.constant 0 : index
    %c0_272 = arith.constant 0 : index
    %c1_273 = arith.constant 1 : index
    %c1_274 = arith.constant 1 : index
    %c0_275 = arith.constant 0 : index
    %163 = vector.load %arg11[%c0_271, %c0_272, %c1_273, %c1_274, %c0_275] : memref<2x2x10x10x8xf32, #tpu.memory_space<vmem>>, vector<1x1x8x8x8xf32>
    %164 = vector.shape_cast %163 : vector<1x1x8x8x8xf32> to vector<8x8x8xf32>
    %c0_276 = arith.constant 0 : index
    %c1_277 = arith.constant 1 : index
    %c1_278 = arith.constant 1 : index
    %c1_279 = arith.constant 1 : index
    %c0_280 = arith.constant 0 : index
    %165 = vector.load %arg11[%c0_276, %c1_277, %c1_278, %c1_279, %c0_280] : memref<2x2x10x10x8xf32, #tpu.memory_space<vmem>>, vector<1x1x8x8x8xf32>
    %166 = vector.shape_cast %165 : vector<1x1x8x8x8xf32> to vector<8x8x8xf32>
    %c1_281 = arith.constant 1 : index
    %c1_282 = arith.constant 1 : index
    %c1_283 = arith.constant 1 : index
    %c0_284 = arith.constant 0 : index
    %c0_285 = arith.constant 0 : index
    %167 = vector.load %arg11[%c1_281, %c1_282, %c1_283, %c0_284, %c0_285] : memref<2x2x10x10x8xf32, #tpu.memory_space<vmem>>, vector<1x1x8x8x8xf32>
    %168 = vector.shape_cast %167 : vector<1x1x8x8x8xf32> to vector<8x8x8xf32>
    %c1_286 = arith.constant 1 : index
    %c0_287 = arith.constant 0 : index
    %c1_288 = arith.constant 1 : index
    %c1_289 = arith.constant 1 : index
    %c0_290 = arith.constant 0 : index
    %169 = vector.load %arg11[%c1_286, %c0_287, %c1_288, %c1_289, %c0_290] : memref<2x2x10x10x8xf32, #tpu.memory_space<vmem>>, vector<1x1x8x8x8xf32>
    %170 = vector.shape_cast %169 : vector<1x1x8x8x8xf32> to vector<8x8x8xf32>
    %c1_291 = arith.constant 1 : index
    %c1_292 = arith.constant 1 : index
    %c1_293 = arith.constant 1 : index
    %c1_294 = arith.constant 1 : index
    %c0_295 = arith.constant 0 : index
    %171 = vector.load %arg11[%c1_291, %c1_292, %c1_293, %c1_294, %c0_295] : memref<2x2x10x10x8xf32, #tpu.memory_space<vmem>>, vector<1x1x8x8x8xf32>
    %172 = vector.shape_cast %171 : vector<1x1x8x8x8xf32> to vector<8x8x8xf32>
    %173 = tpu.concatenate %156, %158, %160, %162, %164, %166, %168, %170, %172 in 2 : vector<8x8x8xf32>, vector<8x8x8xf32>, vector<8x8x8xf32>, vector<8x8x8xf32>, vector<8x8x8xf32>, vector<8x8x8xf32>, vector<8x8x8xf32>, vector<8x8x8xf32>, vector<8x8x8xf32> -> vector<8x8x72xf32>
    %174 = vector.shape_cast %173 : vector<8x8x72xf32> to vector<64x72xf32>
    %c1_296 = arith.constant 1 : index
    %c0_297 = arith.constant 0 : index
    %c0_298 = arith.constant 0 : index
    %c1_299 = arith.constant 1 : index
    %c0_300 = arith.constant 0 : index
    %175 = vector.load %arg11[%c1_296, %c0_297, %c0_298, %c1_299, %c0_300] : memref<2x2x10x10x8xf32, #tpu.memory_space<vmem>>, vector<1x1x8x8x8xf32>
    %176 = vector.shape_cast %175 : vector<1x1x8x8x8xf32> to vector<8x8x8xf32>
    %c1_301 = arith.constant 1 : index
    %c1_302 = arith.constant 1 : index
    %c0_303 = arith.constant 0 : index
    %c1_304 = arith.constant 1 : index
    %c0_305 = arith.constant 0 : index
    %177 = vector.load %arg11[%c1_301, %c1_302, %c0_303, %c1_304, %c0_305] : memref<2x2x10x10x8xf32, #tpu.memory_space<vmem>>, vector<1x1x8x8x8xf32>
    %178 = vector.shape_cast %177 : vector<1x1x8x8x8xf32> to vector<8x8x8xf32>
    %c1_306 = arith.constant 1 : index
    %c0_307 = arith.constant 0 : index
    %c0_308 = arith.constant 0 : index
    %c2_309 = arith.constant 2 : index
    %c0_310 = arith.constant 0 : index
    %179 = vector.load %arg11[%c1_306, %c0_307, %c0_308, %c2_309, %c0_310] : memref<2x2x10x10x8xf32, #tpu.memory_space<vmem>>, vector<1x1x8x8x8xf32>
    %180 = vector.shape_cast %179 : vector<1x1x8x8x8xf32> to vector<8x8x8xf32>
    %c0_311 = arith.constant 0 : index
    %c0_312 = arith.constant 0 : index
    %c1_313 = arith.constant 1 : index
    %c1_314 = arith.constant 1 : index
    %c0_315 = arith.constant 0 : index
    %181 = vector.load %arg11[%c0_311, %c0_312, %c1_313, %c1_314, %c0_315] : memref<2x2x10x10x8xf32, #tpu.memory_space<vmem>>, vector<1x1x8x8x8xf32>
    %182 = vector.shape_cast %181 : vector<1x1x8x8x8xf32> to vector<8x8x8xf32>
    %c0_316 = arith.constant 0 : index
    %c1_317 = arith.constant 1 : index
    %c1_318 = arith.constant 1 : index
    %c1_319 = arith.constant 1 : index
    %c0_320 = arith.constant 0 : index
    %183 = vector.load %arg11[%c0_316, %c1_317, %c1_318, %c1_319, %c0_320] : memref<2x2x10x10x8xf32, #tpu.memory_space<vmem>>, vector<1x1x8x8x8xf32>
    %184 = vector.shape_cast %183 : vector<1x1x8x8x8xf32> to vector<8x8x8xf32>
    %c0_321 = arith.constant 0 : index
    %c0_322 = arith.constant 0 : index
    %c1_323 = arith.constant 1 : index
    %c2_324 = arith.constant 2 : index
    %c0_325 = arith.constant 0 : index
    %185 = vector.load %arg11[%c0_321, %c0_322, %c1_323, %c2_324, %c0_325] : memref<2x2x10x10x8xf32, #tpu.memory_space<vmem>>, vector<1x1x8x8x8xf32>
    %186 = vector.shape_cast %185 : vector<1x1x8x8x8xf32> to vector<8x8x8xf32>
    %c1_326 = arith.constant 1 : index
    %c0_327 = arith.constant 0 : index
    %c1_328 = arith.constant 1 : index
    %c1_329 = arith.constant 1 : index
    %c0_330 = arith.constant 0 : index
    %187 = vector.load %arg11[%c1_326, %c0_327, %c1_328, %c1_329, %c0_330] : memref<2x2x10x10x8xf32, #tpu.memory_space<vmem>>, vector<1x1x8x8x8xf32>
    %188 = vector.shape_cast %187 : vector<1x1x8x8x8xf32> to vector<8x8x8xf32>
    %c1_331 = arith.constant 1 : index
    %c1_332 = arith.constant 1 : index
    %c1_333 = arith.constant 1 : index
    %c1_334 = arith.constant 1 : index
    %c0_335 = arith.constant 0 : index
    %189 = vector.load %arg11[%c1_331, %c1_332, %c1_333, %c1_334, %c0_335] : memref<2x2x10x10x8xf32, #tpu.memory_space<vmem>>, vector<1x1x8x8x8xf32>
    %190 = vector.shape_cast %189 : vector<1x1x8x8x8xf32> to vector<8x8x8xf32>
    %c1_336 = arith.constant 1 : index
    %c0_337 = arith.constant 0 : index
    %c1_338 = arith.constant 1 : index
    %c2_339 = arith.constant 2 : index
    %c0_340 = arith.constant 0 : index
    %191 = vector.load %arg11[%c1_336, %c0_337, %c1_338, %c2_339, %c0_340] : memref<2x2x10x10x8xf32, #tpu.memory_space<vmem>>, vector<1x1x8x8x8xf32>
    %192 = vector.shape_cast %191 : vector<1x1x8x8x8xf32> to vector<8x8x8xf32>
    %193 = tpu.concatenate %176, %178, %180, %182, %184, %186, %188, %190, %192 in 2 : vector<8x8x8xf32>, vector<8x8x8xf32>, vector<8x8x8xf32>, vector<8x8x8xf32>, vector<8x8x8xf32>, vector<8x8x8xf32>, vector<8x8x8xf32>, vector<8x8x8xf32>, vector<8x8x8xf32> -> vector<8x8x72xf32>
    %194 = vector.shape_cast %193 : vector<8x8x72xf32> to vector<64x72xf32>
    %c0_341 = arith.constant 0 : index
    %c1_342 = arith.constant 1 : index
    %c1_343 = arith.constant 1 : index
    %c0_344 = arith.constant 0 : index
    %c0_345 = arith.constant 0 : index
    %195 = vector.load %arg11[%c0_341, %c1_342, %c1_343, %c0_344, %c0_345] : memref<2x2x10x10x8xf32, #tpu.memory_space<vmem>>, vector<1x1x8x8x8xf32>
    %196 = vector.shape_cast %195 : vector<1x1x8x8x8xf32> to vector<8x8x8xf32>
    %c0_346 = arith.constant 0 : index
    %c0_347 = arith.constant 0 : index
    %c1_348 = arith.constant 1 : index
    %c1_349 = arith.constant 1 : index
    %c0_350 = arith.constant 0 : index
    %197 = vector.load %arg11[%c0_346, %c0_347, %c1_348, %c1_349, %c0_350] : memref<2x2x10x10x8xf32, #tpu.memory_space<vmem>>, vector<1x1x8x8x8xf32>
    %198 = vector.shape_cast %197 : vector<1x1x8x8x8xf32> to vector<8x8x8xf32>
    %c0_351 = arith.constant 0 : index
    %c1_352 = arith.constant 1 : index
    %c1_353 = arith.constant 1 : index
    %c1_354 = arith.constant 1 : index
    %c0_355 = arith.constant 0 : index
    %199 = vector.load %arg11[%c0_351, %c1_352, %c1_353, %c1_354, %c0_355] : memref<2x2x10x10x8xf32, #tpu.memory_space<vmem>>, vector<1x1x8x8x8xf32>
    %200 = vector.shape_cast %199 : vector<1x1x8x8x8xf32> to vector<8x8x8xf32>
    %c1_356 = arith.constant 1 : index
    %c1_357 = arith.constant 1 : index
    %c1_358 = arith.constant 1 : index
    %c0_359 = arith.constant 0 : index
    %c0_360 = arith.constant 0 : index
    %201 = vector.load %arg11[%c1_356, %c1_357, %c1_358, %c0_359, %c0_360] : memref<2x2x10x10x8xf32, #tpu.memory_space<vmem>>, vector<1x1x8x8x8xf32>
    %202 = vector.shape_cast %201 : vector<1x1x8x8x8xf32> to vector<8x8x8xf32>
    %c1_361 = arith.constant 1 : index
    %c0_362 = arith.constant 0 : index
    %c1_363 = arith.constant 1 : index
    %c1_364 = arith.constant 1 : index
    %c0_365 = arith.constant 0 : index
    %203 = vector.load %arg11[%c1_361, %c0_362, %c1_363, %c1_364, %c0_365] : memref<2x2x10x10x8xf32, #tpu.memory_space<vmem>>, vector<1x1x8x8x8xf32>
    %204 = vector.shape_cast %203 : vector<1x1x8x8x8xf32> to vector<8x8x8xf32>
    %c1_366 = arith.constant 1 : index
    %c1_367 = arith.constant 1 : index
    %c1_368 = arith.constant 1 : index
    %c1_369 = arith.constant 1 : index
    %c0_370 = arith.constant 0 : index
    %205 = vector.load %arg11[%c1_366, %c1_367, %c1_368, %c1_369, %c0_370] : memref<2x2x10x10x8xf32, #tpu.memory_space<vmem>>, vector<1x1x8x8x8xf32>
    %206 = vector.shape_cast %205 : vector<1x1x8x8x8xf32> to vector<8x8x8xf32>
    %c0_371 = arith.constant 0 : index
    %c1_372 = arith.constant 1 : index
    %c2_373 = arith.constant 2 : index
    %c0_374 = arith.constant 0 : index
    %c0_375 = arith.constant 0 : index
    %207 = vector.load %arg11[%c0_371, %c1_372, %c2_373, %c0_374, %c0_375] : memref<2x2x10x10x8xf32, #tpu.memory_space<vmem>>, vector<1x1x8x8x8xf32>
    %208 = vector.shape_cast %207 : vector<1x1x8x8x8xf32> to vector<8x8x8xf32>
    %c0_376 = arith.constant 0 : index
    %c0_377 = arith.constant 0 : index
    %c2_378 = arith.constant 2 : index
    %c1_379 = arith.constant 1 : index
    %c0_380 = arith.constant 0 : index
    %209 = vector.load %arg11[%c0_376, %c0_377, %c2_378, %c1_379, %c0_380] : memref<2x2x10x10x8xf32, #tpu.memory_space<vmem>>, vector<1x1x8x8x8xf32>
    %210 = vector.shape_cast %209 : vector<1x1x8x8x8xf32> to vector<8x8x8xf32>
    %c0_381 = arith.constant 0 : index
    %c1_382 = arith.constant 1 : index
    %c2_383 = arith.constant 2 : index
    %c1_384 = arith.constant 1 : index
    %c0_385 = arith.constant 0 : index
    %211 = vector.load %arg11[%c0_381, %c1_382, %c2_383, %c1_384, %c0_385] : memref<2x2x10x10x8xf32, #tpu.memory_space<vmem>>, vector<1x1x8x8x8xf32>
    %212 = vector.shape_cast %211 : vector<1x1x8x8x8xf32> to vector<8x8x8xf32>
    %213 = tpu.concatenate %196, %198, %200, %202, %204, %206, %208, %210, %212 in 2 : vector<8x8x8xf32>, vector<8x8x8xf32>, vector<8x8x8xf32>, vector<8x8x8xf32>, vector<8x8x8xf32>, vector<8x8x8xf32>, vector<8x8x8xf32>, vector<8x8x8xf32>, vector<8x8x8xf32> -> vector<8x8x72xf32>
    %214 = vector.shape_cast %213 : vector<8x8x72xf32> to vector<64x72xf32>
    %c0_386 = arith.constant 0 : index
    %c0_387 = arith.constant 0 : index
    %c1_388 = arith.constant 1 : index
    %c1_389 = arith.constant 1 : index
    %c0_390 = arith.constant 0 : index
    %215 = vector.load %arg11[%c0_386, %c0_387, %c1_388, %c1_389, %c0_390] : memref<2x2x10x10x8xf32, #tpu.memory_space<vmem>>, vector<1x1x8x8x8xf32>
    %216 = vector.shape_cast %215 : vector<1x1x8x8x8xf32> to vector<8x8x8xf32>
    %c0_391 = arith.constant 0 : index
    %c1_392 = arith.constant 1 : index
    %c1_393 = arith.constant 1 : index
    %c1_394 = arith.constant 1 : index
    %c0_395 = arith.constant 0 : index
    %217 = vector.load %arg11[%c0_391, %c1_392, %c1_393, %c1_394, %c0_395] : memref<2x2x10x10x8xf32, #tpu.memory_space<vmem>>, vector<1x1x8x8x8xf32>
    %218 = vector.shape_cast %217 : vector<1x1x8x8x8xf32> to vector<8x8x8xf32>
    %c0_396 = arith.constant 0 : index
    %c0_397 = arith.constant 0 : index
    %c1_398 = arith.constant 1 : index
    %c2_399 = arith.constant 2 : index
    %c0_400 = arith.constant 0 : index
    %219 = vector.load %arg11[%c0_396, %c0_397, %c1_398, %c2_399, %c0_400] : memref<2x2x10x10x8xf32, #tpu.memory_space<vmem>>, vector<1x1x8x8x8xf32>
    %220 = vector.shape_cast %219 : vector<1x1x8x8x8xf32> to vector<8x8x8xf32>
    %c1_401 = arith.constant 1 : index
    %c0_402 = arith.constant 0 : index
    %c1_403 = arith.constant 1 : index
    %c1_404 = arith.constant 1 : index
    %c0_405 = arith.constant 0 : index
    %221 = vector.load %arg11[%c1_401, %c0_402, %c1_403, %c1_404, %c0_405] : memref<2x2x10x10x8xf32, #tpu.memory_space<vmem>>, vector<1x1x8x8x8xf32>
    %222 = vector.shape_cast %221 : vector<1x1x8x8x8xf32> to vector<8x8x8xf32>
    %c1_406 = arith.constant 1 : index
    %c1_407 = arith.constant 1 : index
    %c1_408 = arith.constant 1 : index
    %c1_409 = arith.constant 1 : index
    %c0_410 = arith.constant 0 : index
    %223 = vector.load %arg11[%c1_406, %c1_407, %c1_408, %c1_409, %c0_410] : memref<2x2x10x10x8xf32, #tpu.memory_space<vmem>>, vector<1x1x8x8x8xf32>
    %224 = vector.shape_cast %223 : vector<1x1x8x8x8xf32> to vector<8x8x8xf32>
    %c1_411 = arith.constant 1 : index
    %c0_412 = arith.constant 0 : index
    %c1_413 = arith.constant 1 : index
    %c2_414 = arith.constant 2 : index
    %c0_415 = arith.constant 0 : index
    %225 = vector.load %arg11[%c1_411, %c0_412, %c1_413, %c2_414, %c0_415] : memref<2x2x10x10x8xf32, #tpu.memory_space<vmem>>, vector<1x1x8x8x8xf32>
    %226 = vector.shape_cast %225 : vector<1x1x8x8x8xf32> to vector<8x8x8xf32>
    %c0_416 = arith.constant 0 : index
    %c0_417 = arith.constant 0 : index
    %c2_418 = arith.constant 2 : index
    %c1_419 = arith.constant 1 : index
    %c0_420 = arith.constant 0 : index
    %227 = vector.load %arg11[%c0_416, %c0_417, %c2_418, %c1_419, %c0_420] : memref<2x2x10x10x8xf32, #tpu.memory_space<vmem>>, vector<1x1x8x8x8xf32>
    %228 = vector.shape_cast %227 : vector<1x1x8x8x8xf32> to vector<8x8x8xf32>
    %c0_421 = arith.constant 0 : index
    %c1_422 = arith.constant 1 : index
    %c2_423 = arith.constant 2 : index
    %c1_424 = arith.constant 1 : index
    %c0_425 = arith.constant 0 : index
    %229 = vector.load %arg11[%c0_421, %c1_422, %c2_423, %c1_424, %c0_425] : memref<2x2x10x10x8xf32, #tpu.memory_space<vmem>>, vector<1x1x8x8x8xf32>
    %230 = vector.shape_cast %229 : vector<1x1x8x8x8xf32> to vector<8x8x8xf32>
    %c0_426 = arith.constant 0 : index
    %c0_427 = arith.constant 0 : index
    %c2_428 = arith.constant 2 : index
    %c2_429 = arith.constant 2 : index
    %c0_430 = arith.constant 0 : index
    %231 = vector.load %arg11[%c0_426, %c0_427, %c2_428, %c2_429, %c0_430] : memref<2x2x10x10x8xf32, #tpu.memory_space<vmem>>, vector<1x1x8x8x8xf32>
    %232 = vector.shape_cast %231 : vector<1x1x8x8x8xf32> to vector<8x8x8xf32>
    %233 = tpu.concatenate %216, %218, %220, %222, %224, %226, %228, %230, %232 in 2 : vector<8x8x8xf32>, vector<8x8x8xf32>, vector<8x8x8xf32>, vector<8x8x8xf32>, vector<8x8x8xf32>, vector<8x8x8xf32>, vector<8x8x8xf32>, vector<8x8x8xf32>, vector<8x8x8xf32> -> vector<8x8x72xf32>
    %234 = vector.shape_cast %233 : vector<8x8x72xf32> to vector<64x72xf32>
    %235 = tpu.concatenate %174, %194, %214, %234 in 0 : vector<64x72xf32>, vector<64x72xf32>, vector<64x72xf32>, vector<64x72xf32> -> vector<256x72xf32>
    %236 = arith.truncf %235 : vector<256x72xf32> to vector<256x72xbf16>
    %cst_431 = arith.constant dense<0.000000e+00> : vector<256x8xf32>
    %237 = tpu.matmul %236, %152, %cst_431 {dimension_numbers = #tpu.dot_dimension_numbers<[1], [0], [0], [1], [0, 0, 1, 1], [], []>} : vector<256x72xbf16>, vector<72x8xbf16>, vector<256x8xf32> -> vector<256x8xf32>
    %238 = vector.broadcast %154 : vector<1x8xf32> to vector<256x8xf32>
    %239 = arith.addf %237, %238 : vector<256x8xf32>
    %cst_432 = arith.constant 0.000000e+00 : f32
    %240 = vector.broadcast %cst_432 : f32 to vector<256x8xf32>
    %241 = arith.maximumf %239, %240 : vector<256x8xf32>
    %c0_433 = arith.constant 0 : index
    %c0_434 = arith.constant 0 : index
    %c0_435 = arith.constant 0 : index
    %242 = vector.load %arg9[%c0_433, %c0_434, %c0_435] : memref<1x256x8xf32, #tpu.memory_space<vmem>>, vector<1x256x8xf32>
    %243 = vector.shape_cast %242 : vector<1x256x8xf32> to vector<256x8xf32>
    %244 = vector.shape_cast %241 : vector<256x8xf32> to vector<1x256x8xf32>
    tpu.vector_store %arg9[%c0_433, %c0_434, %c0_435], %244 {strides = array<i32>} : memref<1x256x8xf32, #tpu.memory_space<vmem>>, vector<1x256x8xf32>,
    return
  }
  func.func @transform_0(%arg0: i32) -> (i32, i32, i32) {
    %c0_i32 = arith.constant 0 : i32
    %c0_i32_0 = arith.constant 0 : i32
    %c0_i32_1 = arith.constant 0 : i32
    return %arg0, %c0_i32, %c0_i32_0 : i32, i32, i32
  }
  func.func @transform_1(%arg0: i32) -> (i32, i32, i32) {
    %c0_i32 = arith.constant 0 : i32
    %c0_i32_0 = arith.constant 0 : i32
    %c0_i32_1 = arith.constant 0 : i32
    return %arg0, %c0_i32, %c0_i32_0 : i32, i32, i32
  }
  func.func @transform_2(%arg0: i32) -> (i32, i32) {
    %c0_i32 = arith.constant 0 : i32
    %c0_i32_0 = arith.constant 0 : i32
    %c0_i32_1 = arith.constant 0 : i32
    return %c0_i32, %c0_i32_0 : i32, i32
  }
  func.func @transform_3(%arg0: i32) -> (i32, i32) {
    %c0_i32 = arith.constant 0 : i32
    %c0_i32_0 = arith.constant 0 : i32
    %c0_i32_1 = arith.constant 0 : i32
    return %c0_i32, %c0_i32_0 : i32, i32
  }
  func.func @transform_4(%arg0: i32) -> (i32, i32) {
    %c0_i32 = arith.constant 0 : i32
    %c0_i32_0 = arith.constant 0 : i32
    %c0_i32_1 = arith.constant 0 : i32
    return %c0_i32, %c0_i32_0 : i32, i32
  }
  func.func @transform_5(%arg0: i32) -> (i32, i32) {
    %c0_i32 = arith.constant 0 : i32
    %c0_i32_0 = arith.constant 0 : i32
    %c0_i32_1 = arith.constant 0 : i32
    return %c0_i32, %c0_i32_0 : i32, i32
  }
  func.func @transform_6(%arg0: i32) -> (i32, i32, i32) {
    %c0_i32 = arith.constant 0 : i32
    %c0_i32_0 = arith.constant 0 : i32
    %c0_i32_1 = arith.constant 0 : i32
    %c0_i32_2 = arith.constant 0 : i32
    return %c0_i32, %c0_i32_0, %c0_i32_1 : i32, i32, i32
  }
  func.func @transform_7(%arg0: i32) -> (i32, i32, i32) {
    %c0_i32 = arith.constant 0 : i32
    %c0_i32_0 = arith.constant 0 : i32
    %c0_i32_1 = arith.constant 0 : i32
    %c0_i32_2 = arith.constant 0 : i32
    return %c0_i32, %c0_i32_0, %c0_i32_1 : i32, i32, i32
  }
  func.func @transform_8(%arg0: i32) -> (i32, i32, i32) {
    %c0_i32 = arith.constant 0 : i32
    %c0_i32_0 = arith.constant 0 : i32
    %c0_i32_1 = arith.constant 0 : i32
    return %arg0, %c0_i32, %c0_i32_0 : i32, i32, i32
  }
}

</mosaic_0001>

<llo_original>
// kernel: up_sum_block_forward.1
$region0: #{up_sum_block_forward.1}
  #allocation0 [shape = 'u32[]', space=smem, size = 0x4, offset = 0x4, fixed_abs, tag = 'smem constant byte address 0x4 - core index']
  #allocation1 [shape = 'u32[144,128]{1,0:T(1,128)}', space=vmem, size = 0x12000, scoped, tag = 'internal scratch']
  #allocation2 [shape = 'f32[2,2,10,10,4]{4,3,2,1,0:T(8,128)}', space=vmem, size = 0x50000, scoped, tag = 'scratch operand']
  #allocation3 [shape = 'f32[2,2,10,10,8]{4,3,2,1,0:T(8,128)}', space=vmem, size = 0x50000, scoped, tag = 'scratch operand']
  %s0 = inlined_call_operand.vmem [shape: bf16[2,64,4], index: 0, kind: input, shape index: {}]
  %s1 = inlined_call_operand.vmem [shape: bf16[2,256,8], index: 1, kind: input, shape index: {}]
  %s2 = inlined_call_operand.vmem [shape: bf16[8,4], index: 2, kind: input, shape index: {}]
  %s3 = inlined_call_operand.vmem [shape: f32[1,4], index: 3, kind: input, shape index: {}]
  %s4 = inlined_call_operand.vmem [shape: bf16[36,8], index: 4, kind: input, shape index: {}]
  %s5 = inlined_call_operand.vmem [shape: f32[1,8], index: 5, kind: input, shape index: {}]
  %s6 = inlined_call_operand.vmem [shape: bf16[1,72,8], index: 6, kind: input, shape index: {}]
  %s7 = inlined_call_operand.vmem [shape: f32[1,1,8], index: 7, kind: input, shape index: {}]
  %s8 = inlined_call_operand.vmem [shape: f32[2,256,8], index: 8, kind: output, shape index: {}]
  %s9 = sld [smem:[#allocation0]]
  $region65: #{up_sum_block_forward.1} parent=0
    _
  %s11 = ssub.s32 1, %s9
  %s12 = scalar_select 0, %s11, %s9
  loop: start=0, step=1, limit=4
  $region2: #{up_sum_block_forward.1} parent=0 // loop_pre_header
    _
  $region3: #{up_sum_block_forward.1} parent=0 // loop_header
    %s14 = sphi 0, %s18
    %p15 = scmp.ge.s32.totalorder %s14, 4
    %s24 = sphi 0, %s26
    %s27 = sphi 0, %s24
    %s28 = sphi 0, %s27
    %s44 = sphi 0, %s28
    %s50 = sphi 0, %s52
    %s53 = sphi 0, %s50
    %s54 = sphi 0, %s53
    %s70 = sphi 0, %s54
    %s74 = sphi 0, %s74
    %s76 = sphi 0, %s74
    %s77 = sphi 0, %s76
    %s91 = sphi 0, %s77
    %s95 = sphi 0, %s95
    %s97 = sphi 0, %s95
    %s98 = sphi 0, %s97
    %s112 = sphi 0, %s98
    %s116 = sphi 0, %s116
    %s118 = sphi 0, %s116
    %s119 = sphi 0, %s118
    %s133 = sphi 0, %s119
    %s137 = sphi 0, %s137
    %s139 = sphi 0, %s137
    %s140 = sphi 0, %s139
    %s154 = sphi 0, %s140
    %s158 = sphi 0, %s158
    %s160 = sphi 0, %s158
    %s161 = sphi 0, %s160
    %s175 = sphi 0, %s161
    %s179 = sphi 0, %s179
    %s181 = sphi 0, %s179
    %s182 = sphi 0, %s181
    %s196 = sphi 0, %s182
    %s202 = sphi 0, %s204
    %s205 = sphi 0, %s202
    %s206 = sphi 0, %s205
    %s222 = sphi 0, %s206
  $region4: #{up_sum_block_forward.1} parent=0 // loop_header_branch
    %17 = sbr.rel (%p15) target = $region8
  $region5: #{up_sum_block_forward.1} parent=0 // loop_body
    %s19 = ssub.s32 %s14, 1
    %s20 = ssub.s32 %s14, 2
    %s21 = sadd.s32 %s14, 1
    %s22 = ssub.s32 %s14, %s21
    %p23 = scmp.eq.s32.totalorder %s22, 0
    %s25 = sadd.s32 %s24, 1
    %s26 = scalar_select %p23, %s24, %s25
    %p29 = pneg %p23
    %p30 = scmp.eq.s32.totalorder %s14, 1
    %p31 = por %p29, %p30
    %p32 = scmp.ne.s32.totalorder %s24, %s27
    %p33 = scmp.eq.s32.totalorder %s14, 0
    %p34 = por %p32, %p33
    %p35 = scmp.ne.s32.totalorder %s24, %s27
    %p36 = scmp.eq.s32.totalorder %s19, 1
    %p37 = por %p35, %p36
    %p38 = scmp.ne.s32.totalorder %s27, %s28
    %p39 = scmp.eq.s32.totalorder %s19, 0
    %p40 = por %p38, %p39
    %p41 = scmp.ne.s32.totalorder %s27, %s28
    %p42 = scmp.eq.s32.totalorder %s20, 1
    %p43 = por %p41, %p42
    %p45 = scmp.ne.s32.totalorder %s28, %s44
    %p46 = scmp.eq.s32.totalorder %s20, 0
    %p47 = por %p45, %p46
    %s48 = ssub.s32 %s14, %s21
    %p49 = scmp.eq.s32.totalorder %s48, 0
    %s51 = sadd.s32 %s50, 1
    %s52 = scalar_select %p49, %s50, %s51
    %p55 = pneg %p49
    %p56 = scmp.eq.s32.totalorder %s14, 1
    %p57 = por %p55, %p56
    %p58 = scmp.ne.s32.totalorder %s50, %s53
    %p59 = scmp.eq.s32.totalorder %s14, 0
    %p60 = por %p58, %p59
    %p61 = scmp.ne.s32.totalorder %s50, %s53
    %p62 = scmp.eq.s32.totalorder %s19, 1
    %p63 = por %p61, %p62
    %p64 = scmp.ne.s32.totalorder %s53, %s54
    %p65 = scmp.eq.s32.totalorder %s19, 0
    %p66 = por %p64, %p65
    %p67 = scmp.ne.s32.totalorder %s53, %s54
    %p68 = scmp.eq.s32.totalorder %s20, 1
    %p69 = por %p67, %p68
    %p71 = scmp.ne.s32.totalorder %s54, %s70
    %p72 = scmp.eq.s32.totalorder %s20, 0
    %p73 = por %p71, %p72
    %s75 = sadd.s32 %s74, 1
    %p78 = scmp.eq.s32.totalorder %s14, 1
    %p79 = scmp.ne.s32.totalorder %s74, %s76
    %p80 = scmp.eq.s32.totalorder %s14, 0
    %p81 = por %p79, %p80
    %p82 = scmp.ne.s32.totalorder %s74, %s76
    %p83 = scmp.eq.s32.totalorder %s19, 1
    %p84 = por %p82, %p83
    %p85 = scmp.ne.s32.totalorder %s76, %s77
    %p86 = scmp.eq.s32.totalorder %s19, 0
    %p87 = por %p85, %p86
    %p88 = scmp.ne.s32.totalorder %s76, %s77
    %p89 = scmp.eq.s32.totalorder %s20, 1
    %p90 = por %p88, %p89
    %p92 = scmp.ne.s32.totalorder %s77, %s91
    %p93 = scmp.eq.s32.totalorder %s20, 0
    %p94 = por %p92, %p93
    %s96 = sadd.s32 %s95, 1
    %p99 = scmp.eq.s32.totalorder %s14, 1
    %p100 = scmp.ne.s32.totalorder %s95, %s97
    %p101 = scmp.eq.s32.totalorder %s14, 0
    %p102 = por %p100, %p101
    %p103 = scmp.ne.s32.totalorder %s95, %s97
    %p104 = scmp.eq.s32.totalorder %s19, 1
    %p105 = por %p103, %p104
    %p106 = scmp.ne.s32.totalorder %s97, %s98
    %p107 = scmp.eq.s32.totalorder %s19, 0
    %p108 = por %p106, %p107
    %p109 = scmp.ne.s32.totalorder %s97, %s98
    %p110 = scmp.eq.s32.totalorder %s20, 1
    %p111 = por %p109, %p110
    %p113 = scmp.ne.s32.totalorder %s98, %s112
    %p114 = scmp.eq.s32.totalorder %s20, 0
    %p115 = por %p113, %p114
    %s117 = sadd.s32 %s116, 1
    %p120 = scmp.eq.s32.totalorder %s14, 1
    %p121 = scmp.ne.s32.totalorder %s116, %s118
    %p122 = scmp.eq.s32.totalorder %s14, 0
    %p123 = por %p121, %p122
    %p124 = scmp.ne.s32.totalorder %s116, %s118
    %p125 = scmp.eq.s32.totalorder %s19, 1
    %p126 = por %p124, %p125
    %p127 = scmp.ne.s32.totalorder %s118, %s119
    %p128 = scmp.eq.s32.totalorder %s19, 0
    %p129 = por %p127, %p128
    %p130 = scmp.ne.s32.totalorder %s118, %s119
    %p131 = scmp.eq.s32.totalorder %s20, 1
    %p132 = por %p130, %p131
    %p134 = scmp.ne.s32.totalorder %s119, %s133
    %p135 = scmp.eq.s32.totalorder %s20, 0
    %p136 = por %p134, %p135
    %s138 = sadd.s32 %s137, 1
    %p141 = scmp.eq.s32.totalorder %s14, 1
    %p142 = scmp.ne.s32.totalorder %s137, %s139
    %p143 = scmp.eq.s32.totalorder %s14, 0
    %p144 = por %p142, %p143
    %p145 = scmp.ne.s32.totalorder %s137, %s139
    %p146 = scmp.eq.s32.totalorder %s19, 1
    %p147 = por %p145, %p146
    %p148 = scmp.ne.s32.totalorder %s139, %s140
    %p149 = scmp.eq.s32.totalorder %s19, 0
    %p150 = por %p148, %p149
    %p151 = scmp.ne.s32.totalorder %s139, %s140
    %p152 = scmp.eq.s32.totalorder %s20, 1
    %p153 = por %p151, %p152
    %p155 = scmp.ne.s32.totalorder %s140, %s154
    %p156 = scmp.eq.s32.totalorder %s20, 0
    %p157 = por %p155, %p156
    %s159 = sadd.s32 %s158, 1
    %p162 = scmp.eq.s32.totalorder %s14, 1
    %p163 = scmp.ne.s32.totalorder %s158, %s160
    %p164 = scmp.eq.s32.totalorder %s14, 0
    %p165 = por %p163, %p164
    %p166 = scmp.ne.s32.totalorder %s158, %s160
    %p167 = scmp.eq.s32.totalorder %s19, 1
    %p168 = por %p166, %p167
    %p169 = scmp.ne.s32.totalorder %s160, %s161
    %p170 = scmp.eq.s32.totalorder %s19, 0
    %p171 = por %p169, %p170
    %p172 = scmp.ne.s32.totalorder %s160, %s161
    %p173 = scmp.eq.s32.totalorder %s20, 1
    %p174 = por %p172, %p173
    %p176 = scmp.ne.s32.totalorder %s161, %s175
    %p177 = scmp.eq.s32.totalorder %s20, 0
    %p178 = por %p176, %p177
    %s180 = sadd.s32 %s179, 1
    %p183 = scmp.eq.s32.totalorder %s14, 1
    %p184 = scmp.ne.s32.totalorder %s179, %s181
    %p185 = scmp.eq.s32.totalorder %s14, 0
    %p186 = por %p184, %p185
    %p187 = scmp.ne.s32.totalorder %s179, %s181
    %p188 = scmp.eq.s32.totalorder %s19, 1
    %p189 = por %p187, %p188
    %p190 = scmp.ne.s32.totalorder %s181, %s182
    %p191 = scmp.eq.s32.totalorder %s19, 0
    %p192 = por %p190, %p191
    %p193 = scmp.ne.s32.totalorder %s181, %s182
    %p194 = scmp.eq.s32.totalorder %s20, 1
    %p195 = por %p193, %p194
    %p197 = scmp.ne.s32.totalorder %s182, %s196
    %p198 = scmp.eq.s32.totalorder %s20, 0
    %p199 = por %p197, %p198
    %s200 = ssub.s32 %s14, %s21
    %p201 = scmp.eq.s32.totalorder %s200, 0
    %s203 = sadd.s32 %s202, 1
    %s204 = scalar_select %p201, %s202, %s203
    %p207 = pneg %p201
    %p208 = scmp.eq.s32.totalorder %s14, 1
    %p209 = por %p207, %p208
    %p210 = scmp.ne.s32.totalorder %s202, %s205
    %p211 = scmp.eq.s32.totalorder %s14, 0
    %p212 = por %p210, %p211
    %p213 = scmp.ne.s32.totalorder %s202, %s205
    %p214 = scmp.eq.s32.totalorder %s19, 1
    %p215 = por %p213, %p214
    %p216 = scmp.ne.s32.totalorder %s205, %s206
    %p217 = scmp.eq.s32.totalorder %s19, 0
    %p218 = por %p216, %p217
    %p219 = scmp.ne.s32.totalorder %s205, %s206
    %p220 = scmp.eq.s32.totalorder %s20, 1
    %p221 = por %p219, %p220
    %p223 = scmp.ne.s32.totalorder %s206, %s222
    %p224 = scmp.eq.s32.totalorder %s20, 0
    %p225 = por %p223, %p224
    %p226 = scmp.le.s32.totalorder 1, %s14
    %p227 = scmp.lt.s32.totalorder %s14, 3
    %p228 = pnand %p226, %p227
    %p229 = pneg %p228
    // Predicated region
    $region9: #{up_sum_block_forward.1} parent=5 // pred_check
      _
    $region10: #{up_sum_block_forward.1} parent=5 // pred_check_branch
      %231 = sbr.rel (%p228) target = $region12
    $region11: #{up_sum_block_forward.1} parent=5 // pred_region
      %s232 = ssub.s32 %s14, 1
      // Predicated region
      $region13: #{up_sum_block_forward.1} parent=11 // pred_check
        %p233 = pneg %p87
      $region14: #{up_sum_block_forward.1} parent=11 // pred_check_branch
        %235 = sbr.rel (%p233) target = $region16
      $region15: #{up_sum_block_forward.1} parent=11 // pred_region
        _
      $region16: #{up_sum_block_forward.1} parent=11 // pred_fallthru
        _
      // Predicated region
      $region17: #{up_sum_block_forward.1} parent=11 // pred_check
        %p236 = pneg %p108
      $region18: #{up_sum_block_forward.1} parent=11 // pred_check_branch
        %238 = sbr.rel (%p236) target = $region20
      $region19: #{up_sum_block_forward.1} parent=11 // pred_region
        _
      $region20: #{up_sum_block_forward.1} parent=11 // pred_fallthru
        _
      // Predicated region
      $region21: #{up_sum_block_forward.1} parent=11 // pred_check
        %p239 = pneg %p129
      $region22: #{up_sum_block_forward.1} parent=11 // pred_check_branch
        %241 = sbr.rel (%p239) target = $region24
      $region23: #{up_sum_block_forward.1} parent=11 // pred_region
        _
      $region24: #{up_sum_block_forward.1} parent=11 // pred_fallthru
        _
      // Predicated region
      $region25: #{up_sum_block_forward.1} parent=11 // pred_check
        %p242 = pneg %p150
      $region26: #{up_sum_block_forward.1} parent=11 // pred_check_branch
        %244 = sbr.rel (%p242) target = $region28
      $region27: #{up_sum_block_forward.1} parent=11 // pred_region
        _
      $region28: #{up_sum_block_forward.1} parent=11 // pred_fallthru
        _
      // Predicated region
      $region29: #{up_sum_block_forward.1} parent=11 // pred_check
        %p245 = pneg %p171
      $region30: #{up_sum_block_forward.1} parent=11 // pred_check_branch
        %247 = sbr.rel (%p245) target = $region32
      $region31: #{up_sum_block_forward.1} parent=11 // pred_region
        _
      $region32: #{up_sum_block_forward.1} parent=11 // pred_fallthru
        _
      // Predicated region
      $region33: #{up_sum_block_forward.1} parent=11 // pred_check
        %p248 = pneg %p192
      $region34: #{up_sum_block_forward.1} parent=11 // pred_check_branch
        %250 = sbr.rel (%p248) target = $region36
      $region35: #{up_sum_block_forward.1} parent=11 // pred_region
        _
      $region36: #{up_sum_block_forward.1} parent=11 // pred_fallthru
        _
    $region12: #{up_sum_block_forward.1} parent=5 // pred_fallthru
      _
    %p251 = scmp.lt.s32.totalorder %s14, 2
    // Predicated region
    $region37: #{up_sum_block_forward.1} parent=5 // pred_check
      %p252 = pneg %p251
    $region38: #{up_sum_block_forward.1} parent=5 // pred_check_branch
      %254 = sbr.rel (%p252) target = $region40
    $region39: #{up_sum_block_forward.1} parent=5 // pred_region
      // Predicated region
      $region41: #{up_sum_block_forward.1} parent=39 // pred_check
        %p255 = pneg %p34
      $region42: #{up_sum_block_forward.1} parent=39 // pred_check_branch
        %257 = sbr.rel (%p255) target = $region44
      $region43: #{up_sum_block_forward.1} parent=39 // pred_region
        %p258 = scmp.lt.s32.totalorder %s14, 1
        %s259 = scalar_select %p258, %s14, 1
        %s260 = smul.addr %s259, 8
        %s261 = smul.addr %s260, 4
        %s262 = scalar_lea.vmem %s0, %s261
      $region44: #{up_sum_block_forward.1} parent=39 // pred_fallthru
        _
      // Predicated region
      $region45: #{up_sum_block_forward.1} parent=39 // pred_check
        %p263 = pneg %p60
      $region46: #{up_sum_block_forward.1} parent=39 // pred_check_branch
        %265 = sbr.rel (%p263) target = $region48
      $region47: #{up_sum_block_forward.1} parent=39 // pred_region
        %p266 = scmp.lt.s32.totalorder %s14, 1
        %s267 = scalar_select %p266, %s14, 1
        %s268 = smul.addr %s267, 32
        %s269 = smul.addr %s268, 4
        %s270 = scalar_lea.vmem %s1, %s269
      $region48: #{up_sum_block_forward.1} parent=39 // pred_fallthru
        _
    $region40: #{up_sum_block_forward.1} parent=5 // pred_fallthru
      _
    %p271 = scmp.le.s32.totalorder 1, %s14
    %p272 = scmp.lt.s32.totalorder %s14, 3
    %p273 = pnand %p271, %p272
    %p274 = pneg %p273
    // Predicated region
    $region49: #{up_sum_block_forward.1} parent=5 // pred_check
      _
    $region50: #{up_sum_block_forward.1} parent=5 // pred_check_branch
      %276 = sbr.rel (%p273) target = $region52
    $region51: #{up_sum_block_forward.1} parent=5 // pred_region
      %s277 = ssub.s32 %s14, 1
      %p278 = scmp.lt.s32.totalorder %s19, 1
      %s279 = scalar_select %p278, %s19, 1
      %s280 = smul.addr %s279, 8
      %s281 = smul.addr %s280, 4
      %s282 = scalar_lea.vmem %s0, %s281
      %p283 = pneg %p40
      %p284 = pneg %p37
      %p285 = scmp.lt.s32.totalorder %s19, 1
      %s286 = scalar_select %p285, %s19, 1
      %s287 = smul.addr %s286, 32
      %s288 = smul.addr %s287, 4
      %s289 = scalar_lea.vmem %s1, %s288
      %p290 = pneg %p66
      %p291 = pneg %p63
      %p292 = pneg %p87
      %p293 = pneg %p84
      %p294 = pneg %p108
      %p295 = pneg %p105
      %p296 = pneg %p129
      %p297 = pneg %p126
      %p298 = pneg %p150
      %p299 = pneg %p147
      %p300 = pneg %p171
      %p301 = pneg %p168
      %p302 = pneg %p192
      %p303 = pneg %p189
      %p304 = pneg %p218
      %p305 = pneg %p215
      %p306 = scmp.lt.s32.totalorder %s19, 1
      %s307 = scalar_select %p306, %s19, 1
      %s308 = smul.addr %s307, 32
      %s309 = smul.addr %s308, 8
      %s310 = scalar_lea.vmem %s8, %s309
      %p311 = scmp.lt.s32.totalorder %s19, 1
      %s312 = scalar_select %p311, %s19, 1
      %s313 = smul.addr %s312, 8
      %s314 = smul.addr %s313, 4
      %s315 = scalar_lea.vmem %s0, %s314
      %p316 = scmp.lt.s32.totalorder %s19, 1
      %s317 = scalar_select %p316, %s19, 1
      %s318 = smul.addr %s317, 32
      %s319 = smul.addr %s318, 4
      %s320 = scalar_lea.vmem %s1, %s319
      %p321 = scmp.lt.s32.totalorder %s19, 1
      %s322 = scalar_select %p321, %s19, 1
      %s323 = smul.addr %s322, 32
      %s324 = smul.addr %s323, 8
      %s325 = scalar_lea.vmem %s8, %s324
      %vm327 = vcmask 31744
      %328 = vst.msk [vmem:[#allocation2] sm:$0xff] %vm327, 0.0
      %vm329 = vcmask 25600
      %330 = vst.msk [vmem:[#allocation2 + $0x8] sm:$0x3] %vm329, 0.0
      %331 = vst.msk [vmem:[#allocation2 + $0x10] sm:$0xff] %vm327, 0.0
      %332 = vst.msk [vmem:[#allocation2 + $0x18] sm:$0x3] %vm329, 0.0
      %333 = vst.msk [vmem:[#allocation2 + $0x20] sm:$0xff] %vm327, 0.0
      %334 = vst.msk [vmem:[#allocation2 + $0x28] sm:$0x3] %vm329, 0.0
      %335 = vst.msk [vmem:[#allocation2 + $0x30] sm:$0xff] %vm327, 0.0
      %336 = vst.msk [vmem:[#allocation2 + $0x38] sm:$0x3] %vm329, 0.0
      %337 = vst.msk [vmem:[#allocation2 + $0x40] sm:$0xff] %vm327, 0.0
      %338 = vst.msk [vmem:[#allocation2 + $0x48] sm:$0x3] %vm329, 0.0
      %339 = vst.msk [vmem:[#allocation2 + $0x50] sm:$0xff] %vm327, 0.0
      %340 = vst.msk [vmem:[#allocation2 + $0x58] sm:$0x3] %vm329, 0.0
      %341 = vst.msk [vmem:[#allocation2 + $0x60] sm:$0xff] %vm327, 0.0
      %342 = vst.msk [vmem:[#allocation2 + $0x68] sm:$0x3] %vm329, 0.0
      %343 = vst.msk [vmem:[#allocation2 + $0x70] sm:$0xff] %vm327, 0.0
      %344 = vst.msk [vmem:[#allocation2 + $0x78] sm:$0x3] %vm329, 0.0
      %345 = vst.msk [vmem:[#allocation2 + $0x80] sm:$0xff] %vm327, 0.0
      %346 = vst.msk [vmem:[#allocation2 + $0x88] sm:$0x3] %vm329, 0.0
      %347 = vst.msk [vmem:[#allocation2 + $0x90] sm:$0xff] %vm327, 0.0
      %348 = vst.msk [vmem:[#allocation2 + $0x98] sm:$0x3] %vm329, 0.0
      %349 = vst.msk [vmem:[#allocation2 + $0xa0] sm:$0xff] %vm327, 0.0
      %350 = vst.msk [vmem:[#allocation2 + $0xa8] sm:$0x3] %vm329, 0.0
      %351 = vst.msk [vmem:[#allocation2 + $0xb0] sm:$0xff] %vm327, 0.0
      %352 = vst.msk [vmem:[#allocation2 + $0xb8] sm:$0x3] %vm329, 0.0
      %353 = vst.msk [vmem:[#allocation2 + $0xc0] sm:$0xff] %vm327, 0.0
      %354 = vst.msk [vmem:[#allocation2 + $0xc8] sm:$0x3] %vm329, 0.0
      %355 = vst.msk [vmem:[#allocation2 + $0xd0] sm:$0xff] %vm327, 0.0
      %356 = vst.msk [vmem:[#allocation2 + $0xd8] sm:$0x3] %vm329, 0.0
      %357 = vst.msk [vmem:[#allocation2 + $0xe0] sm:$0xff] %vm327, 0.0
      %358 = vst.msk [vmem:[#allocation2 + $0xe8] sm:$0x3] %vm329, 0.0
      %359 = vst.msk [vmem:[#allocation2 + $0xf0] sm:$0xff] %vm327, 0.0
      %360 = vst.msk [vmem:[#allocation2 + $0xf8] sm:$0x3] %vm329, 0.0
      %361 = vst.msk [vmem:[#allocation2 + $0x100] sm:$0xff] %vm327, 0.0
      %362 = vst.msk [vmem:[#allocation2 + $0x108] sm:$0x3] %vm329, 0.0
      %363 = vst.msk [vmem:[#allocation2 + $0x110] sm:$0xff] %vm327, 0.0
      %364 = vst.msk [vmem:[#allocation2 + $0x118] sm:$0x3] %vm329, 0.0
      %365 = vst.msk [vmem:[#allocation2 + $0x120] sm:$0xff] %vm327, 0.0
      %366 = vst.msk [vmem:[#allocation2 + $0x128] sm:$0x3] %vm329, 0.0
      %367 = vst.msk [vmem:[#allocation2 + $0x130] sm:$0xff] %vm327, 0.0
      %368 = vst.msk [vmem:[#allocation2 + $0x138] sm:$0x3] %vm329, 0.0
      %369 = vst.msk [vmem:[#allocation2 + $0x140] sm:$0xff] %vm327, 0.0
      %370 = vst.msk [vmem:[#allocation2 + $0x148] sm:$0x3] %vm329, 0.0
      %371 = vst.msk [vmem:[#allocation2 + $0x150] sm:$0xff] %vm327, 0.0
      %372 = vst.msk [vmem:[#allocation2 + $0x158] sm:$0x3] %vm329, 0.0
      %373 = vst.msk [vmem:[#allocation2 + $0x160] sm:$0xff] %vm327, 0.0
      %374 = vst.msk [vmem:[#allocation2 + $0x168] sm:$0x3] %vm329, 0.0
      %375 = vst.msk [vmem:[#allocation2 + $0x170] sm:$0xff] %vm327, 0.0
      %376 = vst.msk [vmem:[#allocation2 + $0x178] sm:$0x3] %vm329, 0.0
      %377 = vst.msk [vmem:[#allocation2 + $0x180] sm:$0xff] %vm327, 0.0
      %378 = vst.msk [vmem:[#allocation2 + $0x188] sm:$0x3] %vm329, 0.0
      %379 = vst.msk [vmem:[#allocation2 + $0x190] sm:$0xff] %vm327, 0.0
      %380 = vst.msk [vmem:[#allocation2 + $0x198] sm:$0x3] %vm329, 0.0
      %381 = vst.msk [vmem:[#allocation2 + $0x1a0] sm:$0xff] %vm327, 0.0
      %382 = vst.msk [vmem:[#allocation2 + $0x1a8] sm:$0x3] %vm329, 0.0
      %383 = vst.msk [vmem:[#allocation2 + $0x1b0] sm:$0xff] %vm327, 0.0
      %384 = vst.msk [vmem:[#allocation2 + $0x1b8] sm:$0x3] %vm329, 0.0
      %385 = vst.msk [vmem:[#allocation2 + $0x1c0] sm:$0xff] %vm327, 0.0
      %386 = vst.msk [vmem:[#allocation2 + $0x1c8] sm:$0x3] %vm329, 0.0
      %387 = vst.msk [vmem:[#allocation2 + $0x1d0] sm:$0xff] %vm327, 0.0
      %388 = vst.msk [vmem:[#allocation2 + $0x1d8] sm:$0x3] %vm329, 0.0
      %389 = vst.msk [vmem:[#allocation2 + $0x1e0] sm:$0xff] %vm327, 0.0
      %390 = vst.msk [vmem:[#allocation2 + $0x1e8] sm:$0x3] %vm329, 0.0
      %391 = vst.msk [vmem:[#allocation2 + $0x1f0] sm:$0xff] %vm327, 0.0
      %392 = vst.msk [vmem:[#allocation2 + $0x1f8] sm:$0x3] %vm329, 0.0
      %393 = vst.msk [vmem:[#allocation2 + $0x200] sm:$0xff] %vm327, 0.0
      %394 = vst.msk [vmem:[#allocation2 + $0x208] sm:$0x3] %vm329, 0.0
      %395 = vst.msk [vmem:[#allocation2 + $0x210] sm:$0xff] %vm327, 0.0
      %396 = vst.msk [vmem:[#allocation2 + $0x218] sm:$0x3] %vm329, 0.0
      %397 = vst.msk [vmem:[#allocation2 + $0x220] sm:$0xff] %vm327, 0.0
      %398 = vst.msk [vmem:[#allocation2 + $0x228] sm:$0x3] %vm329, 0.0
      %399 = vst.msk [vmem:[#allocation2 + $0x230] sm:$0xff] %vm327, 0.0
      %400 = vst.msk [vmem:[#allocation2 + $0x238] sm:$0x3] %vm329, 0.0
      %401 = vst.msk [vmem:[#allocation2 + $0x240] sm:$0xff] %vm327, 0.0
      %402 = vst.msk [vmem:[#allocation2 + $0x248] sm:$0x3] %vm329, 0.0
      %403 = vst.msk [vmem:[#allocation2 + $0x250] sm:$0xff] %vm327, 0.0
      %404 = vst.msk [vmem:[#allocation2 + $0x258] sm:$0x3] %vm329, 0.0
      %405 = vst.msk [vmem:[#allocation2 + $0x260] sm:$0xff] %vm327, 0.0
      %406 = vst.msk [vmem:[#allocation2 + $0x268] sm:$0x3] %vm329, 0.0
      %407 = vst.msk [vmem:[#allocation2 + $0x270] sm:$0xff] %vm327, 0.0
      %408 = vst.msk [vmem:[#allocation2 + $0x278] sm:$0x3] %vm329, 0.0
      %vm409 = vcmask 64512
      %410 = vst.msk [vmem:[#allocation3] sm:$0xff] %vm409, 0.0
      %vm411 = vcmask 58368
      %412 = vst.msk [vmem:[#allocation3 + $0x8] sm:$0x3] %vm411, 0.0
      %413 = vst.msk [vmem:[#allocation3 + $0x10] sm:$0xff] %vm409, 0.0
      %414 = vst.msk [vmem:[#allocation3 + $0x18] sm:$0x3] %vm411, 0.0
      %415 = vst.msk [vmem:[#allocation3 + $0x20] sm:$0xff] %vm409, 0.0
      %416 = vst.msk [vmem:[#allocation3 + $0x28] sm:$0x3] %vm411, 0.0
      %417 = vst.msk [vmem:[#allocation3 + $0x30] sm:$0xff] %vm409, 0.0
      %418 = vst.msk [vmem:[#allocation3 + $0x38] sm:$0x3] %vm411, 0.0
      %419 = vst.msk [vmem:[#allocation3 + $0x40] sm:$0xff] %vm409, 0.0
      %420 = vst.msk [vmem:[#allocation3 + $0x48] sm:$0x3] %vm411, 0.0
      %421 = vst.msk [vmem:[#allocation3 + $0x50] sm:$0xff] %vm409, 0.0
      %422 = vst.msk [vmem:[#allocation3 + $0x58] sm:$0x3] %vm411, 0.0
      %423 = vst.msk [vmem:[#allocation3 + $0x60] sm:$0xff] %vm409, 0.0
      %424 = vst.msk [vmem:[#allocation3 + $0x68] sm:$0x3] %vm411, 0.0
      %425 = vst.msk [vmem:[#allocation3 + $0x70] sm:$0xff] %vm409, 0.0
      %426 = vst.msk [vmem:[#allocation3 + $0x78] sm:$0x3] %vm411, 0.0
      %427 = vst.msk [vmem:[#allocation3 + $0x80] sm:$0xff] %vm409, 0.0
      %428 = vst.msk [vmem:[#allocation3 + $0x88] sm:$0x3] %vm411, 0.0
      %429 = vst.msk [vmem:[#allocation3 + $0x90] sm:$0xff] %vm409, 0.0
      %430 = vst.msk [vmem:[#allocation3 + $0x98] sm:$0x3] %vm411, 0.0
      %431 = vst.msk [vmem:[#allocation3 + $0xa0] sm:$0xff] %vm409, 0.0
      %432 = vst.msk [vmem:[#allocation3 + $0xa8] sm:$0x3] %vm411, 0.0
      %433 = vst.msk [vmem:[#allocation3 + $0xb0] sm:$0xff] %vm409, 0.0
      %434 = vst.msk [vmem:[#allocation3 + $0xb8] sm:$0x3] %vm411, 0.0
      %435 = vst.msk [vmem:[#allocation3 + $0xc0] sm:$0xff] %vm409, 0.0
      %436 = vst.msk [vmem:[#allocation3 + $0xc8] sm:$0x3] %vm411, 0.0
      %437 = vst.msk [vmem:[#allocation3 + $0xd0] sm:$0xff] %vm409, 0.0
      %438 = vst.msk [vmem:[#allocation3 + $0xd8] sm:$0x3] %vm411, 0.0
      %439 = vst.msk [vmem:[#allocation3 + $0xe0] sm:$0xff] %vm409, 0.0
      %440 = vst.msk [vmem:[#allocation3 + $0xe8] sm:$0x3] %vm411, 0.0
      %441 = vst.msk [vmem:[#allocation3 + $0xf0] sm:$0xff] %vm409, 0.0
      %442 = vst.msk [vmem:[#allocation3 + $0xf8] sm:$0x3] %vm411, 0.0
      %443 = vst.msk [vmem:[#allocation3 + $0x100] sm:$0xff] %vm409, 0.0
      %444 = vst.msk [vmem:[#allocation3 + $0x108] sm:$0x3] %vm411, 0.0
      %445 = vst.msk [vmem:[#allocation3 + $0x110] sm:$0xff] %vm409, 0.0
      %446 = vst.msk [vmem:[#allocation3 + $0x118] sm:$0x3] %vm411, 0.0
      %447 = vst.msk [vmem:[#allocation3 + $0x120] sm:$0xff] %vm409, 0.0
      %448 = vst.msk [vmem:[#allocation3 + $0x128] sm:$0x3] %vm411, 0.0
      %449 = vst.msk [vmem:[#allocation3 + $0x130] sm:$0xff] %vm409, 0.0
      %450 = vst.msk [vmem:[#allocation3 + $0x138] sm:$0x3] %vm411, 0.0
      %451 = vst.msk [vmem:[#allocation3 + $0x140] sm:$0xff] %vm409, 0.0
      %452 = vst.msk [vmem:[#allocation3 + $0x148] sm:$0x3] %vm411, 0.0
      %453 = vst.msk [vmem:[#allocation3 + $0x150] sm:$0xff] %vm409, 0.0
      %454 = vst.msk [vmem:[#allocation3 + $0x158] sm:$0x3] %vm411, 0.0
      %455 = vst.msk [vmem:[#allocation3 + $0x160] sm:$0xff] %vm409, 0.0
      %456 = vst.msk [vmem:[#allocation3 + $0x168] sm:$0x3] %vm411, 0.0
      %457 = vst.msk [vmem:[#allocation3 + $0x170] sm:$0xff] %vm409, 0.0
      %458 = vst.msk [vmem:[#allocation3 + $0x178] sm:$0x3] %vm411, 0.0
      %459 = vst.msk [vmem:[#allocation3 + $0x180] sm:$0xff] %vm409, 0.0
      %460 = vst.msk [vmem:[#allocation3 + $0x188] sm:$0x3] %vm411, 0.0
      %461 = vst.msk [vmem:[#allocation3 + $0x190] sm:$0xff] %vm409, 0.0
      %462 = vst.msk [vmem:[#allocation3 + $0x198] sm:$0x3] %vm411, 0.0
      %463 = vst.msk [vmem:[#allocation3 + $0x1a0] sm:$0xff] %vm409, 0.0
      %464 = vst.msk [vmem:[#allocation3 + $0x1a8] sm:$0x3] %vm411, 0.0
      %465 = vst.msk [vmem:[#allocation3 + $0x1b0] sm:$0xff] %vm409, 0.0
      %466 = vst.msk [vmem:[#allocation3 + $0x1b8] sm:$0x3] %vm411, 0.0
      %467 = vst.msk [vmem:[#allocation3 + $0x1c0] sm:$0xff] %vm409, 0.0
      %468 = vst.msk [vmem:[#allocation3 + $0x1c8] sm:$0x3] %vm411, 0.0
      %469 = vst.msk [vmem:[#allocation3 + $0x1d0] sm:$0xff] %vm409, 0.0
      %470 = vst.msk [vmem:[#allocation3 + $0x1d8] sm:$0x3] %vm411, 0.0
      %471 = vst.msk [vmem:[#allocation3 + $0x1e0] sm:$0xff] %vm409, 0.0
      %472 = vst.msk [vmem:[#allocation3 + $0x1e8] sm:$0x3] %vm411, 0.0
      %473 = vst.msk [vmem:[#allocation3 + $0x1f0] sm:$0xff] %vm409, 0.0
      %474 = vst.msk [vmem:[#allocation3 + $0x1f8] sm:$0x3] %vm411, 0.0
      %475 = vst.msk [vmem:[#allocation3 + $0x200] sm:$0xff] %vm409, 0.0
      %476 = vst.msk [vmem:[#allocation3 + $0x208] sm:$0x3] %vm411, 0.0
      %477 = vst.msk [vmem:[#allocation3 + $0x210] sm:$0xff] %vm409, 0.0
      %478 = vst.msk [vmem:[#allocation3 + $0x218] sm:$0x3] %vm411, 0.0
      %479 = vst.msk [vmem:[#allocation3 + $0x220] sm:$0xff] %vm409, 0.0
      %480 = vst.msk [vmem:[#allocation3 + $0x228] sm:$0x3] %vm411, 0.0
      %481 = vst.msk [vmem:[#allocation3 + $0x230] sm:$0xff] %vm409, 0.0
      %482 = vst.msk [vmem:[#allocation3 + $0x238] sm:$0x3] %vm411, 0.0
      %483 = vst.msk [vmem:[#allocation3 + $0x240] sm:$0xff] %vm409, 0.0
      %484 = vst.msk [vmem:[#allocation3 + $0x248] sm:$0x3] %vm411, 0.0
      %485 = vst.msk [vmem:[#allocation3 + $0x250] sm:$0xff] %vm409, 0.0
      %486 = vst.msk [vmem:[#allocation3 + $0x258] sm:$0x3] %vm411, 0.0
      %487 = vst.msk [vmem:[#allocation3 + $0x260] sm:$0xff] %vm409, 0.0
      %488 = vst.msk [vmem:[#allocation3 + $0x268] sm:$0x3] %vm411, 0.0
      %489 = vst.msk [vmem:[#allocation3 + $0x270] sm:$0xff] %vm409, 0.0
      %490 = vst.msk [vmem:[#allocation3 + $0x278] sm:$0x3] %vm411, 0.0
      %v491 = vld [vmem:[%s315] sm:$0xf]
      %v492 = vld [vmem:[%s315 + $0x4] sm:$0xf]
      %v493 = vld [vmem:[%s315 + $0x8] sm:$0xf]
      %v494 = vld [vmem:[%s315 + $0xc] sm:$0xf]
      %v495 = vld [vmem:[%s315 + $0x10] sm:$0xf]
      %v496 = vld [vmem:[%s315 + $0x14] sm:$0xf]
      %v497 = vld [vmem:[%s315 + $0x18] sm:$0xf]
      %v498 = vld [vmem:[%s315 + $0x1c] sm:$0xf]
      %v499 = vunpack.c.l.bf16 %v491
      %v500 = vunpack.c.l.bf16 %v492
      %v501 = vunpack.c.l.bf16 %v493
      %v502 = vunpack.c.l.bf16 %v494
      %v503 = vunpack.c.l.bf16 %v495
      %v504 = vunpack.c.l.bf16 %v496
      %v505 = vunpack.c.l.bf16 %v497
      %v506 = vunpack.c.l.bf16 %v498
      %v507 = vld [vmem:[%s320] sm:$0xf]
      %v508 = vld [vmem:[%s320 + $0x4] sm:$0xf]
      %v509 = vld [vmem:[%s320 + $0x8] sm:$0xf]
      %v510 = vld [vmem:[%s320 + $0xc] sm:$0xf]
      %v511 = vld [vmem:[%s320 + $0x10] sm:$0xf]
      %v512 = vld [vmem:[%s320 + $0x14] sm:$0xf]
      %v513 = vld [vmem:[%s320 + $0x18] sm:$0xf]
      %v514 = vld [vmem:[%s320 + $0x1c] sm:$0xf]
      %v515 = vld [vmem:[%s320 + $0x20] sm:$0xf]
      %v516 = vld [vmem:[%s320 + $0x24] sm:$0xf]
      %v517 = vld [vmem:[%s320 + $0x28] sm:$0xf]
      %v518 = vld [vmem:[%s320 + $0x2c] sm:$0xf]
      %v519 = vld [vmem:[%s320 + $0x30] sm:$0xf]
      %v520 = vld [vmem:[%s320 + $0x34] sm:$0xf]
      %v521 = vld [vmem:[%s320 + $0x38] sm:$0xf]
      %v522 = vld [vmem:[%s320 + $0x3c] sm:$0xf]
      %v523 = vld [vmem:[%s320 + $0x40] sm:$0xf]
      %v524 = vld [vmem:[%s320 + $0x44] sm:$0xf]
      %v525 = vld [vmem:[%s320 + $0x48] sm:$0xf]
      %v526 = vld [vmem:[%s320 + $0x4c] sm:$0xf]
      %v527 = vld [vmem:[%s320 + $0x50] sm:$0xf]
      %v528 = vld [vmem:[%s320 + $0x54] sm:$0xf]
      %v529 = vld [vmem:[%s320 + $0x58] sm:$0xf]
      %v530 = vld [vmem:[%s320 + $0x5c] sm:$0xf]
      %v531 = vld [vmem:[%s320 + $0x60] sm:$0xf]
      %v532 = vld [vmem:[%s320 + $0x64] sm:$0xf]
      %v533 = vld [vmem:[%s320 + $0x68] sm:$0xf]
      %v534 = vld [vmem:[%s320 + $0x6c] sm:$0xf]
      %v535 = vld [vmem:[%s320 + $0x70] sm:$0xf]
      %v536 = vld [vmem:[%s320 + $0x74] sm:$0xf]
      %v537 = vld [vmem:[%s320 + $0x78] sm:$0xf]
      %v538 = vld [vmem:[%s320 + $0x7c] sm:$0xf]
      %v539 = vld [vmem:[%s2] sm:$0xf]
      %v540 = vld [vmem:[%s3] sm:$0x1]
      %v542 = vlaneseq
      %v543 = vshrl.u32 %v542, 7
      %v544 = vsub.s32 0, %v543
      %v545 = vrot.slane %v540, %v544
      %v579 = vunpack.c.l.b16 %v507
      %v580 = vunpack.c.l.b16 %v508
      %v581 = vunpack.c.l.b16 %v509
      %v582 = vunpack.c.l.b16 %v510
      %v583 = vunpack.c.l.b16 %v511
      %v584 = vunpack.c.l.b16 %v512
      %v585 = vunpack.c.l.b16 %v513
      %v586 = vunpack.c.l.b16 %v514
      %v587 = vunpack.c.l.b16 %v515
      %v588 = vunpack.c.l.b16 %v516
      %v589 = vunpack.c.l.b16 %v517
      %v590 = vunpack.c.l.b16 %v518
      %v591 = vunpack.c.l.b16 %v519
      %v592 = vunpack.c.l.b16 %v520
      %v593 = vunpack.c.l.b16 %v521
      %v594 = vunpack.c.l.b16 %v522
      %v595 = vunpack.c.l.b16 %v523
      %v596 = vunpack.c.l.b16 %v524
      %v597 = vunpack.c.l.b16 %v525
      %v598 = vunpack.c.l.b16 %v526
      %v599 = vunpack.c.l.b16 %v527
      %v600 = vunpack.c.l.b16 %v528
      %v601 = vunpack.c.l.b16 %v529
      %v602 = vunpack.c.l.b16 %v530
      %v603 = vunpack.c.l.b16 %v531
      %v604 = vunpack.c.l.b16 %v532
      %v605 = vunpack.c.l.b16 %v533
      %v606 = vunpack.c.l.b16 %v534
      %v607 = vunpack.c.l.b16 %v535
      %v608 = vunpack.c.l.b16 %v536
      %v609 = vunpack.c.l.b16 %v537
      %v610 = vunpack.c.l.b16 %v538
      %v611 = vpack.c.b16 %v580, %v579
      %v612 = vpack.c.b16 %v582, %v581
      %v613 = vpack.c.b16 %v584, %v583
      %v614 = vpack.c.b16 %v586, %v585
      %v615 = vpack.c.b16 %v588, %v587
      %v616 = vpack.c.b16 %v590, %v589
      %v617 = vpack.c.b16 %v592, %v591
      %v618 = vpack.c.b16 %v594, %v593
      %v619 = vpack.c.b16 %v596, %v595
      %v620 = vpack.c.b16 %v598, %v597
      %v621 = vpack.c.b16 %v600, %v599
      %v622 = vpack.c.b16 %v602, %v601
      %v623 = vpack.c.b16 %v604, %v603
      %v624 = vpack.c.b16 %v606, %v605
      %v625 = vpack.c.b16 %v608, %v607
      %v626 = vpack.c.b16 %v610, %v609
      %v628 = vsel %vm409, %v611, 0
      %v631 = vsel %vm409, %v612, 0
      %v634 = vsel %vm409, %v613, 0
      %v637 = vsel %vm409, %v614, 0
      %v640 = vsel %vm409, %v615, 0
      %v643 = vsel %vm409, %v616, 0
      %v646 = vsel %vm409, %v617, 0
      %v649 = vsel %vm409, %v618, 0
      %v652 = vsel %vm409, %v619, 0
      %v655 = vsel %vm409, %v620, 0
      %v658 = vsel %vm409, %v621, 0
      %v661 = vsel %vm409, %v622, 0
      %v664 = vsel %vm409, %v623, 0
      %v667 = vsel %vm409, %v624, 0
      %v670 = vsel %vm409, %v625, 0
      %v673 = vsel %vm409, %v626, 0
      %vm675 = vcmask 1043456
      %v677 = vsel %vm675, %v539, 0
      %679 = vmatprep.subr.bf16.mxu0 0
      %680 = vmatpush1.bf16.msra.mxu0 %v677
      %681 = vmatprep.subr.bf16.mxu0 0
      %682 = vmatpush1.bf16.msra.mxu0 0
      %683 = vmatprep.subr.bf16.mxu0 0
      %684 = vmatpush1.bf16.msra.mxu0 0
      %685 = vmatprep.subr.bf16.mxu0 0
      %686 = vmatpush1.bf16.msra.mxu0 0
      %687 = vmatprep.subr.bf16.mxu0 0
      %688 = vmatpush1.bf16.msra.mxu0 0
      %689 = vmatprep.subr.bf16.mxu0 0
      %690 = vmatpush1.bf16.msra.mxu0 0
      %691 = vmatprep.subr.bf16.mxu0 0
      %692 = vmatpush1.bf16.msra.mxu0 0
      %693 = vmatprep.subr.bf16.mxu0 0
      %694 = vmatpush1.bf16.msra.mxu0 0
      %695 = vmatprep.subr.bf16.mxu0 0
      %696 = vmatpush1.bf16.msra.mxu0 0
      %697 = vmatprep.subr.bf16.mxu0 0
      %698 = vmatpush1.bf16.msra.mxu0 0
      %699 = vmatprep.subr.bf16.mxu0 0
      %700 = vmatpush1.bf16.msra.mxu0 0
      %701 = vmatprep.subr.bf16.mxu0 0
      %702 = vmatpush1.bf16.msra.mxu0 0
      %703 = vmatprep.subr.bf16.mxu0 0
      %704 = vmatpush1.bf16.msra.mxu0 0
      %705 = vmatprep.subr.bf16.mxu0 0
      %706 = vmatpush1.bf16.msra.mxu0 0
      %707 = vmatprep.subr.bf16.mxu0 0
      %708 = vmatpush1.bf16.msra.mxu0 0
      %709 = vmatprep.subr.bf16.mxu0 0
      %710 = vmatpush1.bf16.msra.mxu0 0
      %711 = vmatprep.mubr.bf16.mxu0 0
      %712 = vmatmul.mubr.bf16.gmra.mrb[0].mxu0 %v628
      %v713 = vpop.f32.mrb[0].mxu0
      %v714 = vadd.f32 %v545, %v713
      %v715 = vpop.f32.mrb[0].mxu0
      %v716 = vpop.f32.mrb[0].mxu0
      %v717 = vadd.f32 %v545, %v716
      %v718 = vpop.f32.mrb[0].mxu0
      %719 = vmatprep.mubr.bf16.mxu0 0
      %720 = vmatmul.mubr.bf16.gmra.mrb[0].mxu0 %v631
      %v721 = vpop.f32.mrb[0].mxu0
      %v722 = vadd.f32 %v545, %v721
      %v723 = vpop.f32.mrb[0].mxu0
      %v724 = vpop.f32.mrb[0].mxu0
      %v725 = vadd.f32 %v545, %v724
      %v726 = vpop.f32.mrb[0].mxu0
      %727 = vmatprep.mubr.bf16.mxu0 0
      %728 = vmatmul.mubr.bf16.gmra.mrb[0].mxu0 %v634
      %v729 = vpop.f32.mrb[0].mxu0
      %v730 = vadd.f32 %v545, %v729
      %v731 = vpop.f32.mrb[0].mxu0
      %v732 = vpop.f32.mrb[0].mxu0
      %v733 = vadd.f32 %v545, %v732
      %v734 = vpop.f32.mrb[0].mxu0
      %735 = vmatprep.mubr.bf16.mxu0 0
      %736 = vmatmul.mubr.bf16.gmra.mrb[0].mxu0 %v637
      %v737 = vpop.f32.mrb[0].mxu0
      %v738 = vadd.f32 %v545, %v737
      %v739 = vpop.f32.mrb[0].mxu0
      %v740 = vpop.f32.mrb[0].mxu0
      %v741 = vadd.f32 %v545, %v740
      %v742 = vpop.f32.mrb[0].mxu0
      %743 = vmatprep.mubr.bf16.mxu0 0
      %744 = vmatmul.mubr.bf16.gmra.mrb[0].mxu0 %v640
      %v745 = vpop.f32.mrb[0].mxu0
      %v746 = vadd.f32 %v545, %v745
      %v747 = vpop.f32.mrb[0].mxu0
      %v748 = vpop.f32.mrb[0].mxu0
      %v749 = vadd.f32 %v545, %v748
      %v750 = vpop.f32.mrb[0].mxu0
      %751 = vmatprep.mubr.bf16.mxu0 0
      %752 = vmatmul.mubr.bf16.gmra.mrb[0].mxu0 %v643
      %v753 = vpop.f32.mrb[0].mxu0
      %v754 = vadd.f32 %v545, %v753
      %v755 = vpop.f32.mrb[0].mxu0
      %v756 = vpop.f32.mrb[0].mxu0
      %v757 = vadd.f32 %v545, %v756
      %v758 = vpop.f32.mrb[0].mxu0
      %759 = vmatprep.mubr.bf16.mxu0 0
      %760 = vmatmul.mubr.bf16.gmra.mrb[0].mxu0 %v646
      %v761 = vpop.f32.mrb[0].mxu0
      %v762 = vadd.f32 %v545, %v761
      %v763 = vpop.f32.mrb[0].mxu0
      %v764 = vpop.f32.mrb[0].mxu0
      %v765 = vadd.f32 %v545, %v764
      %v766 = vpop.f32.mrb[0].mxu0
      %767 = vmatprep.mubr.bf16.mxu0 0
      %768 = vmatmul.mubr.bf16.gmra.mrb[0].mxu0 %v649
      %v769 = vpop.f32.mrb[0].mxu0
      %v770 = vadd.f32 %v545, %v769
      %v771 = vpop.f32.mrb[0].mxu0
      %v772 = vpop.f32.mrb[0].mxu0
      %v773 = vadd.f32 %v545, %v772
      %v774 = vpop.f32.mrb[0].mxu0
      %775 = vmatprep.mubr.bf16.mxu0 0
      %776 = vmatmul.mubr.bf16.gmra.mrb[0].mxu0 %v652
      %v777 = vpop.f32.mrb[0].mxu0
      %v778 = vadd.f32 %v545, %v777
      %v779 = vpop.f32.mrb[0].mxu0
      %v780 = vpop.f32.mrb[0].mxu0
      %v781 = vadd.f32 %v545, %v780
      %v782 = vpop.f32.mrb[0].mxu0
      %783 = vmatprep.mubr.bf16.mxu0 0
      %784 = vmatmul.mubr.bf16.gmra.mrb[0].mxu0 %v655
      %v785 = vpop.f32.mrb[0].mxu0
      %v786 = vadd.f32 %v545, %v785
      %v787 = vpop.f32.mrb[0].mxu0
      %v788 = vpop.f32.mrb[0].mxu0
      %v789 = vadd.f32 %v545, %v788
      %v790 = vpop.f32.mrb[0].mxu0
      %791 = vmatprep.mubr.bf16.mxu0 0
      %792 = vmatmul.mubr.bf16.gmra.mrb[0].mxu0 %v658
      %v793 = vpop.f32.mrb[0].mxu0
      %v794 = vadd.f32 %v545, %v793
      %v795 = vpop.f32.mrb[0].mxu0
      %v796 = vpop.f32.mrb[0].mxu0
      %v797 = vadd.f32 %v545, %v796
      %v798 = vpop.f32.mrb[0].mxu0
      %799 = vmatprep.mubr.bf16.mxu0 0
      %800 = vmatmul.mubr.bf16.gmra.mrb[0].mxu0 %v661
      %v801 = vpop.f32.mrb[0].mxu0
      %v802 = vadd.f32 %v545, %v801
      %v803 = vpop.f32.mrb[0].mxu0
      %v804 = vpop.f32.mrb[0].mxu0
      %v805 = vadd.f32 %v545, %v804
      %v806 = vpop.f32.mrb[0].mxu0
      %807 = vmatprep.mubr.bf16.mxu0 0
      %808 = vmatmul.mubr.bf16.gmra.mrb[0].mxu0 %v664
      %v809 = vpop.f32.mrb[0].mxu0
      %v810 = vadd.f32 %v545, %v809
      %v811 = vpop.f32.mrb[0].mxu0
      %v812 = vpop.f32.mrb[0].mxu0
      %v813 = vadd.f32 %v545, %v812
      %v814 = vpop.f32.mrb[0].mxu0
      %815 = vmatprep.mubr.bf16.mxu0 0
      %816 = vmatmul.mubr.bf16.gmra.mrb[0].mxu0 %v667
      %v817 = vpop.f32.mrb[0].mxu0
      %v818 = vadd.f32 %v545, %v817
      %v819 = vpop.f32.mrb[0].mxu0
      %v820 = vpop.f32.mrb[0].mxu0
      %v821 = vadd.f32 %v545, %v820
      %v822 = vpop.f32.mrb[0].mxu0
      %823 = vmatprep.mubr.bf16.mxu0 0
      %824 = vmatmul.mubr.bf16.gmra.mrb[0].mxu0 %v670
      %v825 = vpop.f32.mrb[0].mxu0
      %v826 = vadd.f32 %v545, %v825
      %v827 = vpop.f32.mrb[0].mxu0
      %v828 = vpop.f32.mrb[0].mxu0
      %v829 = vadd.f32 %v545, %v828
      %v830 = vpop.f32.mrb[0].mxu0
      %831 = vmatprep.mubr.bf16.mxu0 0
      %832 = vmatmul.mubr.bf16.gmra.mrb[0].mxu0 %v673
      %v833 = vpop.f32.mrb[0].mxu0
      %v834 = vadd.f32 %v545, %v833
      %v835 = vpop.f32.mrb[0].mxu0
      %v836 = vpop.f32.mrb[0].mxu0
      %v837 = vadd.f32 %v545, %v836
      %v838 = vpop.f32.mrb[0].mxu0
      %839 = vdwg.mxu0
      %v840 = vadd.f32 %v714, %v499
      %v841 = vadd.f32 %v717, %v500
      %v842 = vadd.f32 %v722, %v501
      %v843 = vadd.f32 %v725, %v502
      %v844 = vadd.f32 %v730, %v503
      %v845 = vadd.f32 %v733, %v504
      %v846 = vadd.f32 %v738, %v505
      %v847 = vadd.f32 %v741, %v506
      %v848 = vadd.f32 %v746, %v499
      %v849 = vadd.f32 %v749, %v500
      %v850 = vadd.f32 %v754, %v501
      %v851 = vadd.f32 %v757, %v502
      %v852 = vadd.f32 %v762, %v503
      %v853 = vadd.f32 %v765, %v504
      %v854 = vadd.f32 %v770, %v505
      %v855 = vadd.f32 %v773, %v506
      %v856 = vadd.f32 %v778, %v499
      %v857 = vadd.f32 %v781, %v500
      %v858 = vadd.f32 %v786, %v501
      %v859 = vadd.f32 %v789, %v502
      %v860 = vadd.f32 %v794, %v503
      %v861 = vadd.f32 %v797, %v504
      %v862 = vadd.f32 %v802, %v505
      %v863 = vadd.f32 %v805, %v506
      %v864 = vadd.f32 %v810, %v499
      %v865 = vadd.f32 %v813, %v500
      %v866 = vadd.f32 %v818, %v501
      %v867 = vadd.f32 %v821, %v502
      %v868 = vadd.f32 %v826, %v503
      %v869 = vadd.f32 %v829, %v504
      %v870 = vadd.f32 %v834, %v505
      %v871 = vadd.f32 %v837, %v506
      %s872 = scalar_lea.vmem [#allocation2], 16
      %873 = vst.msk [vmem:[%s872 + $0x1] sm:$0xff] %vm327, %v840
      %874 = vst.msk [vmem:[%s872 + $0x11] sm:$0xff] %vm327, %v841
      %875 = vst.msk [vmem:[%s872 + $0x21] sm:$0xff] %vm327, %v842
      %876 = vst.msk [vmem:[%s872 + $0x31] sm:$0xff] %vm327, %v843
      %877 = vst.msk [vmem:[%s872 + $0x41] sm:$0xff] %vm327, %v844
      %878 = vst.msk [vmem:[%s872 + $0x51] sm:$0xff] %vm327, %v845
      %879 = vst.msk [vmem:[%s872 + $0x61] sm:$0xff] %vm327, %v846
      %880 = vst.msk [vmem:[%s872 + $0x71] sm:$0xff] %vm327, %v847
      %s881 = scalar_lea.vmem [#allocation2], 176
      %882 = vst.msk [vmem:[%s881 + $0x1] sm:$0xff] %vm327, %v848
      %883 = vst.msk [vmem:[%s881 + $0x11] sm:$0xff] %vm327, %v849
      %884 = vst.msk [vmem:[%s881 + $0x21] sm:$0xff] %vm327, %v850
      %885 = vst.msk [vmem:[%s881 + $0x31] sm:$0xff] %vm327, %v851
      %886 = vst.msk [vmem:[%s881 + $0x41] sm:$0xff] %vm327, %v852
      %887 = vst.msk [vmem:[%s881 + $0x51] sm:$0xff] %vm327, %v853
      %888 = vst.msk [vmem:[%s881 + $0x61] sm:$0xff] %vm327, %v854
      %889 = vst.msk [vmem:[%s881 + $0x71] sm:$0xff] %vm327, %v855
      %s890 = scalar_lea.vmem [#allocation2], 336
      %891 = vst.msk [vmem:[%s890 + $0x1] sm:$0xff] %vm327, %v856
      %892 = vst.msk [vmem:[%s890 + $0x11] sm:$0xff] %vm327, %v857
      %893 = vst.msk [vmem:[%s890 + $0x21] sm:$0xff] %vm327, %v858
      %894 = vst.msk [vmem:[%s890 + $0x31] sm:$0xff] %vm327, %v859
      %895 = vst.msk [vmem:[%s890 + $0x41] sm:$0xff] %vm327, %v860
      %896 = vst.msk [vmem:[%s890 + $0x51] sm:$0xff] %vm327, %v861
      %897 = vst.msk [vmem:[%s890 + $0x61] sm:$0xff] %vm327, %v862
      %898 = vst.msk [vmem:[%s890 + $0x71] sm:$0xff] %vm327, %v863
      %s899 = scalar_lea.vmem [#allocation2], 496
      %900 = vst.msk [vmem:[%s899 + $0x1] sm:$0xff] %vm327, %v864
      %901 = vst.msk [vmem:[%s899 + $0x11] sm:$0xff] %vm327, %v865
      %902 = vst.msk [vmem:[%s899 + $0x21] sm:$0xff] %vm327, %v866
      %903 = vst.msk [vmem:[%s899 + $0x31] sm:$0xff] %vm327, %v867
      %904 = vst.msk [vmem:[%s899 + $0x41] sm:$0xff] %vm327, %v868
      %905 = vst.msk [vmem:[%s899 + $0x51] sm:$0xff] %vm327, %v869
      %906 = vst.msk [vmem:[%s899 + $0x61] sm:$0xff] %vm327, %v870
      %907 = vst.msk [vmem:[%s899 + $0x71] sm:$0xff] %vm327, %v871
      %v908 = vld [vmem:[%s4] sm:$0xf]
      %v909 = vld [vmem:[%s4 + $0x4] sm:$0xf]
      %v910 = vld [vmem:[%s4 + $0x8] sm:$0xf]
      %v911 = vld [vmem:[%s4 + $0xc] sm:$0xf]
      %v912 = vld [vmem:[%s4 + $0x10] sm:$0x3]
      %v913 = vld [vmem:[%s5] sm:$0x1]
      %s914 = scalar_lea.vmem [#allocation2], 480
      %v915 = vld [vmem:[%s914] sm:$0xff]
      %v916 = vld [vmem:[%s914 + $0x10] sm:$0xff]
      %v917 = vld [vmem:[%s914 + $0x20] sm:$0xff]
      %v918 = vld [vmem:[%s914 + $0x30] sm:$0xff]
      %v919 = vld [vmem:[%s914 + $0x40] sm:$0xff]
      %v920 = vld [vmem:[%s914 + $0x50] sm:$0xff]
      %v921 = vld [vmem:[%s914 + $0x60] sm:$0xff]
      %v922 = vld [vmem:[%s914 + $0x70] sm:$0xff]
      %s923 = scalar_lea.vmem [#allocation2], 320
      %v924 = vld [vmem:[%s923 + $0x1] sm:$0xff]
      %v925 = vld [vmem:[%s923 + $0x11] sm:$0xff]
      %v926 = vld [vmem:[%s923 + $0x21] sm:$0xff]
      %v927 = vld [vmem:[%s923 + $0x31] sm:$0xff]
      %v928 = vld [vmem:[%s923 + $0x41] sm:$0xff]
      %v929 = vld [vmem:[%s923 + $0x51] sm:$0xff]
      %v930 = vld [vmem:[%s923 + $0x61] sm:$0xff]
      %v931 = vld [vmem:[%s923 + $0x71] sm:$0xff]
      %v932 = vld [vmem:[%s914 + $0x1] sm:$0xff]
      %v933 = vld [vmem:[%s914 + $0x11] sm:$0xff]
      %v934 = vld [vmem:[%s914 + $0x21] sm:$0xff]
      %v935 = vld [vmem:[%s914 + $0x31] sm:$0xff]
      %v936 = vld [vmem:[%s914 + $0x41] sm:$0xff]
      %v937 = vld [vmem:[%s914 + $0x51] sm:$0xff]
      %v938 = vld [vmem:[%s914 + $0x61] sm:$0xff]
      %v939 = vld [vmem:[%s914 + $0x71] sm:$0xff]
      %v940 = vld [vmem:[%s881] sm:$0xff]
      %v941 = vld [vmem:[%s881 + $0x10] sm:$0xff]
      %v942 = vld [vmem:[%s881 + $0x20] sm:$0xff]
      %v943 = vld [vmem:[%s881 + $0x30] sm:$0xff]
      %v944 = vld [vmem:[%s881 + $0x40] sm:$0xff]
      %v945 = vld [vmem:[%s881 + $0x50] sm:$0xff]
      %v946 = vld [vmem:[%s881 + $0x60] sm:$0xff]
      %v947 = vld [vmem:[%s881 + $0x70] sm:$0xff]
      %v948 = vld [vmem:[%s872 + $0x1] sm:$0xff]
      %v949 = vld [vmem:[%s872 + $0x11] sm:$0xff]
      %v950 = vld [vmem:[%s872 + $0x21] sm:$0xff]
      %v951 = vld [vmem:[%s872 + $0x31] sm:$0xff]
      %v952 = vld [vmem:[%s872 + $0x41] sm:$0xff]
      %v953 = vld [vmem:[%s872 + $0x51] sm:$0xff]
      %v954 = vld [vmem:[%s872 + $0x61] sm:$0xff]
      %v955 = vld [vmem:[%s872 + $0x71] sm:$0xff]
      %v956 = vld [vmem:[%s881 + $0x1] sm:$0xff]
      %v957 = vld [vmem:[%s881 + $0x11] sm:$0xff]
      %v958 = vld [vmem:[%s881 + $0x21] sm:$0xff]
      %v959 = vld [vmem:[%s881 + $0x31] sm:$0xff]
      %v960 = vld [vmem:[%s881 + $0x41] sm:$0xff]
      %v961 = vld [vmem:[%s881 + $0x51] sm:$0xff]
      %v962 = vld [vmem:[%s881 + $0x61] sm:$0xff]
      %v963 = vld [vmem:[%s881 + $0x71] sm:$0xff]
      %v964 = vld [vmem:[%s899] sm:$0xff]
      %v965 = vld [vmem:[%s899 + $0x10] sm:$0xff]
      %v966 = vld [vmem:[%s899 + $0x20] sm:$0xff]
      %v967 = vld [vmem:[%s899 + $0x30] sm:$0xff]
      %v968 = vld [vmem:[%s899 + $0x40] sm:$0xff]
      %v969 = vld [vmem:[%s899 + $0x50] sm:$0xff]
      %v970 = vld [vmem:[%s899 + $0x60] sm:$0xff]
      %v971 = vld [vmem:[%s899 + $0x70] sm:$0xff]
      %v972 = vld [vmem:[%s890 + $0x1] sm:$0xff]
      %v973 = vld [vmem:[%s890 + $0x11] sm:$0xff]
      %v974 = vld [vmem:[%s890 + $0x21] sm:$0xff]
      %v975 = vld [vmem:[%s890 + $0x31] sm:$0xff]
      %v976 = vld [vmem:[%s890 + $0x41] sm:$0xff]
      %v977 = vld [vmem:[%s890 + $0x51] sm:$0xff]
      %v978 = vld [vmem:[%s890 + $0x61] sm:$0xff]
      %v979 = vld [vmem:[%s890 + $0x71] sm:$0xff]
      %v980 = vld [vmem:[%s899 + $0x1] sm:$0xff]
      %v981 = vld [vmem:[%s899 + $0x11] sm:$0xff]
      %v982 = vld [vmem:[%s899 + $0x21] sm:$0xff]
      %v983 = vld [vmem:[%s899 + $0x31] sm:$0xff]
      %v984 = vld [vmem:[%s899 + $0x41] sm:$0xff]
      %v985 = vld [vmem:[%s899 + $0x51] sm:$0xff]
      %v986 = vld [vmem:[%s899 + $0x61] sm:$0xff]
      %v987 = vld [vmem:[%s899 + $0x71] sm:$0xff]
      %996 = vrot.lane.b32.xlu0 %v924, 4
      %v997 = vpop.permute.xlu0 %996
      %998 = vrot.lane.b32.xlu0 %v925, 4
      %v999 = vpop.permute.xlu0 %998
      %1000 = vrot.lane.b32.xlu0 %v926, 4
      %v1001 = vpop.permute.xlu0 %1000
      %1002 = vrot.lane.b32.xlu0 %v927, 4
      %v1003 = vpop.permute.xlu0 %1002
      %1004 = vrot.lane.b32.xlu0 %v928, 4
      %v1005 = vpop.permute.xlu0 %1004
      %1006 = vrot.lane.b32.xlu0 %v929, 4
      %v1007 = vpop.permute.xlu0 %1006
      %1008 = vrot.lane.b32.xlu0 %v930, 4
      %v1009 = vpop.permute.xlu0 %1008
      %1010 = vrot.lane.b32.xlu0 %v931, 4
      %v1011 = vpop.permute.xlu0 %1010
      %1028 = vrot.lane.b32.xlu0 %v932, 8
      %v1029 = vpop.permute.xlu0 %1028
      %1030 = vrot.lane.b32.xlu0 %v933, 8
      %v1031 = vpop.permute.xlu0 %1030
      %1032 = vrot.lane.b32.xlu0 %v934, 8
      %v1033 = vpop.permute.xlu0 %1032
      %1034 = vrot.lane.b32.xlu0 %v935, 8
      %v1035 = vpop.permute.xlu0 %1034
      %1036 = vrot.lane.b32.xlu0 %v936, 8
      %v1037 = vpop.permute.xlu0 %1036
      %1038 = vrot.lane.b32.xlu0 %v937, 8
      %v1039 = vpop.permute.xlu0 %1038
      %1040 = vrot.lane.b32.xlu0 %v938, 8
      %v1041 = vpop.permute.xlu0 %1040
      %1042 = vrot.lane.b32.xlu0 %v939, 8
      %v1043 = vpop.permute.xlu0 %1042
      %1060 = vrot.lane.b32.xlu0 %v940, 12
      %v1061 = vpop.permute.xlu0 %1060
      %1062 = vrot.lane.b32.xlu0 %v941, 12
      %v1063 = vpop.permute.xlu0 %1062
      %1064 = vrot.lane.b32.xlu0 %v942, 12
      %v1065 = vpop.permute.xlu0 %1064
      %1066 = vrot.lane.b32.xlu0 %v943, 12
      %v1067 = vpop.permute.xlu0 %1066
      %1068 = vrot.lane.b32.xlu0 %v944, 12
      %v1069 = vpop.permute.xlu0 %1068
      %1070 = vrot.lane.b32.xlu0 %v945, 12
      %v1071 = vpop.permute.xlu0 %1070
      %1072 = vrot.lane.b32.xlu0 %v946, 12
      %v1073 = vpop.permute.xlu0 %1072
      %1074 = vrot.lane.b32.xlu0 %v947, 12
      %v1075 = vpop.permute.xlu0 %1074
      %1092 = vrot.lane.b32.xlu0 %v948, 16
      %v1093 = vpop.permute.xlu0 %1092
      %1094 = vrot.lane.b32.xlu0 %v949, 16
      %v1095 = vpop.permute.xlu0 %1094
      %1096 = vrot.lane.b32.xlu0 %v950, 16
      %v1097 = vpop.permute.xlu0 %1096
      %1098 = vrot.lane.b32.xlu0 %v951, 16
      %v1099 = vpop.permute.xlu0 %1098
      %1100 = vrot.lane.b32.xlu0 %v952, 16
      %v1101 = vpop.permute.xlu0 %1100
      %1102 = vrot.lane.b32.xlu0 %v953, 16
      %v1103 = vpop.permute.xlu0 %1102
      %1104 = vrot.lane.b32.xlu0 %v954, 16
      %v1105 = vpop.permute.xlu0 %1104
      %1106 = vrot.lane.b32.xlu0 %v955, 16
      %v1107 = vpop.permute.xlu0 %1106
      %1124 = vrot.lane.b32.xlu0 %v956, 20
      %v1125 = vpop.permute.xlu0 %1124
      %1126 = vrot.lane.b32.xlu0 %v957, 20
      %v1127 = vpop.permute.xlu0 %1126
      %1128 = vrot.lane.b32.xlu0 %v958, 20
      %v1129 = vpop.permute.xlu0 %1128
      %1130 = vrot.lane.b32.xlu0 %v959, 20
      %v1131 = vpop.permute.xlu0 %1130
      %1132 = vrot.lane.b32.xlu0 %v960, 20
      %v1133 = vpop.permute.xlu0 %1132
      %1134 = vrot.lane.b32.xlu0 %v961, 20
      %v1135 = vpop.permute.xlu0 %1134
      %1136 = vrot.lane.b32.xlu0 %v962, 20
      %v1137 = vpop.permute.xlu0 %1136
      %1138 = vrot.lane.b32.xlu0 %v963, 20
      %v1139 = vpop.permute.xlu0 %1138
      %1156 = vrot.lane.b32.xlu0 %v964, 24
      %v1157 = vpop.permute.xlu0 %1156
      %1158 = vrot.lane.b32.xlu0 %v965, 24
      %v1159 = vpop.permute.xlu0 %1158
      %1160 = vrot.lane.b32.xlu0 %v966, 24
      %v1161 = vpop.permute.xlu0 %1160
      %1162 = vrot.lane.b32.xlu0 %v967, 24
      %v1163 = vpop.permute.xlu0 %1162
      %1164 = vrot.lane.b32.xlu0 %v968, 24
      %v1165 = vpop.permute.xlu0 %1164
      %1166 = vrot.lane.b32.xlu0 %v969, 24
      %v1167 = vpop.permute.xlu0 %1166
      %1168 = vrot.lane.b32.xlu0 %v970, 24
      %v1169 = vpop.permute.xlu0 %1168
      %1170 = vrot.lane.b32.xlu0 %v971, 24
      %v1171 = vpop.permute.xlu0 %1170
      %1188 = vrot.lane.b32.xlu0 %v972, 28
      %v1189 = vpop.permute.xlu0 %1188
      %1190 = vrot.lane.b32.xlu0 %v973, 28
      %v1191 = vpop.permute.xlu0 %1190
      %1192 = vrot.lane.b32.xlu0 %v974, 28
      %v1193 = vpop.permute.xlu0 %1192
      %1194 = vrot.lane.b32.xlu0 %v975, 28
      %v1195 = vpop.permute.xlu0 %1194
      %1196 = vrot.lane.b32.xlu0 %v976, 28
      %v1197 = vpop.permute.xlu0 %1196
      %1198 = vrot.lane.b32.xlu0 %v977, 28
      %v1199 = vpop.permute.xlu0 %1198
      %1200 = vrot.lane.b32.xlu0 %v978, 28
      %v1201 = vpop.permute.xlu0 %1200
      %1202 = vrot.lane.b32.xlu0 %v979, 28
      %v1203 = vpop.permute.xlu0 %1202
      %1220 = vrot.lane.b32.xlu0 %v980, 32
      %v1221 = vpop.permute.xlu0 %1220
      %1222 = vrot.lane.b32.xlu0 %v981, 32
      %v1223 = vpop.permute.xlu0 %1222
      %1224 = vrot.lane.b32.xlu0 %v982, 32
      %v1225 = vpop.permute.xlu0 %1224
      %1226 = vrot.lane.b32.xlu0 %v983, 32
      %v1227 = vpop.permute.xlu0 %1226
      %1228 = vrot.lane.b32.xlu0 %v984, 32
      %v1229 = vpop.permute.xlu0 %1228
      %1230 = vrot.lane.b32.xlu0 %v985, 32
      %v1231 = vpop.permute.xlu0 %1230
      %1232 = vrot.lane.b32.xlu0 %v986, 32
      %v1233 = vpop.permute.xlu0 %1232
      %1234 = vrot.lane.b32.xlu0 %v987, 32
      %v1235 = vpop.permute.xlu0 %1234
      %v1244 = vsel %vm327, %v915, %v997
      %v1245 = vsel %vm327, %v916, %v999
      %v1246 = vsel %vm327, %v917, %v1001
      %v1247 = vsel %vm327, %v918, %v1003
      %v1248 = vsel %vm327, %v919, %v1005
      %v1249 = vsel %vm327, %v920, %v1007
      %v1250 = vsel %vm327, %v921, %v1009
      %v1251 = vsel %vm327, %v922, %v1011
      %v1252 = vsel %vm409, %v1244, %v1029
      %v1253 = vsel %vm409, %v1245, %v1031
      %v1254 = vsel %vm409, %v1246, %v1033
      %v1255 = vsel %vm409, %v1247, %v1035
      %v1256 = vsel %vm409, %v1248, %v1037
      %v1257 = vsel %vm409, %v1249, %v1039
      %v1258 = vsel %vm409, %v1250, %v1041
      %v1259 = vsel %vm409, %v1251, %v1043
      %vm1260 = vcmask 97280
      %v1261 = vsel %vm1260, %v1252, %v1061
      %v1262 = vsel %vm1260, %v1253, %v1063
      %v1263 = vsel %vm1260, %v1254, %v1065
      %v1264 = vsel %vm1260, %v1255, %v1067
      %v1265 = vsel %vm1260, %v1256, %v1069
      %v1266 = vsel %vm1260, %v1257, %v1071
      %v1267 = vsel %vm1260, %v1258, %v1073
      %v1268 = vsel %vm1260, %v1259, %v1075
      %vm1269 = vcmask 130048
      %v1270 = vsel %vm1269, %v1261, %v1093
      %v1271 = vsel %vm1269, %v1262, %v1095
      %v1272 = vsel %vm1269, %v1263, %v1097
      %v1273 = vsel %vm1269, %v1264, %v1099
      %v1274 = vsel %vm1269, %v1265, %v1101
      %v1275 = vsel %vm1269, %v1266, %v1103
      %v1276 = vsel %vm1269, %v1267, %v1105
      %v1277 = vsel %vm1269, %v1268, %v1107
      %vm1278 = vcmask 162816
      %v1279 = vsel %vm1278, %v1270, %v1125
      %v1280 = vsel %vm1278, %v1271, %v1127
      %v1281 = vsel %vm1278, %v1272, %v1129
      %v1282 = vsel %vm1278, %v1273, %v1131
      %v1283 = vsel %vm1278, %v1274, %v1133
      %v1284 = vsel %vm1278, %v1275, %v1135
      %v1285 = vsel %vm1278, %v1276, %v1137
      %v1286 = vsel %vm1278, %v1277, %v1139
      %vm1287 = vcmask 195584
      %v1288 = vsel %vm1287, %v1279, %v1157
      %v1289 = vsel %vm1287, %v1280, %v1159
      %v1290 = vsel %vm1287, %v1281, %v1161
      %v1291 = vsel %vm1287, %v1282, %v1163
      %v1292 = vsel %vm1287, %v1283, %v1165
      %v1293 = vsel %vm1287, %v1284, %v1167
      %v1294 = vsel %vm1287, %v1285, %v1169
      %v1295 = vsel %vm1287, %v1286, %v1171
      %vm1296 = vcmask 228352
      %v1297 = vsel %vm1296, %v1288, %v1189
      %v1298 = vsel %vm1296, %v1289, %v1191
      %v1299 = vsel %vm1296, %v1290, %v1193
      %v1300 = vsel %vm1296, %v1291, %v1195
      %v1301 = vsel %vm1296, %v1292, %v1197
      %v1302 = vsel %vm1296, %v1293, %v1199
      %v1303 = vsel %vm1296, %v1294, %v1201
      %v1304 = vsel %vm1296, %v1295, %v1203
      %vm1305 = vcmask 261120
      %v1306 = vsel %vm1305, %v1297, %v1221
      %v1307 = vsel %vm1305, %v1298, %v1223
      %v1308 = vsel %vm1305, %v1299, %v1225
      %v1309 = vsel %vm1305, %v1300, %v1227
      %v1310 = vsel %vm1305, %v1301, %v1229
      %v1311 = vsel %vm1305, %v1302, %v1231
      %v1312 = vsel %vm1305, %v1303, %v1233
      %v1313 = vsel %vm1305, %v1304, %v1235
      %v1314 = vld [vmem:[%s923 + $0x2] sm:$0xff]
      %v1315 = vld [vmem:[%s923 + $0x12] sm:$0xff]
      %v1316 = vld [vmem:[%s923 + $0x22] sm:$0xff]
      %v1317 = vld [vmem:[%s923 + $0x32] sm:$0xff]
      %v1318 = vld [vmem:[%s923 + $0x42] sm:$0xff]
      %v1319 = vld [vmem:[%s923 + $0x52] sm:$0xff]
      %v1320 = vld [vmem:[%s923 + $0x62] sm:$0xff]
      %v1321 = vld [vmem:[%s923 + $0x72] sm:$0xff]
      %v1322 = vld [vmem:[%s872 + $0x2] sm:$0xff]
      %v1323 = vld [vmem:[%s872 + $0x12] sm:$0xff]
      %v1324 = vld [vmem:[%s872 + $0x22] sm:$0xff]
      %v1325 = vld [vmem:[%s872 + $0x32] sm:$0xff]
      %v1326 = vld [vmem:[%s872 + $0x42] sm:$0xff]
      %v1327 = vld [vmem:[%s872 + $0x52] sm:$0xff]
      %v1328 = vld [vmem:[%s872 + $0x62] sm:$0xff]
      %v1329 = vld [vmem:[%s872 + $0x72] sm:$0xff]
      %v1330 = vld [vmem:[%s890 + $0x2] sm:$0xff]
      %v1331 = vld [vmem:[%s890 + $0x12] sm:$0xff]
      %v1332 = vld [vmem:[%s890 + $0x22] sm:$0xff]
      %v1333 = vld [vmem:[%s890 + $0x32] sm:$0xff]
      %v1334 = vld [vmem:[%s890 + $0x42] sm:$0xff]
      %v1335 = vld [vmem:[%s890 + $0x52] sm:$0xff]
      %v1336 = vld [vmem:[%s890 + $0x62] sm:$0xff]
      %v1337 = vld [vmem:[%s890 + $0x72] sm:$0xff]
      %1338 = vrot.lane.b32.xlu0 %v932, 4
      %v1339 = vpop.permute.xlu0 %1338
      %1340 = vrot.lane.b32.xlu0 %v933, 4
      %v1341 = vpop.permute.xlu0 %1340
      %1342 = vrot.lane.b32.xlu0 %v934, 4
      %v1343 = vpop.permute.xlu0 %1342
      %1344 = vrot.lane.b32.xlu0 %v935, 4
      %v1345 = vpop.permute.xlu0 %1344
      %1346 = vrot.lane.b32.xlu0 %v936, 4
      %v1347 = vpop.permute.xlu0 %1346
      %1348 = vrot.lane.b32.xlu0 %v937, 4
      %v1349 = vpop.permute.xlu0 %1348
      %1350 = vrot.lane.b32.xlu0 %v938, 4
      %v1351 = vpop.permute.xlu0 %1350
      %1352 = vrot.lane.b32.xlu0 %v939, 4
      %v1353 = vpop.permute.xlu0 %1352
      %1370 = vrot.lane.b32.xlu0 %v1314, 8
      %v1371 = vpop.permute.xlu0 %1370
      %1372 = vrot.lane.b32.xlu0 %v1315, 8
      %v1373 = vpop.permute.xlu0 %1372
      %1374 = vrot.lane.b32.xlu0 %v1316, 8
      %v1375 = vpop.permute.xlu0 %1374
      %1376 = vrot.lane.b32.xlu0 %v1317, 8
      %v1377 = vpop.permute.xlu0 %1376
      %1378 = vrot.lane.b32.xlu0 %v1318, 8
      %v1379 = vpop.permute.xlu0 %1378
      %1380 = vrot.lane.b32.xlu0 %v1319, 8
      %v1381 = vpop.permute.xlu0 %1380
      %1382 = vrot.lane.b32.xlu0 %v1320, 8
      %v1383 = vpop.permute.xlu0 %1382
      %1384 = vrot.lane.b32.xlu0 %v1321, 8
      %v1385 = vpop.permute.xlu0 %1384
      %1394 = vrot.lane.b32.xlu0 %v948, 12
      %v1395 = vpop.permute.xlu0 %1394
      %1396 = vrot.lane.b32.xlu0 %v949, 12
      %v1397 = vpop.permute.xlu0 %1396
      %1398 = vrot.lane.b32.xlu0 %v950, 12
      %v1399 = vpop.permute.xlu0 %1398
      %1400 = vrot.lane.b32.xlu0 %v951, 12
      %v1401 = vpop.permute.xlu0 %1400
      %1402 = vrot.lane.b32.xlu0 %v952, 12
      %v1403 = vpop.permute.xlu0 %1402
      %1404 = vrot.lane.b32.xlu0 %v953, 12
      %v1405 = vpop.permute.xlu0 %1404
      %1406 = vrot.lane.b32.xlu0 %v954, 12
      %v1407 = vpop.permute.xlu0 %1406
      %1408 = vrot.lane.b32.xlu0 %v955, 12
      %v1409 = vpop.permute.xlu0 %1408
      %1418 = vrot.lane.b32.xlu0 %v956, 16
      %v1419 = vpop.permute.xlu0 %1418
      %1420 = vrot.lane.b32.xlu0 %v957, 16
      %v1421 = vpop.permute.xlu0 %1420
      %1422 = vrot.lane.b32.xlu0 %v958, 16
      %v1423 = vpop.permute.xlu0 %1422
      %1424 = vrot.lane.b32.xlu0 %v959, 16
      %v1425 = vpop.permute.xlu0 %1424
      %1426 = vrot.lane.b32.xlu0 %v960, 16
      %v1427 = vpop.permute.xlu0 %1426
      %1428 = vrot.lane.b32.xlu0 %v961, 16
      %v1429 = vpop.permute.xlu0 %1428
      %1430 = vrot.lane.b32.xlu0 %v962, 16
      %v1431 = vpop.permute.xlu0 %1430
      %1432 = vrot.lane.b32.xlu0 %v963, 16
      %v1433 = vpop.permute.xlu0 %1432
      %1450 = vrot.lane.b32.xlu0 %v1322, 20
      %v1451 = vpop.permute.xlu0 %1450
      %1452 = vrot.lane.b32.xlu0 %v1323, 20
      %v1453 = vpop.permute.xlu0 %1452
      %1454 = vrot.lane.b32.xlu0 %v1324, 20
      %v1455 = vpop.permute.xlu0 %1454
      %1456 = vrot.lane.b32.xlu0 %v1325, 20
      %v1457 = vpop.permute.xlu0 %1456
      %1458 = vrot.lane.b32.xlu0 %v1326, 20
      %v1459 = vpop.permute.xlu0 %1458
      %1460 = vrot.lane.b32.xlu0 %v1327, 20
      %v1461 = vpop.permute.xlu0 %1460
      %1462 = vrot.lane.b32.xlu0 %v1328, 20
      %v1463 = vpop.permute.xlu0 %1462
      %1464 = vrot.lane.b32.xlu0 %v1329, 20
      %v1465 = vpop.permute.xlu0 %1464
      %1474 = vrot.lane.b32.xlu0 %v972, 24
      %v1475 = vpop.permute.xlu0 %1474
      %1476 = vrot.lane.b32.xlu0 %v973, 24
      %v1477 = vpop.permute.xlu0 %1476
      %1478 = vrot.lane.b32.xlu0 %v974, 24
      %v1479 = vpop.permute.xlu0 %1478
      %1480 = vrot.lane.b32.xlu0 %v975, 24
      %v1481 = vpop.permute.xlu0 %1480
      %1482 = vrot.lane.b32.xlu0 %v976, 24
      %v1483 = vpop.permute.xlu0 %1482
      %1484 = vrot.lane.b32.xlu0 %v977, 24
      %v1485 = vpop.permute.xlu0 %1484
      %1486 = vrot.lane.b32.xlu0 %v978, 24
      %v1487 = vpop.permute.xlu0 %1486
      %1488 = vrot.lane.b32.xlu0 %v979, 24
      %v1489 = vpop.permute.xlu0 %1488
      %1498 = vrot.lane.b32.xlu0 %v980, 28
      %v1499 = vpop.permute.xlu0 %1498
      %1500 = vrot.lane.b32.xlu0 %v981, 28
      %v1501 = vpop.permute.xlu0 %1500
      %1502 = vrot.lane.b32.xlu0 %v982, 28
      %v1503 = vpop.permute.xlu0 %1502
      %1504 = vrot.lane.b32.xlu0 %v983, 28
      %v1505 = vpop.permute.xlu0 %1504
      %1506 = vrot.lane.b32.xlu0 %v984, 28
      %v1507 = vpop.permute.xlu0 %1506
      %1508 = vrot.lane.b32.xlu0 %v985, 28
      %v1509 = vpop.permute.xlu0 %1508
      %1510 = vrot.lane.b32.xlu0 %v986, 28
      %v1511 = vpop.permute.xlu0 %1510
      %1512 = vrot.lane.b32.xlu0 %v987, 28
      %v1513 = vpop.permute.xlu0 %1512
      %1530 = vrot.lane.b32.xlu0 %v1330, 32
      %v1531 = vpop.permute.xlu0 %1530
      %1532 = vrot.lane.b32.xlu0 %v1331, 32
      %v1533 = vpop.permute.xlu0 %1532
      %1534 = vrot.lane.b32.xlu0 %v1332, 32
      %v1535 = vpop.permute.xlu0 %1534
      %1536 = vrot.lane.b32.xlu0 %v1333, 32
      %v1537 = vpop.permute.xlu0 %1536
      %1538 = vrot.lane.b32.xlu0 %v1334, 32
      %v1539 = vpop.permute.xlu0 %1538
      %1540 = vrot.lane.b32.xlu0 %v1335, 32
      %v1541 = vpop.permute.xlu0 %1540
      %1542 = vrot.lane.b32.xlu0 %v1336, 32
      %v1543 = vpop.permute.xlu0 %1542
      %1544 = vrot.lane.b32.xlu0 %v1337, 32
      %v1545 = vpop.permute.xlu0 %1544
      %v1554 = vsel %vm327, %v924, %v1339
      %v1555 = vsel %vm327, %v925, %v1341
      %v1556 = vsel %vm327, %v926, %v1343
      %v1557 = vsel %vm327, %v927, %v1345
      %v1558 = vsel %vm327, %v928, %v1347
      %v1559 = vsel %vm327, %v929, %v1349
      %v1560 = vsel %vm327, %v930, %v1351
      %v1561 = vsel %vm327, %v931, %v1353
      %v1562 = vsel %vm409, %v1554, %v1371
      %v1563 = vsel %vm409, %v1555, %v1373
      %v1564 = vsel %vm409, %v1556, %v1375
      %v1565 = vsel %vm409, %v1557, %v1377
      %v1566 = vsel %vm409, %v1558, %v1379
      %v1567 = vsel %vm409, %v1559, %v1381
      %v1568 = vsel %vm409, %v1560, %v1383
      %v1569 = vsel %vm409, %v1561, %v1385
      %v1570 = vsel %vm1260, %v1562, %v1395
      %v1571 = vsel %vm1260, %v1563, %v1397
      %v1572 = vsel %vm1260, %v1564, %v1399
      %v1573 = vsel %vm1260, %v1565, %v1401
      %v1574 = vsel %vm1260, %v1566, %v1403
      %v1575 = vsel %vm1260, %v1567, %v1405
      %v1576 = vsel %vm1260, %v1568, %v1407
      %v1577 = vsel %vm1260, %v1569, %v1409
      %v1578 = vsel %vm1269, %v1570, %v1419
      %v1579 = vsel %vm1269, %v1571, %v1421
      %v1580 = vsel %vm1269, %v1572, %v1423
      %v1581 = vsel %vm1269, %v1573, %v1425
      %v1582 = vsel %vm1269, %v1574, %v1427
      %v1583 = vsel %vm1269, %v1575, %v1429
      %v1584 = vsel %vm1269, %v1576, %v1431
      %v1585 = vsel %vm1269, %v1577, %v1433
      %v1586 = vsel %vm1278, %v1578, %v1451
      %v1587 = vsel %vm1278, %v1579, %v1453
      %v1588 = vsel %vm1278, %v1580, %v1455
      %v1589 = vsel %vm1278, %v1581, %v1457
      %v1590 = vsel %vm1278, %v1582, %v1459
      %v1591 = vsel %vm1278, %v1583, %v1461
      %v1592 = vsel %vm1278, %v1584, %v1463
      %v1593 = vsel %vm1278, %v1585, %v1465
      %v1594 = vsel %vm1287, %v1586, %v1475
      %v1595 = vsel %vm1287, %v1587, %v1477
      %v1596 = vsel %vm1287, %v1588, %v1479
      %v1597 = vsel %vm1287, %v1589, %v1481
      %v1598 = vsel %vm1287, %v1590, %v1483
      %v1599 = vsel %vm1287, %v1591, %v1485
      %v1600 = vsel %vm1287, %v1592, %v1487
      %v1601 = vsel %vm1287, %v1593, %v1489
      %v1602 = vsel %vm1296, %v1594, %v1499
      %v1603 = vsel %vm1296, %v1595, %v1501
      %v1604 = vsel %vm1296, %v1596, %v1503
      %v1605 = vsel %vm1296, %v1597, %v1505
      %v1606 = vsel %vm1296, %v1598, %v1507
      %v1607 = vsel %vm1296, %v1599, %v1509
      %v1608 = vsel %vm1296, %v1600, %v1511
      %v1609 = vsel %vm1296, %v1601, %v1513
      %v1610 = vsel %vm1305, %v1602, %v1531
      %v1611 = vsel %vm1305, %v1603, %v1533
      %v1612 = vsel %vm1305, %v1604, %v1535
      %v1613 = vsel %vm1305, %v1605, %v1537
      %v1614 = vsel %vm1305, %v1606, %v1539
      %v1615 = vsel %vm1305, %v1607, %v1541
      %v1616 = vsel %vm1305, %v1608, %v1543
      %v1617 = vsel %vm1305, %v1609, %v1545
      %s1618 = scalar_lea.vmem [#allocation2], 192
      %v1619 = vld [vmem:[%s1618] sm:$0xff]
      %v1620 = vld [vmem:[%s1618 + $0x10] sm:$0xff]
      %v1621 = vld [vmem:[%s1618 + $0x20] sm:$0xff]
      %v1622 = vld [vmem:[%s1618 + $0x30] sm:$0xff]
      %v1623 = vld [vmem:[%s1618 + $0x40] sm:$0xff]
      %v1624 = vld [vmem:[%s1618 + $0x50] sm:$0xff]
      %v1625 = vld [vmem:[%s1618 + $0x60] sm:$0xff]
      %v1626 = vld [vmem:[%s1618 + $0x70] sm:$0xff]
      %s1627 = scalar_lea.vmem [#allocation2], 32
      %v1628 = vld [vmem:[%s1627 + $0x1] sm:$0xff]
      %v1629 = vld [vmem:[%s1627 + $0x11] sm:$0xff]
      %v1630 = vld [vmem:[%s1627 + $0x21] sm:$0xff]
      %v1631 = vld [vmem:[%s1627 + $0x31] sm:$0xff]
      %v1632 = vld [vmem:[%s1627 + $0x41] sm:$0xff]
      %v1633 = vld [vmem:[%s1627 + $0x51] sm:$0xff]
      %v1634 = vld [vmem:[%s1627 + $0x61] sm:$0xff]
      %v1635 = vld [vmem:[%s1627 + $0x71] sm:$0xff]
      %v1636 = vld [vmem:[%s1618 + $0x1] sm:$0xff]
      %v1637 = vld [vmem:[%s1618 + $0x11] sm:$0xff]
      %v1638 = vld [vmem:[%s1618 + $0x21] sm:$0xff]
      %v1639 = vld [vmem:[%s1618 + $0x31] sm:$0xff]
      %v1640 = vld [vmem:[%s1618 + $0x41] sm:$0xff]
      %v1641 = vld [vmem:[%s1618 + $0x51] sm:$0xff]
      %v1642 = vld [vmem:[%s1618 + $0x61] sm:$0xff]
      %v1643 = vld [vmem:[%s1618 + $0x71] sm:$0xff]
      %1644 = vrot.lane.b32.xlu0 %v948, 4
      %v1645 = vpop.permute.xlu0 %1644
      %1646 = vrot.lane.b32.xlu0 %v949, 4
      %v1647 = vpop.permute.xlu0 %1646
      %1648 = vrot.lane.b32.xlu0 %v950, 4
      %v1649 = vpop.permute.xlu0 %1648
      %1650 = vrot.lane.b32.xlu0 %v951, 4
      %v1651 = vpop.permute.xlu0 %1650
      %1652 = vrot.lane.b32.xlu0 %v952, 4
      %v1653 = vpop.permute.xlu0 %1652
      %1654 = vrot.lane.b32.xlu0 %v953, 4
      %v1655 = vpop.permute.xlu0 %1654
      %1656 = vrot.lane.b32.xlu0 %v954, 4
      %v1657 = vpop.permute.xlu0 %1656
      %1658 = vrot.lane.b32.xlu0 %v955, 4
      %v1659 = vpop.permute.xlu0 %1658
      %1668 = vrot.lane.b32.xlu0 %v956, 8
      %v1669 = vpop.permute.xlu0 %1668
      %1670 = vrot.lane.b32.xlu0 %v957, 8
      %v1671 = vpop.permute.xlu0 %1670
      %1672 = vrot.lane.b32.xlu0 %v958, 8
      %v1673 = vpop.permute.xlu0 %1672
      %1674 = vrot.lane.b32.xlu0 %v959, 8
      %v1675 = vpop.permute.xlu0 %1674
      %1676 = vrot.lane.b32.xlu0 %v960, 8
      %v1677 = vpop.permute.xlu0 %1676
      %1678 = vrot.lane.b32.xlu0 %v961, 8
      %v1679 = vpop.permute.xlu0 %1678
      %1680 = vrot.lane.b32.xlu0 %v962, 8
      %v1681 = vpop.permute.xlu0 %1680
      %1682 = vrot.lane.b32.xlu0 %v963, 8
      %v1683 = vpop.permute.xlu0 %1682
      %1692 = vrot.lane.b32.xlu0 %v964, 12
      %v1693 = vpop.permute.xlu0 %1692
      %1694 = vrot.lane.b32.xlu0 %v965, 12
      %v1695 = vpop.permute.xlu0 %1694
      %1696 = vrot.lane.b32.xlu0 %v966, 12
      %v1697 = vpop.permute.xlu0 %1696
      %1698 = vrot.lane.b32.xlu0 %v967, 12
      %v1699 = vpop.permute.xlu0 %1698
      %1700 = vrot.lane.b32.xlu0 %v968, 12
      %v1701 = vpop.permute.xlu0 %1700
      %1702 = vrot.lane.b32.xlu0 %v969, 12
      %v1703 = vpop.permute.xlu0 %1702
      %1704 = vrot.lane.b32.xlu0 %v970, 12
      %v1705 = vpop.permute.xlu0 %1704
      %1706 = vrot.lane.b32.xlu0 %v971, 12
      %v1707 = vpop.permute.xlu0 %1706
      %1716 = vrot.lane.b32.xlu0 %v972, 16
      %v1717 = vpop.permute.xlu0 %1716
      %1718 = vrot.lane.b32.xlu0 %v973, 16
      %v1719 = vpop.permute.xlu0 %1718
      %1720 = vrot.lane.b32.xlu0 %v974, 16
      %v1721 = vpop.permute.xlu0 %1720
      %1722 = vrot.lane.b32.xlu0 %v975, 16
      %v1723 = vpop.permute.xlu0 %1722
      %1724 = vrot.lane.b32.xlu0 %v976, 16
      %v1725 = vpop.permute.xlu0 %1724
      %1726 = vrot.lane.b32.xlu0 %v977, 16
      %v1727 = vpop.permute.xlu0 %1726
      %1728 = vrot.lane.b32.xlu0 %v978, 16
      %v1729 = vpop.permute.xlu0 %1728
      %1730 = vrot.lane.b32.xlu0 %v979, 16
      %v1731 = vpop.permute.xlu0 %1730
      %1740 = vrot.lane.b32.xlu0 %v980, 20
      %v1741 = vpop.permute.xlu0 %1740
      %1742 = vrot.lane.b32.xlu0 %v981, 20
      %v1743 = vpop.permute.xlu0 %1742
      %1744 = vrot.lane.b32.xlu0 %v982, 20
      %v1745 = vpop.permute.xlu0 %1744
      %1746 = vrot.lane.b32.xlu0 %v983, 20
      %v1747 = vpop.permute.xlu0 %1746
      %1748 = vrot.lane.b32.xlu0 %v984, 20
      %v1749 = vpop.permute.xlu0 %1748
      %1750 = vrot.lane.b32.xlu0 %v985, 20
      %v1751 = vpop.permute.xlu0 %1750
      %1752 = vrot.lane.b32.xlu0 %v986, 20
      %v1753 = vpop.permute.xlu0 %1752
      %1754 = vrot.lane.b32.xlu0 %v987, 20
      %v1755 = vpop.permute.xlu0 %1754
      %1772 = vrot.lane.b32.xlu0 %v1619, 24
      %v1773 = vpop.permute.xlu0 %1772
      %1774 = vrot.lane.b32.xlu0 %v1620, 24
      %v1775 = vpop.permute.xlu0 %1774
      %1776 = vrot.lane.b32.xlu0 %v1621, 24
      %v1777 = vpop.permute.xlu0 %1776
      %1778 = vrot.lane.b32.xlu0 %v1622, 24
      %v1779 = vpop.permute.xlu0 %1778
      %1780 = vrot.lane.b32.xlu0 %v1623, 24
      %v1781 = vpop.permute.xlu0 %1780
      %1782 = vrot.lane.b32.xlu0 %v1624, 24
      %v1783 = vpop.permute.xlu0 %1782
      %1784 = vrot.lane.b32.xlu0 %v1625, 24
      %v1785 = vpop.permute.xlu0 %1784
      %1786 = vrot.lane.b32.xlu0 %v1626, 24
      %v1787 = vpop.permute.xlu0 %1786
      %1804 = vrot.lane.b32.xlu0 %v1628, 28
      %v1805 = vpop.permute.xlu0 %1804
      %1806 = vrot.lane.b32.xlu0 %v1629, 28
      %v1807 = vpop.permute.xlu0 %1806
      %1808 = vrot.lane.b32.xlu0 %v1630, 28
      %v1809 = vpop.permute.xlu0 %1808
      %1810 = vrot.lane.b32.xlu0 %v1631, 28
      %v1811 = vpop.permute.xlu0 %1810
      %1812 = vrot.lane.b32.xlu0 %v1632, 28
      %v1813 = vpop.permute.xlu0 %1812
      %1814 = vrot.lane.b32.xlu0 %v1633, 28
      %v1815 = vpop.permute.xlu0 %1814
      %1816 = vrot.lane.b32.xlu0 %v1634, 28
      %v1817 = vpop.permute.xlu0 %1816
      %1818 = vrot.lane.b32.xlu0 %v1635, 28
      %v1819 = vpop.permute.xlu0 %1818
      %1836 = vrot.lane.b32.xlu0 %v1636, 32
      %v1837 = vpop.permute.xlu0 %1836
      %1838 = vrot.lane.b32.xlu0 %v1637, 32
      %v1839 = vpop.permute.xlu0 %1838
      %1840 = vrot.lane.b32.xlu0 %v1638, 32
      %v1841 = vpop.permute.xlu0 %1840
      %1842 = vrot.lane.b32.xlu0 %v1639, 32
      %v1843 = vpop.permute.xlu0 %1842
      %1844 = vrot.lane.b32.xlu0 %v1640, 32
      %v1845 = vpop.permute.xlu0 %1844
      %1846 = vrot.lane.b32.xlu0 %v1641, 32
      %v1847 = vpop.permute.xlu0 %1846
      %1848 = vrot.lane.b32.xlu0 %v1642, 32
      %v1849 = vpop.permute.xlu0 %1848
      %1850 = vrot.lane.b32.xlu0 %v1643, 32
      %v1851 = vpop.permute.xlu0 %1850
      %v1860 = vsel %vm327, %v940, %v1645
      %v1861 = vsel %vm327, %v941, %v1647
      %v1862 = vsel %vm327, %v942, %v1649
      %v1863 = vsel %vm327, %v943, %v1651
      %v1864 = vsel %vm327, %v944, %v1653
      %v1865 = vsel %vm327, %v945, %v1655
      %v1866 = vsel %vm327, %v946, %v1657
      %v1867 = vsel %vm327, %v947, %v1659
      %v1868 = vsel %vm409, %v1860, %v1669
      %v1869 = vsel %vm409, %v1861, %v1671
      %v1870 = vsel %vm409, %v1862, %v1673
      %v1871 = vsel %vm409, %v1863, %v1675
      %v1872 = vsel %vm409, %v1864, %v1677
      %v1873 = vsel %vm409, %v1865, %v1679
      %v1874 = vsel %vm409, %v1866, %v1681
      %v1875 = vsel %vm409, %v1867, %v1683
      %v1876 = vsel %vm1260, %v1868, %v1693
      %v1877 = vsel %vm1260, %v1869, %v1695
      %v1878 = vsel %vm1260, %v1870, %v1697
      %v1879 = vsel %vm1260, %v1871, %v1699
      %v1880 = vsel %vm1260, %v1872, %v1701
      %v1881 = vsel %vm1260, %v1873, %v1703
      %v1882 = vsel %vm1260, %v1874, %v1705
      %v1883 = vsel %vm1260, %v1875, %v1707
      %v1884 = vsel %vm1269, %v1876, %v1717
      %v1885 = vsel %vm1269, %v1877, %v1719
      %v1886 = vsel %vm1269, %v1878, %v1721
      %v1887 = vsel %vm1269, %v1879, %v1723
      %v1888 = vsel %vm1269, %v1880, %v1725
      %v1889 = vsel %vm1269, %v1881, %v1727
      %v1890 = vsel %vm1269, %v1882, %v1729
      %v1891 = vsel %vm1269, %v1883, %v1731
      %v1892 = vsel %vm1278, %v1884, %v1741
      %v1893 = vsel %vm1278, %v1885, %v1743
      %v1894 = vsel %vm1278, %v1886, %v1745
      %v1895 = vsel %vm1278, %v1887, %v1747
      %v1896 = vsel %vm1278, %v1888, %v1749
      %v1897 = vsel %vm1278, %v1889, %v1751
      %v1898 = vsel %vm1278, %v1890, %v1753
      %v1899 = vsel %vm1278, %v1891, %v1755
      %v1900 = vsel %vm1287, %v1892, %v1773
      %v1901 = vsel %vm1287, %v1893, %v1775
      %v1902 = vsel %vm1287, %v1894, %v1777
      %v1903 = vsel %vm1287, %v1895, %v1779
      %v1904 = vsel %vm1287, %v1896, %v1781
      %v1905 = vsel %vm1287, %v1897, %v1783
      %v1906 = vsel %vm1287, %v1898, %v1785
      %v1907 = vsel %vm1287, %v1899, %v1787
      %v1908 = vsel %vm1296, %v1900, %v1805
      %v1909 = vsel %vm1296, %v1901, %v1807
      %v1910 = vsel %vm1296, %v1902, %v1809
      %v1911 = vsel %vm1296, %v1903, %v1811
      %v1912 = vsel %vm1296, %v1904, %v1813
      %v1913 = vsel %vm1296, %v1905, %v1815
      %v1914 = vsel %vm1296, %v1906, %v1817
      %v1915 = vsel %vm1296, %v1907, %v1819
      %v1916 = vsel %vm1305, %v1908, %v1837
      %v1917 = vsel %vm1305, %v1909, %v1839
      %v1918 = vsel %vm1305, %v1910, %v1841
      %v1919 = vsel %vm1305, %v1911, %v1843
      %v1920 = vsel %vm1305, %v1912, %v1845
      %v1921 = vsel %vm1305, %v1913, %v1847
      %v1922 = vsel %vm1305, %v1914, %v1849
      %v1923 = vsel %vm1305, %v1915, %v1851
      %v1924 = vld [vmem:[%s1627 + $0x2] sm:$0xff]
      %v1925 = vld [vmem:[%s1627 + $0x12] sm:$0xff]
      %v1926 = vld [vmem:[%s1627 + $0x22] sm:$0xff]
      %v1927 = vld [vmem:[%s1627 + $0x32] sm:$0xff]
      %v1928 = vld [vmem:[%s1627 + $0x42] sm:$0xff]
      %v1929 = vld [vmem:[%s1627 + $0x52] sm:$0xff]
      %v1930 = vld [vmem:[%s1627 + $0x62] sm:$0xff]
      %v1931 = vld [vmem:[%s1627 + $0x72] sm:$0xff]
      %1932 = vrot.lane.b32.xlu0 %v956, 4
      %v1933 = vpop.permute.xlu0 %1932
      %1934 = vrot.lane.b32.xlu0 %v957, 4
      %v1935 = vpop.permute.xlu0 %1934
      %1936 = vrot.lane.b32.xlu0 %v958, 4
      %v1937 = vpop.permute.xlu0 %1936
      %1938 = vrot.lane.b32.xlu0 %v959, 4
      %v1939 = vpop.permute.xlu0 %1938
      %1940 = vrot.lane.b32.xlu0 %v960, 4
      %v1941 = vpop.permute.xlu0 %1940
      %1942 = vrot.lane.b32.xlu0 %v961, 4
      %v1943 = vpop.permute.xlu0 %1942
      %1944 = vrot.lane.b32.xlu0 %v962, 4
      %v1945 = vpop.permute.xlu0 %1944
      %1946 = vrot.lane.b32.xlu0 %v963, 4
      %v1947 = vpop.permute.xlu0 %1946
      %1956 = vrot.lane.b32.xlu0 %v1322, 8
      %v1957 = vpop.permute.xlu0 %1956
      %1958 = vrot.lane.b32.xlu0 %v1323, 8
      %v1959 = vpop.permute.xlu0 %1958
      %1960 = vrot.lane.b32.xlu0 %v1324, 8
      %v1961 = vpop.permute.xlu0 %1960
      %1962 = vrot.lane.b32.xlu0 %v1325, 8
      %v1963 = vpop.permute.xlu0 %1962
      %1964 = vrot.lane.b32.xlu0 %v1326, 8
      %v1965 = vpop.permute.xlu0 %1964
      %1966 = vrot.lane.b32.xlu0 %v1327, 8
      %v1967 = vpop.permute.xlu0 %1966
      %1968 = vrot.lane.b32.xlu0 %v1328, 8
      %v1969 = vpop.permute.xlu0 %1968
      %1970 = vrot.lane.b32.xlu0 %v1329, 8
      %v1971 = vpop.permute.xlu0 %1970
      %1980 = vrot.lane.b32.xlu0 %v972, 12
      %v1981 = vpop.permute.xlu0 %1980
      %1982 = vrot.lane.b32.xlu0 %v973, 12
      %v1983 = vpop.permute.xlu0 %1982
      %1984 = vrot.lane.b32.xlu0 %v974, 12
      %v1985 = vpop.permute.xlu0 %1984
      %1986 = vrot.lane.b32.xlu0 %v975, 12
      %v1987 = vpop.permute.xlu0 %1986
      %1988 = vrot.lane.b32.xlu0 %v976, 12
      %v1989 = vpop.permute.xlu0 %1988
      %1990 = vrot.lane.b32.xlu0 %v977, 12
      %v1991 = vpop.permute.xlu0 %1990
      %1992 = vrot.lane.b32.xlu0 %v978, 12
      %v1993 = vpop.permute.xlu0 %1992
      %1994 = vrot.lane.b32.xlu0 %v979, 12
      %v1995 = vpop.permute.xlu0 %1994
      %2004 = vrot.lane.b32.xlu0 %v980, 16
      %v2005 = vpop.permute.xlu0 %2004
      %2006 = vrot.lane.b32.xlu0 %v981, 16
      %v2007 = vpop.permute.xlu0 %2006
      %2008 = vrot.lane.b32.xlu0 %v982, 16
      %v2009 = vpop.permute.xlu0 %2008
      %2010 = vrot.lane.b32.xlu0 %v983, 16
      %v2011 = vpop.permute.xlu0 %2010
      %2012 = vrot.lane.b32.xlu0 %v984, 16
      %v2013 = vpop.permute.xlu0 %2012
      %2014 = vrot.lane.b32.xlu0 %v985, 16
      %v2015 = vpop.permute.xlu0 %2014
      %2016 = vrot.lane.b32.xlu0 %v986, 16
      %v2017 = vpop.permute.xlu0 %2016
      %2018 = vrot.lane.b32.xlu0 %v987, 16
      %v2019 = vpop.permute.xlu0 %2018
      %2028 = vrot.lane.b32.xlu0 %v1330, 20
      %v2029 = vpop.permute.xlu0 %2028
      %2030 = vrot.lane.b32.xlu0 %v1331, 20
      %v2031 = vpop.permute.xlu0 %2030
      %2032 = vrot.lane.b32.xlu0 %v1332, 20
      %v2033 = vpop.permute.xlu0 %2032
      %2034 = vrot.lane.b32.xlu0 %v1333, 20
      %v2035 = vpop.permute.xlu0 %2034
      %2036 = vrot.lane.b32.xlu0 %v1334, 20
      %v2037 = vpop.permute.xlu0 %2036
      %2038 = vrot.lane.b32.xlu0 %v1335, 20
      %v2039 = vpop.permute.xlu0 %2038
      %2040 = vrot.lane.b32.xlu0 %v1336, 20
      %v2041 = vpop.permute.xlu0 %2040
      %2042 = vrot.lane.b32.xlu0 %v1337, 20
      %v2043 = vpop.permute.xlu0 %2042
      %2052 = vrot.lane.b32.xlu0 %v1628, 24
      %v2053 = vpop.permute.xlu0 %2052
      %2054 = vrot.lane.b32.xlu0 %v1629, 24
      %v2055 = vpop.permute.xlu0 %2054
      %2056 = vrot.lane.b32.xlu0 %v1630, 24
      %v2057 = vpop.permute.xlu0 %2056
      %2058 = vrot.lane.b32.xlu0 %v1631, 24
      %v2059 = vpop.permute.xlu0 %2058
      %2060 = vrot.lane.b32.xlu0 %v1632, 24
      %v2061 = vpop.permute.xlu0 %2060
      %2062 = vrot.lane.b32.xlu0 %v1633, 24
      %v2063 = vpop.permute.xlu0 %2062
      %2064 = vrot.lane.b32.xlu0 %v1634, 24
      %v2065 = vpop.permute.xlu0 %2064
      %2066 = vrot.lane.b32.xlu0 %v1635, 24
      %v2067 = vpop.permute.xlu0 %2066
      %2076 = vrot.lane.b32.xlu0 %v1636, 28
      %v2077 = vpop.permute.xlu0 %2076
      %2078 = vrot.lane.b32.xlu0 %v1637, 28
      %v2079 = vpop.permute.xlu0 %2078
      %2080 = vrot.lane.b32.xlu0 %v1638, 28
      %v2081 = vpop.permute.xlu0 %2080
      %2082 = vrot.lane.b32.xlu0 %v1639, 28
      %v2083 = vpop.permute.xlu0 %2082
      %2084 = vrot.lane.b32.xlu0 %v1640, 28
      %v2085 = vpop.permute.xlu0 %2084
      %2086 = vrot.lane.b32.xlu0 %v1641, 28
      %v2087 = vpop.permute.xlu0 %2086
      %2088 = vrot.lane.b32.xlu0 %v1642, 28
      %v2089 = vpop.permute.xlu0 %2088
      %2090 = vrot.lane.b32.xlu0 %v1643, 28
      %v2091 = vpop.permute.xlu0 %2090
      %2108 = vrot.lane.b32.xlu0 %v1924, 32
      %v2109 = vpop.permute.xlu0 %2108
      %2110 = vrot.lane.b32.xlu0 %v1925, 32
      %v2111 = vpop.permute.xlu0 %2110
      %2112 = vrot.lane.b32.xlu0 %v1926, 32
      %v2113 = vpop.permute.xlu0 %2112
      %2114 = vrot.lane.b32.xlu0 %v1927, 32
      %v2115 = vpop.permute.xlu0 %2114
      %2116 = vrot.lane.b32.xlu0 %v1928, 32
      %v2117 = vpop.permute.xlu0 %2116
      %2118 = vrot.lane.b32.xlu0 %v1929, 32
      %v2119 = vpop.permute.xlu0 %2118
      %2120 = vrot.lane.b32.xlu0 %v1930, 32
      %v2121 = vpop.permute.xlu0 %2120
      %2122 = vrot.lane.b32.xlu0 %v1931, 32
      %v2123 = vpop.permute.xlu0 %2122
      %v2132 = vsel %vm327, %v948, %v1933
      %v2133 = vsel %vm327, %v949, %v1935
      %v2134 = vsel %vm327, %v950, %v1937
      %v2135 = vsel %vm327, %v951, %v1939
      %v2136 = vsel %vm327, %v952, %v1941
      %v2137 = vsel %vm327, %v953, %v1943
      %v2138 = vsel %vm327, %v954, %v1945
      %v2139 = vsel %vm327, %v955, %v1947
      %v2140 = vsel %vm409, %v2132, %v1957
      %v2141 = vsel %vm409, %v2133, %v1959
      %v2142 = vsel %vm409, %v2134, %v1961
      %v2143 = vsel %vm409, %v2135, %v1963
      %v2144 = vsel %vm409, %v2136, %v1965
      %v2145 = vsel %vm409, %v2137, %v1967
      %v2146 = vsel %vm409, %v2138, %v1969
      %v2147 = vsel %vm409, %v2139, %v1971
      %v2148 = vsel %vm1260, %v2140, %v1981
      %v2149 = vsel %vm1260, %v2141, %v1983
      %v2150 = vsel %vm1260, %v2142, %v1985
      %v2151 = vsel %vm1260, %v2143, %v1987
      %v2152 = vsel %vm1260, %v2144, %v1989
      %v2153 = vsel %vm1260, %v2145, %v1991
      %v2154 = vsel %vm1260, %v2146, %v1993
      %v2155 = vsel %vm1260, %v2147, %v1995
      %v2156 = vsel %vm1269, %v2148, %v2005
      %v2157 = vsel %vm1269, %v2149, %v2007
      %v2158 = vsel %vm1269, %v2150, %v2009
      %v2159 = vsel %vm1269, %v2151, %v2011
      %v2160 = vsel %vm1269, %v2152, %v2013
      %v2161 = vsel %vm1269, %v2153, %v2015
      %v2162 = vsel %vm1269, %v2154, %v2017
      %v2163 = vsel %vm1269, %v2155, %v2019
      %v2164 = vsel %vm1278, %v2156, %v2029
      %v2165 = vsel %vm1278, %v2157, %v2031
      %v2166 = vsel %vm1278, %v2158, %v2033
      %v2167 = vsel %vm1278, %v2159, %v2035
      %v2168 = vsel %vm1278, %v2160, %v2037
      %v2169 = vsel %vm1278, %v2161, %v2039
      %v2170 = vsel %vm1278, %v2162, %v2041
      %v2171 = vsel %vm1278, %v2163, %v2043
      %v2172 = vsel %vm1287, %v2164, %v2053
      %v2173 = vsel %vm1287, %v2165, %v2055
      %v2174 = vsel %vm1287, %v2166, %v2057
      %v2175 = vsel %vm1287, %v2167, %v2059
      %v2176 = vsel %vm1287, %v2168, %v2061
      %v2177 = vsel %vm1287, %v2169, %v2063
      %v2178 = vsel %vm1287, %v2170, %v2065
      %v2179 = vsel %vm1287, %v2171, %v2067
      %v2180 = vsel %vm1296, %v2172, %v2077
      %v2181 = vsel %vm1296, %v2173, %v2079
      %v2182 = vsel %vm1296, %v2174, %v2081
      %v2183 = vsel %vm1296, %v2175, %v2083
      %v2184 = vsel %vm1296, %v2176, %v2085
      %v2185 = vsel %vm1296, %v2177, %v2087
      %v2186 = vsel %vm1296, %v2178, %v2089
      %v2187 = vsel %vm1296, %v2179, %v2091
      %v2188 = vsel %vm1305, %v2180, %v2109
      %v2189 = vsel %vm1305, %v2181, %v2111
      %v2190 = vsel %vm1305, %v2182, %v2113
      %v2191 = vsel %vm1305, %v2183, %v2115
      %v2192 = vsel %vm1305, %v2184, %v2117
      %v2193 = vsel %vm1305, %v2185, %v2119
      %v2194 = vsel %vm1305, %v2186, %v2121
      %v2195 = vsel %vm1305, %v2187, %v2123
      %v2196 = vpack.c.bf16 %v1307, %v1306
      %v2197 = vpack.c.bf16 %v1309, %v1308
      %v2198 = vpack.c.bf16 %v1311, %v1310
      %v2199 = vpack.c.bf16 %v1313, %v1312
      %v2200 = vpack.c.bf16 %v1611, %v1610
      %v2201 = vpack.c.bf16 %v1613, %v1612
      %v2202 = vpack.c.bf16 %v1615, %v1614
      %v2203 = vpack.c.bf16 %v1617, %v1616
      %v2204 = vpack.c.bf16 %v1917, %v1916
      %v2205 = vpack.c.bf16 %v1919, %v1918
      %v2206 = vpack.c.bf16 %v1921, %v1920
      %v2207 = vpack.c.bf16 %v1923, %v1922
      %v2208 = vpack.c.bf16 %v2189, %v2188
      %v2209 = vpack.c.bf16 %v2191, %v2190
      %v2210 = vpack.c.bf16 %v2193, %v2192
      %v2211 = vpack.c.bf16 %v2195, %v2194
      %v2213 = vlaneseq
      %v2214 = vshrl.u32 %v2213, 7
      %v2215 = vsub.s32 0, %v2214
      %v2216 = vrot.slane %v913, %v2215
      %v2223 = vunpack.c.l.b16 %v908
      %v2224 = vunpack.c.l.b16 %v909
      %v2225 = vunpack.c.l.b16 %v910
      %v2226 = vunpack.c.l.b16 %v911
      %v2227 = vunpack.c.l.b16 %v912
      %v2228 = vpack.c.b16 %v2224, %v2223
      %v2229 = vpack.c.b16 %v2226, %v2225
      %v2230 = vpack.c.b16 %v2227, %v2227
      %vm2233 = vcmask 293888
      %v2235 = vsel %vm2233, %v2196, 0
      %v2238 = vsel %vm2233, %v2197, 0
      %v2241 = vsel %vm2233, %v2198, 0
      %v2244 = vsel %vm2233, %v2199, 0
      %v2247 = vsel %vm2233, %v2200, 0
      %v2250 = vsel %vm2233, %v2201, 0
      %v2253 = vsel %vm2233, %v2202, 0
      %v2256 = vsel %vm2233, %v2203, 0
      %v2259 = vsel %vm2233, %v2204, 0
      %v2262 = vsel %vm2233, %v2205, 0
      %v2265 = vsel %vm2233, %v2206, 0
      %v2268 = vsel %vm2233, %v2207, 0
      %v2271 = vsel %vm2233, %v2208, 0
      %v2274 = vsel %vm2233, %v2209, 0
      %v2277 = vsel %vm2233, %v2210, 0
      %v2280 = vsel %vm2233, %v2211, 0
      %vm2282 = vcmask 1041408
      %v2284 = vsel %vm2282, %v2230, 0
      %2286 = vmatprep.subr.bf16.mxu0 0
      %2287 = vmatpush1.bf16.msra.mxu0 %v2228
      %2288 = vmatprep.subr.bf16.mxu0 0
      %2289 = vmatpush1.bf16.msra.mxu0 %v2229
      %2290 = vmatprep.subr.bf16.mxu0 0
      %2291 = vmatpush1.bf16.msra.mxu0 %v2284
      %2292 = vmatprep.subr.bf16.mxu0 0
      %2293 = vmatpush1.bf16.msra.mxu0 0
      %2294 = vmatprep.subr.bf16.mxu0 0
      %2295 = vmatpush1.bf16.msra.mxu0 0
      %2296 = vmatprep.subr.bf16.mxu0 0
      %2297 = vmatpush1.bf16.msra.mxu0 0
      %2298 = vmatprep.subr.bf16.mxu0 0
      %2299 = vmatpush1.bf16.msra.mxu0 0
      %2300 = vmatprep.subr.bf16.mxu0 0
      %2301 = vmatpush1.bf16.msra.mxu0 0
      %2302 = vmatprep.subr.bf16.mxu0 0
      %2303 = vmatpush1.bf16.msra.mxu0 0
      %2304 = vmatprep.subr.bf16.mxu0 0
      %2305 = vmatpush1.bf16.msra.mxu0 0
      %2306 = vmatprep.subr.bf16.mxu0 0
      %2307 = vmatpush1.bf16.msra.mxu0 0
      %2308 = vmatprep.subr.bf16.mxu0 0
      %2309 = vmatpush1.bf16.msra.mxu0 0
      %2310 = vmatprep.subr.bf16.mxu0 0
      %2311 = vmatpush1.bf16.msra.mxu0 0
      %2312 = vmatprep.subr.bf16.mxu0 0
      %2313 = vmatpush1.bf16.msra.mxu0 0
      %2314 = vmatprep.subr.bf16.mxu0 0
      %2315 = vmatpush1.bf16.msra.mxu0 0
      %2316 = vmatprep.subr.bf16.mxu0 0
      %2317 = vmatpush1.bf16.msra.mxu0 0
      %2318 = vmatprep.mubr.bf16.mxu0 0
      %2319 = vmatmul.mubr.bf16.gmra.mrb[0].mxu0 %v2235
      %v2320 = vpop.f32.mrb[0].mxu0
      %v2321 = vadd.f32 %v2216, %v2320
      %v2322 = vpop.f32.mrb[0].mxu0
      %v2323 = vpop.f32.mrb[0].mxu0
      %v2324 = vadd.f32 %v2216, %v2323
      %v2325 = vpop.f32.mrb[0].mxu0
      %2326 = vmatprep.mubr.bf16.mxu0 0
      %2327 = vmatmul.mubr.bf16.gmra.mrb[0].mxu0 %v2238
      %v2328 = vpop.f32.mrb[0].mxu0
      %v2329 = vadd.f32 %v2216, %v2328
      %v2330 = vpop.f32.mrb[0].mxu0
      %v2331 = vpop.f32.mrb[0].mxu0
      %v2332 = vadd.f32 %v2216, %v2331
      %v2333 = vpop.f32.mrb[0].mxu0
      %2334 = vmatprep.mubr.bf16.mxu0 0
      %2335 = vmatmul.mubr.bf16.gmra.mrb[0].mxu0 %v2241
      %v2336 = vpop.f32.mrb[0].mxu0
      %v2337 = vadd.f32 %v2216, %v2336
      %v2338 = vpop.f32.mrb[0].mxu0
      %v2339 = vpop.f32.mrb[0].mxu0
      %v2340 = vadd.f32 %v2216, %v2339
      %v2341 = vpop.f32.mrb[0].mxu0
      %2342 = vmatprep.mubr.bf16.mxu0 0
      %2343 = vmatmul.mubr.bf16.gmra.mrb[0].mxu0 %v2244
      %v2344 = vpop.f32.mrb[0].mxu0
      %v2345 = vadd.f32 %v2216, %v2344
      %v2346 = vpop.f32.mrb[0].mxu0
      %v2347 = vpop.f32.mrb[0].mxu0
      %v2348 = vadd.f32 %v2216, %v2347
      %v2349 = vpop.f32.mrb[0].mxu0
      %2350 = vmatprep.mubr.bf16.mxu0 0
      %2351 = vmatmul.mubr.bf16.gmra.mrb[0].mxu0 %v2247
      %v2352 = vpop.f32.mrb[0].mxu0
      %v2353 = vadd.f32 %v2216, %v2352
      %v2354 = vpop.f32.mrb[0].mxu0
      %v2355 = vpop.f32.mrb[0].mxu0
      %v2356 = vadd.f32 %v2216, %v2355
      %v2357 = vpop.f32.mrb[0].mxu0
      %2358 = vmatprep.mubr.bf16.mxu0 0
      %2359 = vmatmul.mubr.bf16.gmra.mrb[0].mxu0 %v2250
      %v2360 = vpop.f32.mrb[0].mxu0
      %v2361 = vadd.f32 %v2216, %v2360
      %v2362 = vpop.f32.mrb[0].mxu0
      %v2363 = vpop.f32.mrb[0].mxu0
      %v2364 = vadd.f32 %v2216, %v2363
      %v2365 = vpop.f32.mrb[0].mxu0
      %2366 = vmatprep.mubr.bf16.mxu0 0
      %2367 = vmatmul.mubr.bf16.gmra.mrb[0].mxu0 %v2253
      %v2368 = vpop.f32.mrb[0].mxu0
      %v2369 = vadd.f32 %v2216, %v2368
      %v2370 = vpop.f32.mrb[0].mxu0
      %v2371 = vpop.f32.mrb[0].mxu0
      %v2372 = vadd.f32 %v2216, %v2371
      %v2373 = vpop.f32.mrb[0].mxu0
      %2374 = vmatprep.mubr.bf16.mxu0 0
      %2375 = vmatmul.mubr.bf16.gmra.mrb[0].mxu0 %v2256
      %v2376 = vpop.f32.mrb[0].mxu0
      %v2377 = vadd.f32 %v2216, %v2376
      %v2378 = vpop.f32.mrb[0].mxu0
      %v2379 = vpop.f32.mrb[0].mxu0
      %v2380 = vadd.f32 %v2216, %v2379
      %v2381 = vpop.f32.mrb[0].mxu0
      %2382 = vmatprep.mubr.bf16.mxu0 0
      %2383 = vmatmul.mubr.bf16.gmra.mrb[0].mxu0 %v2259
      %v2384 = vpop.f32.mrb[0].mxu0
      %v2385 = vadd.f32 %v2216, %v2384
      %v2386 = vpop.f32.mrb[0].mxu0
      %v2387 = vpop.f32.mrb[0].mxu0
      %v2388 = vadd.f32 %v2216, %v2387
      %v2389 = vpop.f32.mrb[0].mxu0
      %2390 = vmatprep.mubr.bf16.mxu0 0
      %2391 = vmatmul.mubr.bf16.gmra.mrb[0].mxu0 %v2262
      %v2392 = vpop.f32.mrb[0].mxu0
      %v2393 = vadd.f32 %v2216, %v2392
      %v2394 = vpop.f32.mrb[0].mxu0
      %v2395 = vpop.f32.mrb[0].mxu0
      %v2396 = vadd.f32 %v2216, %v2395
      %v2397 = vpop.f32.mrb[0].mxu0
      %2398 = vmatprep.mubr.bf16.mxu0 0
      %2399 = vmatmul.mubr.bf16.gmra.mrb[0].mxu0 %v2265
      %v2400 = vpop.f32.mrb[0].mxu0
      %v2401 = vadd.f32 %v2216, %v2400
      %v2402 = vpop.f32.mrb[0].mxu0
      %v2403 = vpop.f32.mrb[0].mxu0
      %v2404 = vadd.f32 %v2216, %v2403
      %v2405 = vpop.f32.mrb[0].mxu0
      %2406 = vmatprep.mubr.bf16.mxu0 0
      %2407 = vmatmul.mubr.bf16.gmra.mrb[0].mxu0 %v2268
      %v2408 = vpop.f32.mrb[0].mxu0
      %v2409 = vadd.f32 %v2216, %v2408
      %v2410 = vpop.f32.mrb[0].mxu0
      %v2411 = vpop.f32.mrb[0].mxu0
      %v2412 = vadd.f32 %v2216, %v2411
      %v2413 = vpop.f32.mrb[0].mxu0
      %2414 = vmatprep.mubr.bf16.mxu0 0
      %2415 = vmatmul.mubr.bf16.gmra.mrb[0].mxu0 %v2271
      %v2416 = vpop.f32.mrb[0].mxu0
      %v2417 = vadd.f32 %v2216, %v2416
      %v2418 = vpop.f32.mrb[0].mxu0
      %v2419 = vpop.f32.mrb[0].mxu0
      %v2420 = vadd.f32 %v2216, %v2419
      %v2421 = vpop.f32.mrb[0].mxu0
      %2422 = vmatprep.mubr.bf16.mxu0 0
      %2423 = vmatmul.mubr.bf16.gmra.mrb[0].mxu0 %v2274
      %v2424 = vpop.f32.mrb[0].mxu0
      %v2425 = vadd.f32 %v2216, %v2424
      %v2426 = vpop.f32.mrb[0].mxu0
      %v2427 = vpop.f32.mrb[0].mxu0
      %v2428 = vadd.f32 %v2216, %v2427
      %v2429 = vpop.f32.mrb[0].mxu0
      %2430 = vmatprep.mubr.bf16.mxu0 0
      %2431 = vmatmul.mubr.bf16.gmra.mrb[0].mxu0 %v2277
      %v2432 = vpop.f32.mrb[0].mxu0
      %v2433 = vadd.f32 %v2216, %v2432
      %v2434 = vpop.f32.mrb[0].mxu0
      %v2435 = vpop.f32.mrb[0].mxu0
      %v2436 = vadd.f32 %v2216, %v2435
      %v2437 = vpop.f32.mrb[0].mxu0
      %2438 = vmatprep.mubr.bf16.mxu0 0
      %2439 = vmatmul.mubr.bf16.gmra.mrb[0].mxu0 %v2280
      %v2440 = vpop.f32.mrb[0].mxu0
      %v2441 = vadd.f32 %v2216, %v2440
      %v2442 = vpop.f32.mrb[0].mxu0
      %v2443 = vpop.f32.mrb[0].mxu0
      %v2444 = vadd.f32 %v2216, %v2443
      %v2445 = vpop.f32.mrb[0].mxu0
      %2446 = vdwg.mxu0
      %v2447 = vmax.f32 %v2321, 0.0
      %v2448 = vmax.f32 %v2324, 0.0
      %v2449 = vmax.f32 %v2329, 0.0
      %v2450 = vmax.f32 %v2332, 0.0
      %v2451 = vmax.f32 %v2337, 0.0
      %v2452 = vmax.f32 %v2340, 0.0
      %v2453 = vmax.f32 %v2345, 0.0
      %v2454 = vmax.f32 %v2348, 0.0
      %v2455 = vmax.f32 %v2353, 0.0
      %v2456 = vmax.f32 %v2356, 0.0
      %v2457 = vmax.f32 %v2361, 0.0
      %v2458 = vmax.f32 %v2364, 0.0
      %v2459 = vmax.f32 %v2369, 0.0
      %v2460 = vmax.f32 %v2372, 0.0
      %v2461 = vmax.f32 %v2377, 0.0
      %v2462 = vmax.f32 %v2380, 0.0
      %v2463 = vmax.f32 %v2385, 0.0
      %v2464 = vmax.f32 %v2388, 0.0
      %v2465 = vmax.f32 %v2393, 0.0
      %v2466 = vmax.f32 %v2396, 0.0
      %v2467 = vmax.f32 %v2401, 0.0
      %v2468 = vmax.f32 %v2404, 0.0
      %v2469 = vmax.f32 %v2409, 0.0
      %v2470 = vmax.f32 %v2412, 0.0
      %v2471 = vmax.f32 %v2417, 0.0
      %v2472 = vmax.f32 %v2420, 0.0
      %v2473 = vmax.f32 %v2425, 0.0
      %v2474 = vmax.f32 %v2428, 0.0
      %v2475 = vmax.f32 %v2433, 0.0
      %v2476 = vmax.f32 %v2436, 0.0
      %v2477 = vmax.f32 %v2441, 0.0
      %v2478 = vmax.f32 %v2444, 0.0
      %s2479 = scalar_lea.vmem [#allocation3], 16
      %2480 = vst.msk [vmem:[%s2479 + $0x1] sm:$0xff] %vm409, %v2447
      %2481 = vst.msk [vmem:[%s2479 + $0x11] sm:$0xff] %vm409, %v2448
      %2482 = vst.msk [vmem:[%s2479 + $0x21] sm:$0xff] %vm409, %v2449
      %2483 = vst.msk [vmem:[%s2479 + $0x31] sm:$0xff] %vm409, %v2450
      %2484 = vst.msk [vmem:[%s2479 + $0x41] sm:$0xff] %vm409, %v2451
      %2485 = vst.msk [vmem:[%s2479 + $0x51] sm:$0xff] %vm409, %v2452
      %2486 = vst.msk [vmem:[%s2479 + $0x61] sm:$0xff] %vm409, %v2453
      %2487 = vst.msk [vmem:[%s2479 + $0x71] sm:$0xff] %vm409, %v2454
      %s2488 = scalar_lea.vmem [#allocation3], 176
      %2489 = vst.msk [vmem:[%s2488 + $0x1] sm:$0xff] %vm409, %v2455
      %2490 = vst.msk [vmem:[%s2488 + $0x11] sm:$0xff] %vm409, %v2456
      %2491 = vst.msk [vmem:[%s2488 + $0x21] sm:$0xff] %vm409, %v2457
      %2492 = vst.msk [vmem:[%s2488 + $0x31] sm:$0xff] %vm409, %v2458
      %2493 = vst.msk [vmem:[%s2488 + $0x41] sm:$0xff] %vm409, %v2459
      %2494 = vst.msk [vmem:[%s2488 + $0x51] sm:$0xff] %vm409, %v2460
      %2495 = vst.msk [vmem:[%s2488 + $0x61] sm:$0xff] %vm409, %v2461
      %2496 = vst.msk [vmem:[%s2488 + $0x71] sm:$0xff] %vm409, %v2462
      %s2497 = scalar_lea.vmem [#allocation3], 336
      %2498 = vst.msk [vmem:[%s2497 + $0x1] sm:$0xff] %vm409, %v2463
      %2499 = vst.msk [vmem:[%s2497 + $0x11] sm:$0xff] %vm409, %v2464
      %2500 = vst.msk [vmem:[%s2497 + $0x21] sm:$0xff] %vm409, %v2465
      %2501 = vst.msk [vmem:[%s2497 + $0x31] sm:$0xff] %vm409, %v2466
      %2502 = vst.msk [vmem:[%s2497 + $0x41] sm:$0xff] %vm409, %v2467
      %2503 = vst.msk [vmem:[%s2497 + $0x51] sm:$0xff] %vm409, %v2468
      %2504 = vst.msk [vmem:[%s2497 + $0x61] sm:$0xff] %vm409, %v2469
      %2505 = vst.msk [vmem:[%s2497 + $0x71] sm:$0xff] %vm409, %v2470
      %s2506 = scalar_lea.vmem [#allocation3], 496
      %2507 = vst.msk [vmem:[%s2506 + $0x1] sm:$0xff] %vm409, %v2471
      %2508 = vst.msk [vmem:[%s2506 + $0x11] sm:$0xff] %vm409, %v2472
      %2509 = vst.msk [vmem:[%s2506 + $0x21] sm:$0xff] %vm409, %v2473
      %2510 = vst.msk [vmem:[%s2506 + $0x31] sm:$0xff] %vm409, %v2474
      %2511 = vst.msk [vmem:[%s2506 + $0x41] sm:$0xff] %vm409, %v2475
      %2512 = vst.msk [vmem:[%s2506 + $0x51] sm:$0xff] %vm409, %v2476
      %2513 = vst.msk [vmem:[%s2506 + $0x61] sm:$0xff] %vm409, %v2477
      %2514 = vst.msk [vmem:[%s2506 + $0x71] sm:$0xff] %vm409, %v2478
      %v2515 = vld [vmem:[%s6] sm:$0xf]
      %v2516 = vld [vmem:[%s6 + $0x4] sm:$0xf]
      %v2517 = vld [vmem:[%s6 + $0x8] sm:$0xf]
      %v2518 = vld [vmem:[%s6 + $0xc] sm:$0xf]
      %v2519 = vld [vmem:[%s6 + $0x10] sm:$0xf]
      %v2520 = vld [vmem:[%s6 + $0x14] sm:$0xf]
      %v2521 = vld [vmem:[%s6 + $0x18] sm:$0xf]
      %v2522 = vld [vmem:[%s6 + $0x1c] sm:$0xf]
      %v2523 = vld [vmem:[%s6 + $0x20] sm:$0xf]
      %v2524 = vld [vmem:[%s7] sm:$0x1]
      %s2525 = scalar_lea.vmem [#allocation3], 480
      %v2526 = vld [vmem:[%s2525] sm:$0xff]
      %v2527 = vld [vmem:[%s2525 + $0x10] sm:$0xff]
      %v2528 = vld [vmem:[%s2525 + $0x20] sm:$0xff]
      %v2529 = vld [vmem:[%s2525 + $0x30] sm:$0xff]
      %v2530 = vld [vmem:[%s2525 + $0x40] sm:$0xff]
      %v2531 = vld [vmem:[%s2525 + $0x50] sm:$0xff]
      %v2532 = vld [vmem:[%s2525 + $0x60] sm:$0xff]
      %v2533 = vld [vmem:[%s2525 + $0x70] sm:$0xff]
      %s2534 = scalar_lea.vmem [#allocation3], 320
      %v2535 = vld [vmem:[%s2534 + $0x1] sm:$0xff]
      %v2536 = vld [vmem:[%s2534 + $0x11] sm:$0xff]
      %v2537 = vld [vmem:[%s2534 + $0x21] sm:$0xff]
      %v2538 = vld [vmem:[%s2534 + $0x31] sm:$0xff]
      %v2539 = vld [vmem:[%s2534 + $0x41] sm:$0xff]
      %v2540 = vld [vmem:[%s2534 + $0x51] sm:$0xff]
      %v2541 = vld [vmem:[%s2534 + $0x61] sm:$0xff]
      %v2542 = vld [vmem:[%s2534 + $0x71] sm:$0xff]
      %v2543 = vld [vmem:[%s2525 + $0x1] sm:$0xff]
      %v2544 = vld [vmem:[%s2525 + $0x11] sm:$0xff]
      %v2545 = vld [vmem:[%s2525 + $0x21] sm:$0xff]
      %v2546 = vld [vmem:[%s2525 + $0x31] sm:$0xff]
      %v2547 = vld [vmem:[%s2525 + $0x41] sm:$0xff]
      %v2548 = vld [vmem:[%s2525 + $0x51] sm:$0xff]
      %v2549 = vld [vmem:[%s2525 + $0x61] sm:$0xff]
      %v2550 = vld [vmem:[%s2525 + $0x71] sm:$0xff]
      %v2551 = vld [vmem:[%s2488] sm:$0xff]
      %v2552 = vld [vmem:[%s2488 + $0x10] sm:$0xff]
      %v2553 = vld [vmem:[%s2488 + $0x20] sm:$0xff]
      %v2554 = vld [vmem:[%s2488 + $0x30] sm:$0xff]
      %v2555 = vld [vmem:[%s2488 + $0x40] sm:$0xff]
      %v2556 = vld [vmem:[%s2488 + $0x50] sm:$0xff]
      %v2557 = vld [vmem:[%s2488 + $0x60] sm:$0xff]
      %v2558 = vld [vmem:[%s2488 + $0x70] sm:$0xff]
      %v2559 = vld [vmem:[%s2479 + $0x1] sm:$0xff]
      %v2560 = vld [vmem:[%s2479 + $0x11] sm:$0xff]
      %v2561 = vld [vmem:[%s2479 + $0x21] sm:$0xff]
      %v2562 = vld [vmem:[%s2479 + $0x31] sm:$0xff]
      %v2563 = vld [vmem:[%s2479 + $0x41] sm:$0xff]
      %v2564 = vld [vmem:[%s2479 + $0x51] sm:$0xff]
      %v2565 = vld [vmem:[%s2479 + $0x61] sm:$0xff]
      %v2566 = vld [vmem:[%s2479 + $0x71] sm:$0xff]
      %v2567 = vld [vmem:[%s2488 + $0x1] sm:$0xff]
      %v2568 = vld [vmem:[%s2488 + $0x11] sm:$0xff]
      %v2569 = vld [vmem:[%s2488 + $0x21] sm:$0xff]
      %v2570 = vld [vmem:[%s2488 + $0x31] sm:$0xff]
      %v2571 = vld [vmem:[%s2488 + $0x41] sm:$0xff]
      %v2572 = vld [vmem:[%s2488 + $0x51] sm:$0xff]
      %v2573 = vld [vmem:[%s2488 + $0x61] sm:$0xff]
      %v2574 = vld [vmem:[%s2488 + $0x71] sm:$0xff]
      %v2575 = vld [vmem:[%s2506] sm:$0xff]
      %v2576 = vld [vmem:[%s2506 + $0x10] sm:$0xff]
      %v2577 = vld [vmem:[%s2506 + $0x20] sm:$0xff]
      %v2578 = vld [vmem:[%s2506 + $0x30] sm:$0xff]
      %v2579 = vld [vmem:[%s2506 + $0x40] sm:$0xff]
      %v2580 = vld [vmem:[%s2506 + $0x50] sm:$0xff]
      %v2581 = vld [vmem:[%s2506 + $0x60] sm:$0xff]
      %v2582 = vld [vmem:[%s2506 + $0x70] sm:$0xff]
      %v2583 = vld [vmem:[%s2497 + $0x1] sm:$0xff]
      %v2584 = vld [vmem:[%s2497 + $0x11] sm:$0xff]
      %v2585 = vld [vmem:[%s2497 + $0x21] sm:$0xff]
      %v2586 = vld [vmem:[%s2497 + $0x31] sm:$0xff]
      %v2587 = vld [vmem:[%s2497 + $0x41] sm:$0xff]
      %v2588 = vld [vmem:[%s2497 + $0x51] sm:$0xff]
      %v2589 = vld [vmem:[%s2497 + $0x61] sm:$0xff]
      %v2590 = vld [vmem:[%s2497 + $0x71] sm:$0xff]
      %v2591 = vld [vmem:[%s2506 + $0x1] sm:$0xff]
      %v2592 = vld [vmem:[%s2506 + $0x11] sm:$0xff]
      %v2593 = vld [vmem:[%s2506 + $0x21] sm:$0xff]
      %v2594 = vld [vmem:[%s2506 + $0x31] sm:$0xff]
      %v2595 = vld [vmem:[%s2506 + $0x41] sm:$0xff]
      %v2596 = vld [vmem:[%s2506 + $0x51] sm:$0xff]
      %v2597 = vld [vmem:[%s2506 + $0x61] sm:$0xff]
      %v2598 = vld [vmem:[%s2506 + $0x71] sm:$0xff]
      %2607 = vrot.lane.b32.xlu0 %v2535, 8
      %v2608 = vpop.permute.xlu0 %2607
      %2609 = vrot.lane.b32.xlu0 %v2536, 8
      %v2610 = vpop.permute.xlu0 %2609
      %2611 = vrot.lane.b32.xlu0 %v2537, 8
      %v2612 = vpop.permute.xlu0 %2611
      %2613 = vrot.lane.b32.xlu0 %v2538, 8
      %v2614 = vpop.permute.xlu0 %2613
      %2615 = vrot.lane.b32.xlu0 %v2539, 8
      %v2616 = vpop.permute.xlu0 %2615
      %2617 = vrot.lane.b32.xlu0 %v2540, 8
      %v2618 = vpop.permute.xlu0 %2617
      %2619 = vrot.lane.b32.xlu0 %v2541, 8
      %v2620 = vpop.permute.xlu0 %2619
      %2621 = vrot.lane.b32.xlu0 %v2542, 8
      %v2622 = vpop.permute.xlu0 %2621
      %2639 = vrot.lane.b32.xlu0 %v2543, 16
      %v2640 = vpop.permute.xlu0 %2639
      %2641 = vrot.lane.b32.xlu0 %v2544, 16
      %v2642 = vpop.permute.xlu0 %2641
      %2643 = vrot.lane.b32.xlu0 %v2545, 16
      %v2644 = vpop.permute.xlu0 %2643
      %2645 = vrot.lane.b32.xlu0 %v2546, 16
      %v2646 = vpop.permute.xlu0 %2645
      %2647 = vrot.lane.b32.xlu0 %v2547, 16
      %v2648 = vpop.permute.xlu0 %2647
      %2649 = vrot.lane.b32.xlu0 %v2548, 16
      %v2650 = vpop.permute.xlu0 %2649
      %2651 = vrot.lane.b32.xlu0 %v2549, 16
      %v2652 = vpop.permute.xlu0 %2651
      %2653 = vrot.lane.b32.xlu0 %v2550, 16
      %v2654 = vpop.permute.xlu0 %2653
      %2671 = vrot.lane.b32.xlu0 %v2551, 24
      %v2672 = vpop.permute.xlu0 %2671
      %2673 = vrot.lane.b32.xlu0 %v2552, 24
      %v2674 = vpop.permute.xlu0 %2673
      %2675 = vrot.lane.b32.xlu0 %v2553, 24
      %v2676 = vpop.permute.xlu0 %2675
      %2677 = vrot.lane.b32.xlu0 %v2554, 24
      %v2678 = vpop.permute.xlu0 %2677
      %2679 = vrot.lane.b32.xlu0 %v2555, 24
      %v2680 = vpop.permute.xlu0 %2679
      %2681 = vrot.lane.b32.xlu0 %v2556, 24
      %v2682 = vpop.permute.xlu0 %2681
      %2683 = vrot.lane.b32.xlu0 %v2557, 24
      %v2684 = vpop.permute.xlu0 %2683
      %2685 = vrot.lane.b32.xlu0 %v2558, 24
      %v2686 = vpop.permute.xlu0 %2685
      %2703 = vrot.lane.b32.xlu0 %v2559, 32
      %v2704 = vpop.permute.xlu0 %2703
      %2705 = vrot.lane.b32.xlu0 %v2560, 32
      %v2706 = vpop.permute.xlu0 %2705
      %2707 = vrot.lane.b32.xlu0 %v2561, 32
      %v2708 = vpop.permute.xlu0 %2707
      %2709 = vrot.lane.b32.xlu0 %v2562, 32
      %v2710 = vpop.permute.xlu0 %2709
      %2711 = vrot.lane.b32.xlu0 %v2563, 32
      %v2712 = vpop.permute.xlu0 %2711
      %2713 = vrot.lane.b32.xlu0 %v2564, 32
      %v2714 = vpop.permute.xlu0 %2713
      %2715 = vrot.lane.b32.xlu0 %v2565, 32
      %v2716 = vpop.permute.xlu0 %2715
      %2717 = vrot.lane.b32.xlu0 %v2566, 32
      %v2718 = vpop.permute.xlu0 %2717
      %2735 = vrot.lane.b32.xlu0 %v2567, 40
      %v2736 = vpop.permute.xlu0 %2735
      %2737 = vrot.lane.b32.xlu0 %v2568, 40
      %v2738 = vpop.permute.xlu0 %2737
      %2739 = vrot.lane.b32.xlu0 %v2569, 40
      %v2740 = vpop.permute.xlu0 %2739
      %2741 = vrot.lane.b32.xlu0 %v2570, 40
      %v2742 = vpop.permute.xlu0 %2741
      %2743 = vrot.lane.b32.xlu0 %v2571, 40
      %v2744 = vpop.permute.xlu0 %2743
      %2745 = vrot.lane.b32.xlu0 %v2572, 40
      %v2746 = vpop.permute.xlu0 %2745
      %2747 = vrot.lane.b32.xlu0 %v2573, 40
      %v2748 = vpop.permute.xlu0 %2747
      %2749 = vrot.lane.b32.xlu0 %v2574, 40
      %v2750 = vpop.permute.xlu0 %2749
      %2767 = vrot.lane.b32.xlu0 %v2575, 48
      %v2768 = vpop.permute.xlu0 %2767
      %2769 = vrot.lane.b32.xlu0 %v2576, 48
      %v2770 = vpop.permute.xlu0 %2769
      %2771 = vrot.lane.b32.xlu0 %v2577, 48
      %v2772 = vpop.permute.xlu0 %2771
      %2773 = vrot.lane.b32.xlu0 %v2578, 48
      %v2774 = vpop.permute.xlu0 %2773
      %2775 = vrot.lane.b32.xlu0 %v2579, 48
      %v2776 = vpop.permute.xlu0 %2775
      %2777 = vrot.lane.b32.xlu0 %v2580, 48
      %v2778 = vpop.permute.xlu0 %2777
      %2779 = vrot.lane.b32.xlu0 %v2581, 48
      %v2780 = vpop.permute.xlu0 %2779
      %2781 = vrot.lane.b32.xlu0 %v2582, 48
      %v2782 = vpop.permute.xlu0 %2781
      %2799 = vrot.lane.b32.xlu0 %v2583, 56
      %v2800 = vpop.permute.xlu0 %2799
      %2801 = vrot.lane.b32.xlu0 %v2584, 56
      %v2802 = vpop.permute.xlu0 %2801
      %2803 = vrot.lane.b32.xlu0 %v2585, 56
      %v2804 = vpop.permute.xlu0 %2803
      %2805 = vrot.lane.b32.xlu0 %v2586, 56
      %v2806 = vpop.permute.xlu0 %2805
      %2807 = vrot.lane.b32.xlu0 %v2587, 56
      %v2808 = vpop.permute.xlu0 %2807
      %2809 = vrot.lane.b32.xlu0 %v2588, 56
      %v2810 = vpop.permute.xlu0 %2809
      %2811 = vrot.lane.b32.xlu0 %v2589, 56
      %v2812 = vpop.permute.xlu0 %2811
      %2813 = vrot.lane.b32.xlu0 %v2590, 56
      %v2814 = vpop.permute.xlu0 %2813
      %2831 = vrot.lane.b32.xlu0 %v2591, 64
      %v2832 = vpop.permute.xlu0 %2831
      %2833 = vrot.lane.b32.xlu0 %v2592, 64
      %v2834 = vpop.permute.xlu0 %2833
      %2835 = vrot.lane.b32.xlu0 %v2593, 64
      %v2836 = vpop.permute.xlu0 %2835
      %2837 = vrot.lane.b32.xlu0 %v2594, 64
      %v2838 = vpop.permute.xlu0 %2837
      %2839 = vrot.lane.b32.xlu0 %v2595, 64
      %v2840 = vpop.permute.xlu0 %2839
      %2841 = vrot.lane.b32.xlu0 %v2596, 64
      %v2842 = vpop.permute.xlu0 %2841
      %2843 = vrot.lane.b32.xlu0 %v2597, 64
      %v2844 = vpop.permute.xlu0 %2843
      %2845 = vrot.lane.b32.xlu0 %v2598, 64
      %v2846 = vpop.permute.xlu0 %2845
      %v2855 = vsel %vm409, %v2526, %v2608
      %v2856 = vsel %vm409, %v2527, %v2610
      %v2857 = vsel %vm409, %v2528, %v2612
      %v2858 = vsel %vm409, %v2529, %v2614
      %v2859 = vsel %vm409, %v2530, %v2616
      %v2860 = vsel %vm409, %v2531, %v2618
      %v2861 = vsel %vm409, %v2532, %v2620
      %v2862 = vsel %vm409, %v2533, %v2622
      %v2863 = vsel %vm1269, %v2855, %v2640
      %v2864 = vsel %vm1269, %v2856, %v2642
      %v2865 = vsel %vm1269, %v2857, %v2644
      %v2866 = vsel %vm1269, %v2858, %v2646
      %v2867 = vsel %vm1269, %v2859, %v2648
      %v2868 = vsel %vm1269, %v2860, %v2650
      %v2869 = vsel %vm1269, %v2861, %v2652
      %v2870 = vsel %vm1269, %v2862, %v2654
      %v2871 = vsel %vm1287, %v2863, %v2672
      %v2872 = vsel %vm1287, %v2864, %v2674
      %v2873 = vsel %vm1287, %v2865, %v2676
      %v2874 = vsel %vm1287, %v2866, %v2678
      %v2875 = vsel %vm1287, %v2867, %v2680
      %v2876 = vsel %vm1287, %v2868, %v2682
      %v2877 = vsel %vm1287, %v2869, %v2684
      %v2878 = vsel %vm1287, %v2870, %v2686
      %v2879 = vsel %vm1305, %v2871, %v2704
      %v2880 = vsel %vm1305, %v2872, %v2706
      %v2881 = vsel %vm1305, %v2873, %v2708
      %v2882 = vsel %vm1305, %v2874, %v2710
      %v2883 = vsel %vm1305, %v2875, %v2712
      %v2884 = vsel %vm1305, %v2876, %v2714
      %v2885 = vsel %vm1305, %v2877, %v2716
      %v2886 = vsel %vm1305, %v2878, %v2718
      %vm2887 = vcmask 326656
      %v2888 = vsel %vm2887, %v2879, %v2736
      %v2889 = vsel %vm2887, %v2880, %v2738
      %v2890 = vsel %vm2887, %v2881, %v2740
      %v2891 = vsel %vm2887, %v2882, %v2742
      %v2892 = vsel %vm2887, %v2883, %v2744
      %v2893 = vsel %vm2887, %v2884, %v2746
      %v2894 = vsel %vm2887, %v2885, %v2748
      %v2895 = vsel %vm2887, %v2886, %v2750
      %vm2896 = vcmask 392192
      %v2897 = vsel %vm2896, %v2888, %v2768
      %v2898 = vsel %vm2896, %v2889, %v2770
      %v2899 = vsel %vm2896, %v2890, %v2772
      %v2900 = vsel %vm2896, %v2891, %v2774
      %v2901 = vsel %vm2896, %v2892, %v2776
      %v2902 = vsel %vm2896, %v2893, %v2778
      %v2903 = vsel %vm2896, %v2894, %v2780
      %v2904 = vsel %vm2896, %v2895, %v2782
      %vm2905 = vcmask 457728
      %v2906 = vsel %vm2905, %v2897, %v2800
      %v2907 = vsel %vm2905, %v2898, %v2802
      %v2908 = vsel %vm2905, %v2899, %v2804
      %v2909 = vsel %vm2905, %v2900, %v2806
      %v2910 = vsel %vm2905, %v2901, %v2808
      %v2911 = vsel %vm2905, %v2902, %v2810
      %v2912 = vsel %vm2905, %v2903, %v2812
      %v2913 = vsel %vm2905, %v2904, %v2814
      %vm2914 = vcmask 523264
      %v2915 = vsel %vm2914, %v2906, %v2832
      %v2916 = vsel %vm2914, %v2907, %v2834
      %v2917 = vsel %vm2914, %v2908, %v2836
      %v2918 = vsel %vm2914, %v2909, %v2838
      %v2919 = vsel %vm2914, %v2910, %v2840
      %v2920 = vsel %vm2914, %v2911, %v2842
      %v2921 = vsel %vm2914, %v2912, %v2844
      %v2922 = vsel %vm2914, %v2913, %v2846
      %v2923 = vld [vmem:[%s2534 + $0x2] sm:$0xff]
      %v2924 = vld [vmem:[%s2534 + $0x12] sm:$0xff]
      %v2925 = vld [vmem:[%s2534 + $0x22] sm:$0xff]
      %v2926 = vld [vmem:[%s2534 + $0x32] sm:$0xff]
      %v2927 = vld [vmem:[%s2534 + $0x42] sm:$0xff]
      %v2928 = vld [vmem:[%s2534 + $0x52] sm:$0xff]
      %v2929 = vld [vmem:[%s2534 + $0x62] sm:$0xff]
      %v2930 = vld [vmem:[%s2534 + $0x72] sm:$0xff]
      %v2931 = vld [vmem:[%s2479 + $0x2] sm:$0xff]
      %v2932 = vld [vmem:[%s2479 + $0x12] sm:$0xff]
      %v2933 = vld [vmem:[%s2479 + $0x22] sm:$0xff]
      %v2934 = vld [vmem:[%s2479 + $0x32] sm:$0xff]
      %v2935 = vld [vmem:[%s2479 + $0x42] sm:$0xff]
      %v2936 = vld [vmem:[%s2479 + $0x52] sm:$0xff]
      %v2937 = vld [vmem:[%s2479 + $0x62] sm:$0xff]
      %v2938 = vld [vmem:[%s2479 + $0x72] sm:$0xff]
      %v2939 = vld [vmem:[%s2497 + $0x2] sm:$0xff]
      %v2940 = vld [vmem:[%s2497 + $0x12] sm:$0xff]
      %v2941 = vld [vmem:[%s2497 + $0x22] sm:$0xff]
      %v2942 = vld [vmem:[%s2497 + $0x32] sm:$0xff]
      %v2943 = vld [vmem:[%s2497 + $0x42] sm:$0xff]
      %v2944 = vld [vmem:[%s2497 + $0x52] sm:$0xff]
      %v2945 = vld [vmem:[%s2497 + $0x62] sm:$0xff]
      %v2946 = vld [vmem:[%s2497 + $0x72] sm:$0xff]
      %2947 = vrot.lane.b32.xlu0 %v2543, 8
      %v2948 = vpop.permute.xlu0 %2947
      %2949 = vrot.lane.b32.xlu0 %v2544, 8
      %v2950 = vpop.permute.xlu0 %2949
      %2951 = vrot.lane.b32.xlu0 %v2545, 8
      %v2952 = vpop.permute.xlu0 %2951
      %2953 = vrot.lane.b32.xlu0 %v2546, 8
      %v2954 = vpop.permute.xlu0 %2953
      %2955 = vrot.lane.b32.xlu0 %v2547, 8
      %v2956 = vpop.permute.xlu0 %2955
      %2957 = vrot.lane.b32.xlu0 %v2548, 8
      %v2958 = vpop.permute.xlu0 %2957
      %2959 = vrot.lane.b32.xlu0 %v2549, 8
      %v2960 = vpop.permute.xlu0 %2959
      %2961 = vrot.lane.b32.xlu0 %v2550, 8
      %v2962 = vpop.permute.xlu0 %2961
      %2979 = vrot.lane.b32.xlu0 %v2923, 16
      %v2980 = vpop.permute.xlu0 %2979
      %2981 = vrot.lane.b32.xlu0 %v2924, 16
      %v2982 = vpop.permute.xlu0 %2981
      %2983 = vrot.lane.b32.xlu0 %v2925, 16
      %v2984 = vpop.permute.xlu0 %2983
      %2985 = vrot.lane.b32.xlu0 %v2926, 16
      %v2986 = vpop.permute.xlu0 %2985
      %2987 = vrot.lane.b32.xlu0 %v2927, 16
      %v2988 = vpop.permute.xlu0 %2987
      %2989 = vrot.lane.b32.xlu0 %v2928, 16
      %v2990 = vpop.permute.xlu0 %2989
      %2991 = vrot.lane.b32.xlu0 %v2929, 16
      %v2992 = vpop.permute.xlu0 %2991
      %2993 = vrot.lane.b32.xlu0 %v2930, 16
      %v2994 = vpop.permute.xlu0 %2993
      %3003 = vrot.lane.b32.xlu0 %v2559, 24
      %v3004 = vpop.permute.xlu0 %3003
      %3005 = vrot.lane.b32.xlu0 %v2560, 24
      %v3006 = vpop.permute.xlu0 %3005
      %3007 = vrot.lane.b32.xlu0 %v2561, 24
      %v3008 = vpop.permute.xlu0 %3007
      %3009 = vrot.lane.b32.xlu0 %v2562, 24
      %v3010 = vpop.permute.xlu0 %3009
      %3011 = vrot.lane.b32.xlu0 %v2563, 24
      %v3012 = vpop.permute.xlu0 %3011
      %3013 = vrot.lane.b32.xlu0 %v2564, 24
      %v3014 = vpop.permute.xlu0 %3013
      %3015 = vrot.lane.b32.xlu0 %v2565, 24
      %v3016 = vpop.permute.xlu0 %3015
      %3017 = vrot.lane.b32.xlu0 %v2566, 24
      %v3018 = vpop.permute.xlu0 %3017
      %3027 = vrot.lane.b32.xlu0 %v2567, 32
      %v3028 = vpop.permute.xlu0 %3027
      %3029 = vrot.lane.b32.xlu0 %v2568, 32
      %v3030 = vpop.permute.xlu0 %3029
      %3031 = vrot.lane.b32.xlu0 %v2569, 32
      %v3032 = vpop.permute.xlu0 %3031
      %3033 = vrot.lane.b32.xlu0 %v2570, 32
      %v3034 = vpop.permute.xlu0 %3033
      %3035 = vrot.lane.b32.xlu0 %v2571, 32
      %v3036 = vpop.permute.xlu0 %3035
      %3037 = vrot.lane.b32.xlu0 %v2572, 32
      %v3038 = vpop.permute.xlu0 %3037
      %3039 = vrot.lane.b32.xlu0 %v2573, 32
      %v3040 = vpop.permute.xlu0 %3039
      %3041 = vrot.lane.b32.xlu0 %v2574, 32
      %v3042 = vpop.permute.xlu0 %3041
      %3059 = vrot.lane.b32.xlu0 %v2931, 40
      %v3060 = vpop.permute.xlu0 %3059
      %3061 = vrot.lane.b32.xlu0 %v2932, 40
      %v3062 = vpop.permute.xlu0 %3061
      %3063 = vrot.lane.b32.xlu0 %v2933, 40
      %v3064 = vpop.permute.xlu0 %3063
      %3065 = vrot.lane.b32.xlu0 %v2934, 40
      %v3066 = vpop.permute.xlu0 %3065
      %3067 = vrot.lane.b32.xlu0 %v2935, 40
      %v3068 = vpop.permute.xlu0 %3067
      %3069 = vrot.lane.b32.xlu0 %v2936, 40
      %v3070 = vpop.permute.xlu0 %3069
      %3071 = vrot.lane.b32.xlu0 %v2937, 40
      %v3072 = vpop.permute.xlu0 %3071
      %3073 = vrot.lane.b32.xlu0 %v2938, 40
      %v3074 = vpop.permute.xlu0 %3073
      %3083 = vrot.lane.b32.xlu0 %v2583, 48
      %v3084 = vpop.permute.xlu0 %3083
      %3085 = vrot.lane.b32.xlu0 %v2584, 48
      %v3086 = vpop.permute.xlu0 %3085
      %3087 = vrot.lane.b32.xlu0 %v2585, 48
      %v3088 = vpop.permute.xlu0 %3087
      %3089 = vrot.lane.b32.xlu0 %v2586, 48
      %v3090 = vpop.permute.xlu0 %3089
      %3091 = vrot.lane.b32.xlu0 %v2587, 48
      %v3092 = vpop.permute.xlu0 %3091
      %3093 = vrot.lane.b32.xlu0 %v2588, 48
      %v3094 = vpop.permute.xlu0 %3093
      %3095 = vrot.lane.b32.xlu0 %v2589, 48
      %v3096 = vpop.permute.xlu0 %3095
      %3097 = vrot.lane.b32.xlu0 %v2590, 48
      %v3098 = vpop.permute.xlu0 %3097
      %3107 = vrot.lane.b32.xlu0 %v2591, 56
      %v3108 = vpop.permute.xlu0 %3107
      %3109 = vrot.lane.b32.xlu0 %v2592, 56
      %v3110 = vpop.permute.xlu0 %3109
      %3111 = vrot.lane.b32.xlu0 %v2593, 56
      %v3112 = vpop.permute.xlu0 %3111
      %3113 = vrot.lane.b32.xlu0 %v2594, 56
      %v3114 = vpop.permute.xlu0 %3113
      %3115 = vrot.lane.b32.xlu0 %v2595, 56
      %v3116 = vpop.permute.xlu0 %3115
      %3117 = vrot.lane.b32.xlu0 %v2596, 56
      %v3118 = vpop.permute.xlu0 %3117
      %3119 = vrot.lane.b32.xlu0 %v2597, 56
      %v3120 = vpop.permute.xlu0 %3119
      %3121 = vrot.lane.b32.xlu0 %v2598, 56
      %v3122 = vpop.permute.xlu0 %3121
      %3139 = vrot.lane.b32.xlu0 %v2939, 64
      %v3140 = vpop.permute.xlu0 %3139
      %3141 = vrot.lane.b32.xlu0 %v2940, 64
      %v3142 = vpop.permute.xlu0 %3141
      %3143 = vrot.lane.b32.xlu0 %v2941, 64
      %v3144 = vpop.permute.xlu0 %3143
      %3145 = vrot.lane.b32.xlu0 %v2942, 64
      %v3146 = vpop.permute.xlu0 %3145
      %3147 = vrot.lane.b32.xlu0 %v2943, 64
      %v3148 = vpop.permute.xlu0 %3147
      %3149 = vrot.lane.b32.xlu0 %v2944, 64
      %v3150 = vpop.permute.xlu0 %3149
      %3151 = vrot.lane.b32.xlu0 %v2945, 64
      %v3152 = vpop.permute.xlu0 %3151
      %3153 = vrot.lane.b32.xlu0 %v2946, 64
      %v3154 = vpop.permute.xlu0 %3153
      %v3163 = vsel %vm409, %v2535, %v2948
      %v3164 = vsel %vm409, %v2536, %v2950
      %v3165 = vsel %vm409, %v2537, %v2952
      %v3166 = vsel %vm409, %v2538, %v2954
      %v3167 = vsel %vm409, %v2539, %v2956
      %v3168 = vsel %vm409, %v2540, %v2958
      %v3169 = vsel %vm409, %v2541, %v2960
      %v3170 = vsel %vm409, %v2542, %v2962
      %v3171 = vsel %vm1269, %v3163, %v2980
      %v3172 = vsel %vm1269, %v3164, %v2982
      %v3173 = vsel %vm1269, %v3165, %v2984
      %v3174 = vsel %vm1269, %v3166, %v2986
      %v3175 = vsel %vm1269, %v3167, %v2988
      %v3176 = vsel %vm1269, %v3168, %v2990
      %v3177 = vsel %vm1269, %v3169, %v2992
      %v3178 = vsel %vm1269, %v3170, %v2994
      %v3179 = vsel %vm1287, %v3171, %v3004
      %v3180 = vsel %vm1287, %v3172, %v3006
      %v3181 = vsel %vm1287, %v3173, %v3008
      %v3182 = vsel %vm1287, %v3174, %v3010
      %v3183 = vsel %vm1287, %v3175, %v3012
      %v3184 = vsel %vm1287, %v3176, %v3014
      %v3185 = vsel %vm1287, %v3177, %v3016
      %v3186 = vsel %vm1287, %v3178, %v3018
      %v3187 = vsel %vm1305, %v3179, %v3028
      %v3188 = vsel %vm1305, %v3180, %v3030
      %v3189 = vsel %vm1305, %v3181, %v3032
      %v3190 = vsel %vm1305, %v3182, %v3034
      %v3191 = vsel %vm1305, %v3183, %v3036
      %v3192 = vsel %vm1305, %v3184, %v3038
      %v3193 = vsel %vm1305, %v3185, %v3040
      %v3194 = vsel %vm1305, %v3186, %v3042
      %v3195 = vsel %vm2887, %v3187, %v3060
      %v3196 = vsel %vm2887, %v3188, %v3062
      %v3197 = vsel %vm2887, %v3189, %v3064
      %v3198 = vsel %vm2887, %v3190, %v3066
      %v3199 = vsel %vm2887, %v3191, %v3068
      %v3200 = vsel %vm2887, %v3192, %v3070
      %v3201 = vsel %vm2887, %v3193, %v3072
      %v3202 = vsel %vm2887, %v3194, %v3074
      %v3203 = vsel %vm2896, %v3195, %v3084
      %v3204 = vsel %vm2896, %v3196, %v3086
      %v3205 = vsel %vm2896, %v3197, %v3088
      %v3206 = vsel %vm2896, %v3198, %v3090
      %v3207 = vsel %vm2896, %v3199, %v3092
      %v3208 = vsel %vm2896, %v3200, %v3094
      %v3209 = vsel %vm2896, %v3201, %v3096
      %v3210 = vsel %vm2896, %v3202, %v3098
      %v3211 = vsel %vm2905, %v3203, %v3108
      %v3212 = vsel %vm2905, %v3204, %v3110
      %v3213 = vsel %vm2905, %v3205, %v3112
      %v3214 = vsel %vm2905, %v3206, %v3114
      %v3215 = vsel %vm2905, %v3207, %v3116
      %v3216 = vsel %vm2905, %v3208, %v3118
      %v3217 = vsel %vm2905, %v3209, %v3120
      %v3218 = vsel %vm2905, %v3210, %v3122
      %v3219 = vsel %vm2914, %v3211, %v3140
      %v3220 = vsel %vm2914, %v3212, %v3142
      %v3221 = vsel %vm2914, %v3213, %v3144
      %v3222 = vsel %vm2914, %v3214, %v3146
      %v3223 = vsel %vm2914, %v3215, %v3148
      %v3224 = vsel %vm2914, %v3216, %v3150
      %v3225 = vsel %vm2914, %v3217, %v3152
      %v3226 = vsel %vm2914, %v3218, %v3154
      %s3227 = scalar_lea.vmem [#allocation3], 192
      %v3228 = vld [vmem:[%s3227] sm:$0xff]
      %v3229 = vld [vmem:[%s3227 + $0x10] sm:$0xff]
      %v3230 = vld [vmem:[%s3227 + $0x20] sm:$0xff]
      %v3231 = vld [vmem:[%s3227 + $0x30] sm:$0xff]
      %v3232 = vld [vmem:[%s3227 + $0x40] sm:$0xff]
      %v3233 = vld [vmem:[%s3227 + $0x50] sm:$0xff]
      %v3234 = vld [vmem:[%s3227 + $0x60] sm:$0xff]
      %v3235 = vld [vmem:[%s3227 + $0x70] sm:$0xff]
      %s3236 = scalar_lea.vmem [#allocation3], 32
      %v3237 = vld [vmem:[%s3236 + $0x1] sm:$0xff]
      %v3238 = vld [vmem:[%s3236 + $0x11] sm:$0xff]
      %v3239 = vld [vmem:[%s3236 + $0x21] sm:$0xff]
      %v3240 = vld [vmem:[%s3236 + $0x31] sm:$0xff]
      %v3241 = vld [vmem:[%s3236 + $0x41] sm:$0xff]
      %v3242 = vld [vmem:[%s3236 + $0x51] sm:$0xff]
      %v3243 = vld [vmem:[%s3236 + $0x61] sm:$0xff]
      %v3244 = vld [vmem:[%s3236 + $0x71] sm:$0xff]
      %v3245 = vld [vmem:[%s3227 + $0x1] sm:$0xff]
      %v3246 = vld [vmem:[%s3227 + $0x11] sm:$0xff]
      %v3247 = vld [vmem:[%s3227 + $0x21] sm:$0xff]
      %v3248 = vld [vmem:[%s3227 + $0x31] sm:$0xff]
      %v3249 = vld [vmem:[%s3227 + $0x41] sm:$0xff]
      %v3250 = vld [vmem:[%s3227 + $0x51] sm:$0xff]
      %v3251 = vld [vmem:[%s3227 + $0x61] sm:$0xff]
      %v3252 = vld [vmem:[%s3227 + $0x71] sm:$0xff]
      %3253 = vrot.lane.b32.xlu0 %v2559, 8
      %v3254 = vpop.permute.xlu0 %3253
      %3255 = vrot.lane.b32.xlu0 %v2560, 8
      %v3256 = vpop.permute.xlu0 %3255
      %3257 = vrot.lane.b32.xlu0 %v2561, 8
      %v3258 = vpop.permute.xlu0 %3257
      %3259 = vrot.lane.b32.xlu0 %v2562, 8
      %v3260 = vpop.permute.xlu0 %3259
      %3261 = vrot.lane.b32.xlu0 %v2563, 8
      %v3262 = vpop.permute.xlu0 %3261
      %3263 = vrot.lane.b32.xlu0 %v2564, 8
      %v3264 = vpop.permute.xlu0 %3263
      %3265 = vrot.lane.b32.xlu0 %v2565, 8
      %v3266 = vpop.permute.xlu0 %3265
      %3267 = vrot.lane.b32.xlu0 %v2566, 8
      %v3268 = vpop.permute.xlu0 %3267
      %3277 = vrot.lane.b32.xlu0 %v2567, 16
      %v3278 = vpop.permute.xlu0 %3277
      %3279 = vrot.lane.b32.xlu0 %v2568, 16
      %v3280 = vpop.permute.xlu0 %3279
      %3281 = vrot.lane.b32.xlu0 %v2569, 16
      %v3282 = vpop.permute.xlu0 %3281
      %3283 = vrot.lane.b32.xlu0 %v2570, 16
      %v3284 = vpop.permute.xlu0 %3283
      %3285 = vrot.lane.b32.xlu0 %v2571, 16
      %v3286 = vpop.permute.xlu0 %3285
      %3287 = vrot.lane.b32.xlu0 %v2572, 16
      %v3288 = vpop.permute.xlu0 %3287
      %3289 = vrot.lane.b32.xlu0 %v2573, 16
      %v3290 = vpop.permute.xlu0 %3289
      %3291 = vrot.lane.b32.xlu0 %v2574, 16
      %v3292 = vpop.permute.xlu0 %3291
      %3301 = vrot.lane.b32.xlu0 %v2575, 24
      %v3302 = vpop.permute.xlu0 %3301
      %3303 = vrot.lane.b32.xlu0 %v2576, 24
      %v3304 = vpop.permute.xlu0 %3303
      %3305 = vrot.lane.b32.xlu0 %v2577, 24
      %v3306 = vpop.permute.xlu0 %3305
      %3307 = vrot.lane.b32.xlu0 %v2578, 24
      %v3308 = vpop.permute.xlu0 %3307
      %3309 = vrot.lane.b32.xlu0 %v2579, 24
      %v3310 = vpop.permute.xlu0 %3309
      %3311 = vrot.lane.b32.xlu0 %v2580, 24
      %v3312 = vpop.permute.xlu0 %3311
      %3313 = vrot.lane.b32.xlu0 %v2581, 24
      %v3314 = vpop.permute.xlu0 %3313
      %3315 = vrot.lane.b32.xlu0 %v2582, 24
      %v3316 = vpop.permute.xlu0 %3315
      %3325 = vrot.lane.b32.xlu0 %v2583, 32
      %v3326 = vpop.permute.xlu0 %3325
      %3327 = vrot.lane.b32.xlu0 %v2584, 32
      %v3328 = vpop.permute.xlu0 %3327
      %3329 = vrot.lane.b32.xlu0 %v2585, 32
      %v3330 = vpop.permute.xlu0 %3329
      %3331 = vrot.lane.b32.xlu0 %v2586, 32
      %v3332 = vpop.permute.xlu0 %3331
      %3333 = vrot.lane.b32.xlu0 %v2587, 32
      %v3334 = vpop.permute.xlu0 %3333
      %3335 = vrot.lane.b32.xlu0 %v2588, 32
      %v3336 = vpop.permute.xlu0 %3335
      %3337 = vrot.lane.b32.xlu0 %v2589, 32
      %v3338 = vpop.permute.xlu0 %3337
      %3339 = vrot.lane.b32.xlu0 %v2590, 32
      %v3340 = vpop.permute.xlu0 %3339
      %3349 = vrot.lane.b32.xlu0 %v2591, 40
      %v3350 = vpop.permute.xlu0 %3349
      %3351 = vrot.lane.b32.xlu0 %v2592, 40
      %v3352 = vpop.permute.xlu0 %3351
      %3353 = vrot.lane.b32.xlu0 %v2593, 40
      %v3354 = vpop.permute.xlu0 %3353
      %3355 = vrot.lane.b32.xlu0 %v2594, 40
      %v3356 = vpop.permute.xlu0 %3355
      %3357 = vrot.lane.b32.xlu0 %v2595, 40
      %v3358 = vpop.permute.xlu0 %3357
      %3359 = vrot.lane.b32.xlu0 %v2596, 40
      %v3360 = vpop.permute.xlu0 %3359
      %3361 = vrot.lane.b32.xlu0 %v2597, 40
      %v3362 = vpop.permute.xlu0 %3361
      %3363 = vrot.lane.b32.xlu0 %v2598, 40
      %v3364 = vpop.permute.xlu0 %3363
      %3381 = vrot.lane.b32.xlu0 %v3228, 48
      %v3382 = vpop.permute.xlu0 %3381
      %3383 = vrot.lane.b32.xlu0 %v3229, 48
      %v3384 = vpop.permute.xlu0 %3383
      %3385 = vrot.lane.b32.xlu0 %v3230, 48
      %v3386 = vpop.permute.xlu0 %3385
      %3387 = vrot.lane.b32.xlu0 %v3231, 48
      %v3388 = vpop.permute.xlu0 %3387
      %3389 = vrot.lane.b32.xlu0 %v3232, 48
      %v3390 = vpop.permute.xlu0 %3389
      %3391 = vrot.lane.b32.xlu0 %v3233, 48
      %v3392 = vpop.permute.xlu0 %3391
      %3393 = vrot.lane.b32.xlu0 %v3234, 48
      %v3394 = vpop.permute.xlu0 %3393
      %3395 = vrot.lane.b32.xlu0 %v3235, 48
      %v3396 = vpop.permute.xlu0 %3395
      %3413 = vrot.lane.b32.xlu0 %v3237, 56
      %v3414 = vpop.permute.xlu0 %3413
      %3415 = vrot.lane.b32.xlu0 %v3238, 56
      %v3416 = vpop.permute.xlu0 %3415
      %3417 = vrot.lane.b32.xlu0 %v3239, 56
      %v3418 = vpop.permute.xlu0 %3417
      %3419 = vrot.lane.b32.xlu0 %v3240, 56
      %v3420 = vpop.permute.xlu0 %3419
      %3421 = vrot.lane.b32.xlu0 %v3241, 56
      %v3422 = vpop.permute.xlu0 %3421
      %3423 = vrot.lane.b32.xlu0 %v3242, 56
      %v3424 = vpop.permute.xlu0 %3423
      %3425 = vrot.lane.b32.xlu0 %v3243, 56
      %v3426 = vpop.permute.xlu0 %3425
      %3427 = vrot.lane.b32.xlu0 %v3244, 56
      %v3428 = vpop.permute.xlu0 %3427
      %3445 = vrot.lane.b32.xlu0 %v3245, 64
      %v3446 = vpop.permute.xlu0 %3445
      %3447 = vrot.lane.b32.xlu0 %v3246, 64
      %v3448 = vpop.permute.xlu0 %3447
      %3449 = vrot.lane.b32.xlu0 %v3247, 64
      %v3450 = vpop.permute.xlu0 %3449
      %3451 = vrot.lane.b32.xlu0 %v3248, 64
      %v3452 = vpop.permute.xlu0 %3451
      %3453 = vrot.lane.b32.xlu0 %v3249, 64
      %v3454 = vpop.permute.xlu0 %3453
      %3455 = vrot.lane.b32.xlu0 %v3250, 64
      %v3456 = vpop.permute.xlu0 %3455
      %3457 = vrot.lane.b32.xlu0 %v3251, 64
      %v3458 = vpop.permute.xlu0 %3457
      %3459 = vrot.lane.b32.xlu0 %v3252, 64
      %v3460 = vpop.permute.xlu0 %3459
      %v3469 = vsel %vm409, %v2551, %v3254
      %v3470 = vsel %vm409, %v2552, %v3256
      %v3471 = vsel %vm409, %v2553, %v3258
      %v3472 = vsel %vm409, %v2554, %v3260
      %v3473 = vsel %vm409, %v2555, %v3262
      %v3474 = vsel %vm409, %v2556, %v3264
      %v3475 = vsel %vm409, %v2557, %v3266
      %v3476 = vsel %vm409, %v2558, %v3268
      %v3477 = vsel %vm1269, %v3469, %v3278
      %v3478 = vsel %vm1269, %v3470, %v3280
      %v3479 = vsel %vm1269, %v3471, %v3282
      %v3480 = vsel %vm1269, %v3472, %v3284
      %v3481 = vsel %vm1269, %v3473, %v3286
      %v3482 = vsel %vm1269, %v3474, %v3288
      %v3483 = vsel %vm1269, %v3475, %v3290
      %v3484 = vsel %vm1269, %v3476, %v3292
      %v3485 = vsel %vm1287, %v3477, %v3302
      %v3486 = vsel %vm1287, %v3478, %v3304
      %v3487 = vsel %vm1287, %v3479, %v3306
      %v3488 = vsel %vm1287, %v3480, %v3308
      %v3489 = vsel %vm1287, %v3481, %v3310
      %v3490 = vsel %vm1287, %v3482, %v3312
      %v3491 = vsel %vm1287, %v3483, %v3314
      %v3492 = vsel %vm1287, %v3484, %v3316
      %v3493 = vsel %vm1305, %v3485, %v3326
      %v3494 = vsel %vm1305, %v3486, %v3328
      %v3495 = vsel %vm1305, %v3487, %v3330
      %v3496 = vsel %vm1305, %v3488, %v3332
      %v3497 = vsel %vm1305, %v3489, %v3334
      %v3498 = vsel %vm1305, %v3490, %v3336
      %v3499 = vsel %vm1305, %v3491, %v3338
      %v3500 = vsel %vm1305, %v3492, %v3340
      %v3501 = vsel %vm2887, %v3493, %v3350
      %v3502 = vsel %vm2887, %v3494, %v3352
      %v3503 = vsel %vm2887, %v3495, %v3354
      %v3504 = vsel %vm2887, %v3496, %v3356
      %v3505 = vsel %vm2887, %v3497, %v3358
      %v3506 = vsel %vm2887, %v3498, %v3360
      %v3507 = vsel %vm2887, %v3499, %v3362
      %v3508 = vsel %vm2887, %v3500, %v3364
      %v3509 = vsel %vm2896, %v3501, %v3382
      %v3510 = vsel %vm2896, %v3502, %v3384
      %v3511 = vsel %vm2896, %v3503, %v3386
      %v3512 = vsel %vm2896, %v3504, %v3388
      %v3513 = vsel %vm2896, %v3505, %v3390
      %v3514 = vsel %vm2896, %v3506, %v3392
      %v3515 = vsel %vm2896, %v3507, %v3394
      %v3516 = vsel %vm2896, %v3508, %v3396
      %v3517 = vsel %vm2905, %v3509, %v3414
      %v3518 = vsel %vm2905, %v3510, %v3416
      %v3519 = vsel %vm2905, %v3511, %v3418
      %v3520 = vsel %vm2905, %v3512, %v3420
      %v3521 = vsel %vm2905, %v3513, %v3422
      %v3522 = vsel %vm2905, %v3514, %v3424
      %v3523 = vsel %vm2905, %v3515, %v3426
      %v3524 = vsel %vm2905, %v3516, %v3428
      %v3525 = vsel %vm2914, %v3517, %v3446
      %v3526 = vsel %vm2914, %v3518, %v3448
      %v3527 = vsel %vm2914, %v3519, %v3450
      %v3528 = vsel %vm2914, %v3520, %v3452
      %v3529 = vsel %vm2914, %v3521, %v3454
      %v3530 = vsel %vm2914, %v3522, %v3456
      %v3531 = vsel %vm2914, %v3523, %v3458
      %v3532 = vsel %vm2914, %v3524, %v3460
      %v3533 = vld [vmem:[%s3236 + $0x2] sm:$0xff]
      %v3534 = vld [vmem:[%s3236 + $0x12] sm:$0xff]
      %v3535 = vld [vmem:[%s3236 + $0x22] sm:$0xff]
      %v3536 = vld [vmem:[%s3236 + $0x32] sm:$0xff]
      %v3537 = vld [vmem:[%s3236 + $0x42] sm:$0xff]
      %v3538 = vld [vmem:[%s3236 + $0x52] sm:$0xff]
      %v3539 = vld [vmem:[%s3236 + $0x62] sm:$0xff]
      %v3540 = vld [vmem:[%s3236 + $0x72] sm:$0xff]
      %3541 = vrot.lane.b32.xlu0 %v2567, 8
      %v3542 = vpop.permute.xlu0 %3541
      %3543 = vrot.lane.b32.xlu0 %v2568, 8
      %v3544 = vpop.permute.xlu0 %3543
      %3545 = vrot.lane.b32.xlu0 %v2569, 8
      %v3546 = vpop.permute.xlu0 %3545
      %3547 = vrot.lane.b32.xlu0 %v2570, 8
      %v3548 = vpop.permute.xlu0 %3547
      %3549 = vrot.lane.b32.xlu0 %v2571, 8
      %v3550 = vpop.permute.xlu0 %3549
      %3551 = vrot.lane.b32.xlu0 %v2572, 8
      %v3552 = vpop.permute.xlu0 %3551
      %3553 = vrot.lane.b32.xlu0 %v2573, 8
      %v3554 = vpop.permute.xlu0 %3553
      %3555 = vrot.lane.b32.xlu0 %v2574, 8
      %v3556 = vpop.permute.xlu0 %3555
      %3565 = vrot.lane.b32.xlu0 %v2931, 16
      %v3566 = vpop.permute.xlu0 %3565
      %3567 = vrot.lane.b32.xlu0 %v2932, 16
      %v3568 = vpop.permute.xlu0 %3567
      %3569 = vrot.lane.b32.xlu0 %v2933, 16
      %v3570 = vpop.permute.xlu0 %3569
      %3571 = vrot.lane.b32.xlu0 %v2934, 16
      %v3572 = vpop.permute.xlu0 %3571
      %3573 = vrot.lane.b32.xlu0 %v2935, 16
      %v3574 = vpop.permute.xlu0 %3573
      %3575 = vrot.lane.b32.xlu0 %v2936, 16
      %v3576 = vpop.permute.xlu0 %3575
      %3577 = vrot.lane.b32.xlu0 %v2937, 16
      %v3578 = vpop.permute.xlu0 %3577
      %3579 = vrot.lane.b32.xlu0 %v2938, 16
      %v3580 = vpop.permute.xlu0 %3579
      %3589 = vrot.lane.b32.xlu0 %v2583, 24
      %v3590 = vpop.permute.xlu0 %3589
      %3591 = vrot.lane.b32.xlu0 %v2584, 24
      %v3592 = vpop.permute.xlu0 %3591
      %3593 = vrot.lane.b32.xlu0 %v2585, 24
      %v3594 = vpop.permute.xlu0 %3593
      %3595 = vrot.lane.b32.xlu0 %v2586, 24
      %v3596 = vpop.permute.xlu0 %3595
      %3597 = vrot.lane.b32.xlu0 %v2587, 24
      %v3598 = vpop.permute.xlu0 %3597
      %3599 = vrot.lane.b32.xlu0 %v2588, 24
      %v3600 = vpop.permute.xlu0 %3599
      %3601 = vrot.lane.b32.xlu0 %v2589, 24
      %v3602 = vpop.permute.xlu0 %3601
      %3603 = vrot.lane.b32.xlu0 %v2590, 24
      %v3604 = vpop.permute.xlu0 %3603
      %3613 = vrot.lane.b32.xlu0 %v2591, 32
      %v3614 = vpop.permute.xlu0 %3613
      %3615 = vrot.lane.b32.xlu0 %v2592, 32
      %v3616 = vpop.permute.xlu0 %3615
      %3617 = vrot.lane.b32.xlu0 %v2593, 32
      %v3618 = vpop.permute.xlu0 %3617
      %3619 = vrot.lane.b32.xlu0 %v2594, 32
      %v3620 = vpop.permute.xlu0 %3619
      %3621 = vrot.lane.b32.xlu0 %v2595, 32
      %v3622 = vpop.permute.xlu0 %3621
      %3623 = vrot.lane.b32.xlu0 %v2596, 32
      %v3624 = vpop.permute.xlu0 %3623
      %3625 = vrot.lane.b32.xlu0 %v2597, 32
      %v3626 = vpop.permute.xlu0 %3625
      %3627 = vrot.lane.b32.xlu0 %v2598, 32
      %v3628 = vpop.permute.xlu0 %3627
      %3637 = vrot.lane.b32.xlu0 %v2939, 40
      %v3638 = vpop.permute.xlu0 %3637
      %3639 = vrot.lane.b32.xlu0 %v2940, 40
      %v3640 = vpop.permute.xlu0 %3639
      %3641 = vrot.lane.b32.xlu0 %v2941, 40
      %v3642 = vpop.permute.xlu0 %3641
      %3643 = vrot.lane.b32.xlu0 %v2942, 40
      %v3644 = vpop.permute.xlu0 %3643
      %3645 = vrot.lane.b32.xlu0 %v2943, 40
      %v3646 = vpop.permute.xlu0 %3645
      %3647 = vrot.lane.b32.xlu0 %v2944, 40
      %v3648 = vpop.permute.xlu0 %3647
      %3649 = vrot.lane.b32.xlu0 %v2945, 40
      %v3650 = vpop.permute.xlu0 %3649
      %3651 = vrot.lane.b32.xlu0 %v2946, 40
      %v3652 = vpop.permute.xlu0 %3651
      %3661 = vrot.lane.b32.xlu0 %v3237, 48
      %v3662 = vpop.permute.xlu0 %3661
      %3663 = vrot.lane.b32.xlu0 %v3238, 48
      %v3664 = vpop.permute.xlu0 %3663
      %3665 = vrot.lane.b32.xlu0 %v3239, 48
      %v3666 = vpop.permute.xlu0 %3665
      %3667 = vrot.lane.b32.xlu0 %v3240, 48
      %v3668 = vpop.permute.xlu0 %3667
      %3669 = vrot.lane.b32.xlu0 %v3241, 48
      %v3670 = vpop.permute.xlu0 %3669
      %3671 = vrot.lane.b32.xlu0 %v3242, 48
      %v3672 = vpop.permute.xlu0 %3671
      %3673 = vrot.lane.b32.xlu0 %v3243, 48
      %v3674 = vpop.permute.xlu0 %3673
      %3675 = vrot.lane.b32.xlu0 %v3244, 48
      %v3676 = vpop.permute.xlu0 %3675
      %3685 = vrot.lane.b32.xlu0 %v3245, 56
      %v3686 = vpop.permute.xlu0 %3685
      %3687 = vrot.lane.b32.xlu0 %v3246, 56
      %v3688 = vpop.permute.xlu0 %3687
      %3689 = vrot.lane.b32.xlu0 %v3247, 56
      %v3690 = vpop.permute.xlu0 %3689
      %3691 = vrot.lane.b32.xlu0 %v3248, 56
      %v3692 = vpop.permute.xlu0 %3691
      %3693 = vrot.lane.b32.xlu0 %v3249, 56
      %v3694 = vpop.permute.xlu0 %3693
      %3695 = vrot.lane.b32.xlu0 %v3250, 56
      %v3696 = vpop.permute.xlu0 %3695
      %3697 = vrot.lane.b32.xlu0 %v3251, 56
      %v3698 = vpop.permute.xlu0 %3697
      %3699 = vrot.lane.b32.xlu0 %v3252, 56
      %v3700 = vpop.permute.xlu0 %3699
      %3717 = vrot.lane.b32.xlu0 %v3533, 64
      %v3718 = vpop.permute.xlu0 %3717
      %3719 = vrot.lane.b32.xlu0 %v3534, 64
      %v3720 = vpop.permute.xlu0 %3719
      %3721 = vrot.lane.b32.xlu0 %v3535, 64
      %v3722 = vpop.permute.xlu0 %3721
      %3723 = vrot.lane.b32.xlu0 %v3536, 64
      %v3724 = vpop.permute.xlu0 %3723
      %3725 = vrot.lane.b32.xlu0 %v3537, 64
      %v3726 = vpop.permute.xlu0 %3725
      %3727 = vrot.lane.b32.xlu0 %v3538, 64
      %v3728 = vpop.permute.xlu0 %3727
      %3729 = vrot.lane.b32.xlu0 %v3539, 64
      %v3730 = vpop.permute.xlu0 %3729
      %3731 = vrot.lane.b32.xlu0 %v3540, 64
      %v3732 = vpop.permute.xlu0 %3731
      %v3741 = vsel %vm409, %v2559, %v3542
      %v3742 = vsel %vm409, %v2560, %v3544
      %v3743 = vsel %vm409, %v2561, %v3546
      %v3744 = vsel %vm409, %v2562, %v3548
      %v3745 = vsel %vm409, %v2563, %v3550
      %v3746 = vsel %vm409, %v2564, %v3552
      %v3747 = vsel %vm409, %v2565, %v3554
      %v3748 = vsel %vm409, %v2566, %v3556
      %v3749 = vsel %vm1269, %v3741, %v3566
      %v3750 = vsel %vm1269, %v3742, %v3568
      %v3751 = vsel %vm1269, %v3743, %v3570
      %v3752 = vsel %vm1269, %v3744, %v3572
      %v3753 = vsel %vm1269, %v3745, %v3574
      %v3754 = vsel %vm1269, %v3746, %v3576
      %v3755 = vsel %vm1269, %v3747, %v3578
      %v3756 = vsel %vm1269, %v3748, %v3580
      %v3757 = vsel %vm1287, %v3749, %v3590
      %v3758 = vsel %vm1287, %v3750, %v3592
      %v3759 = vsel %vm1287, %v3751, %v3594
      %v3760 = vsel %vm1287, %v3752, %v3596
      %v3761 = vsel %vm1287, %v3753, %v3598
      %v3762 = vsel %vm1287, %v3754, %v3600
      %v3763 = vsel %vm1287, %v3755, %v3602
      %v3764 = vsel %vm1287, %v3756, %v3604
      %v3765 = vsel %vm1305, %v3757, %v3614
      %v3766 = vsel %vm1305, %v3758, %v3616
      %v3767 = vsel %vm1305, %v3759, %v3618
      %v3768 = vsel %vm1305, %v3760, %v3620
      %v3769 = vsel %vm1305, %v3761, %v3622
      %v3770 = vsel %vm1305, %v3762, %v3624
      %v3771 = vsel %vm1305, %v3763, %v3626
      %v3772 = vsel %vm1305, %v3764, %v3628
      %v3773 = vsel %vm2887, %v3765, %v3638
      %v3774 = vsel %vm2887, %v3766, %v3640
      %v3775 = vsel %vm2887, %v3767, %v3642
      %v3776 = vsel %vm2887, %v3768, %v3644
      %v3777 = vsel %vm2887, %v3769, %v3646
      %v3778 = vsel %vm2887, %v3770, %v3648
      %v3779 = vsel %vm2887, %v3771, %v3650
      %v3780 = vsel %vm2887, %v3772, %v3652
      %v3781 = vsel %vm2896, %v3773, %v3662
      %v3782 = vsel %vm2896, %v3774, %v3664
      %v3783 = vsel %vm2896, %v3775, %v3666
      %v3784 = vsel %vm2896, %v3776, %v3668
      %v3785 = vsel %vm2896, %v3777, %v3670
      %v3786 = vsel %vm2896, %v3778, %v3672
      %v3787 = vsel %vm2896, %v3779, %v3674
      %v3788 = vsel %vm2896, %v3780, %v3676
      %v3789 = vsel %vm2905, %v3781, %v3686
      %v3790 = vsel %vm2905, %v3782, %v3688
      %v3791 = vsel %vm2905, %v3783, %v3690
      %v3792 = vsel %vm2905, %v3784, %v3692
      %v3793 = vsel %vm2905, %v3785, %v3694
      %v3794 = vsel %vm2905, %v3786, %v3696
      %v3795 = vsel %vm2905, %v3787, %v3698
      %v3796 = vsel %vm2905, %v3788, %v3700
      %v3797 = vsel %vm2914, %v3789, %v3718
      %v3798 = vsel %vm2914, %v3790, %v3720
      %v3799 = vsel %vm2914, %v3791, %v3722
      %v3800 = vsel %vm2914, %v3792, %v3724
      %v3801 = vsel %vm2914, %v3793, %v3726
      %v3802 = vsel %vm2914, %v3794, %v3728
      %v3803 = vsel %vm2914, %v3795, %v3730
      %v3804 = vsel %vm2914, %v3796, %v3732
      %v3805 = vpack.c.bf16 %v2916, %v2915
      %v3806 = vpack.c.bf16 %v2918, %v2917
      %v3807 = vpack.c.bf16 %v2920, %v2919
      %v3808 = vpack.c.bf16 %v2922, %v2921
      %v3809 = vpack.c.bf16 %v3220, %v3219
      %v3810 = vpack.c.bf16 %v3222, %v3221
      %v3811 = vpack.c.bf16 %v3224, %v3223
      %v3812 = vpack.c.bf16 %v3226, %v3225
      %v3813 = vpack.c.bf16 %v3526, %v3525
      %v3814 = vpack.c.bf16 %v3528, %v3527
      %v3815 = vpack.c.bf16 %v3530, %v3529
      %v3816 = vpack.c.bf16 %v3532, %v3531
      %v3817 = vpack.c.bf16 %v3798, %v3797
      %v3818 = vpack.c.bf16 %v3800, %v3799
      %v3819 = vpack.c.bf16 %v3802, %v3801
      %v3820 = vpack.c.bf16 %v3804, %v3803
      %v3822 = vlaneseq
      %v3823 = vshrl.u32 %v3822, 7
      %v3824 = vsub.s32 0, %v3823
      %v3825 = vrot.slane %v2524, %v3824
      %v3836 = vunpack.c.l.b16 %v2515
      %v3837 = vunpack.c.l.b16 %v2516
      %v3838 = vunpack.c.l.b16 %v2517
      %v3839 = vunpack.c.l.b16 %v2518
      %v3840 = vunpack.c.l.b16 %v2519
      %v3841 = vunpack.c.l.b16 %v2520
      %v3842 = vunpack.c.l.b16 %v2521
      %v3843 = vunpack.c.l.b16 %v2522
      %v3844 = vunpack.c.l.b16 %v2523
      %v3845 = vpack.c.b16 %v3837, %v3836
      %v3846 = vpack.c.b16 %v3839, %v3838
      %v3847 = vpack.c.b16 %v3841, %v3840
      %v3848 = vpack.c.b16 %v3843, %v3842
      %v3849 = vpack.c.b16 %v3844, %v3844
      %vm3854 = vcmask 588800
      %v3856 = vsel %vm3854, %v3805, 0
      %v3859 = vsel %vm3854, %v3806, 0
      %v3862 = vsel %vm3854, %v3807, 0
      %v3865 = vsel %vm3854, %v3808, 0
      %v3868 = vsel %vm3854, %v3809, 0
      %v3871 = vsel %vm3854, %v3810, 0
      %v3874 = vsel %vm3854, %v3811, 0
      %v3877 = vsel %vm3854, %v3812, 0
      %v3880 = vsel %vm3854, %v3813, 0
      %v3883 = vsel %vm3854, %v3814, 0
      %v3886 = vsel %vm3854, %v3815, 0
      %v3889 = vsel %vm3854, %v3816, 0
      %v3892 = vsel %vm3854, %v3817, 0
      %v3895 = vsel %vm3854, %v3818, 0
      %v3898 = vsel %vm3854, %v3819, 0
      %v3901 = vsel %vm3854, %v3820, 0
      %v3904 = vsel %vm675, %v3849, 0
      %3906 = vmatprep.subr.bf16.mxu0 0
      %3907 = vmatpush1.bf16.msra.mxu0 %v3845
      %3908 = vmatprep.subr.bf16.mxu0 0
      %3909 = vmatpush1.bf16.msra.mxu0 %v3846
      %3910 = vmatprep.subr.bf16.mxu0 0
      %3911 = vmatpush1.bf16.msra.mxu0 %v3847
      %3912 = vmatprep.subr.bf16.mxu0 0
      %3913 = vmatpush1.bf16.msra.mxu0 %v3848
      %3914 = vmatprep.subr.bf16.mxu0 0
      %3915 = vmatpush1.bf16.msra.mxu0 %v3904
      %3916 = vmatprep.subr.bf16.mxu0 0
      %3917 = vmatpush1.bf16.msra.mxu0 0
      %3918 = vmatprep.subr.bf16.mxu0 0
      %3919 = vmatpush1.bf16.msra.mxu0 0
      %3920 = vmatprep.subr.bf16.mxu0 0
      %3921 = vmatpush1.bf16.msra.mxu0 0
      %3922 = vmatprep.subr.bf16.mxu0 0
      %3923 = vmatpush1.bf16.msra.mxu0 0
      %3924 = vmatprep.subr.bf16.mxu0 0
      %3925 = vmatpush1.bf16.msra.mxu0 0
      %3926 = vmatprep.subr.bf16.mxu0 0
      %3927 = vmatpush1.bf16.msra.mxu0 0
      %3928 = vmatprep.subr.bf16.mxu0 0
      %3929 = vmatpush1.bf16.msra.mxu0 0
      %3930 = vmatprep.subr.bf16.mxu0 0
      %3931 = vmatpush1.bf16.msra.mxu0 0
      %3932 = vmatprep.subr.bf16.mxu0 0
      %3933 = vmatpush1.bf16.msra.mxu0 0
      %3934 = vmatprep.subr.bf16.mxu0 0
      %3935 = vmatpush1.bf16.msra.mxu0 0
      %3936 = vmatprep.subr.bf16.mxu0 0
      %3937 = vmatpush1.bf16.msra.mxu0 0
      %3938 = vmatprep.mubr.bf16.mxu0 0
      %3939 = vmatmul.mubr.bf16.gmra.mrb[0].mxu0 %v3856
      %v3940 = vpop.f32.mrb[0].mxu0
      %v3941 = vadd.f32 %v3825, %v3940
      %v3942 = vpop.f32.mrb[0].mxu0
      %v3943 = vpop.f32.mrb[0].mxu0
      %v3944 = vadd.f32 %v3825, %v3943
      %v3945 = vpop.f32.mrb[0].mxu0
      %3946 = vmatprep.mubr.bf16.mxu0 0
      %3947 = vmatmul.mubr.bf16.gmra.mrb[0].mxu0 %v3859
      %v3948 = vpop.f32.mrb[0].mxu0
      %v3949 = vadd.f32 %v3825, %v3948
      %v3950 = vpop.f32.mrb[0].mxu0
      %v3951 = vpop.f32.mrb[0].mxu0
      %v3952 = vadd.f32 %v3825, %v3951
      %v3953 = vpop.f32.mrb[0].mxu0
      %3954 = vmatprep.mubr.bf16.mxu0 0
      %3955 = vmatmul.mubr.bf16.gmra.mrb[0].mxu0 %v3862
      %v3956 = vpop.f32.mrb[0].mxu0
      %v3957 = vadd.f32 %v3825, %v3956
      %v3958 = vpop.f32.mrb[0].mxu0
      %v3959 = vpop.f32.mrb[0].mxu0
      %v3960 = vadd.f32 %v3825, %v3959
      %v3961 = vpop.f32.mrb[0].mxu0
      %3962 = vmatprep.mubr.bf16.mxu0 0
      %3963 = vmatmul.mubr.bf16.gmra.mrb[0].mxu0 %v3865
      %v3964 = vpop.f32.mrb[0].mxu0
      %v3965 = vadd.f32 %v3825, %v3964
      %v3966 = vpop.f32.mrb[0].mxu0
      %v3967 = vpop.f32.mrb[0].mxu0
      %v3968 = vadd.f32 %v3825, %v3967
      %v3969 = vpop.f32.mrb[0].mxu0
      %3970 = vmatprep.mubr.bf16.mxu0 0
      %3971 = vmatmul.mubr.bf16.gmra.mrb[0].mxu0 %v3868
      %v3972 = vpop.f32.mrb[0].mxu0
      %v3973 = vadd.f32 %v3825, %v3972
      %v3974 = vpop.f32.mrb[0].mxu0
      %v3975 = vpop.f32.mrb[0].mxu0
      %v3976 = vadd.f32 %v3825, %v3975
      %v3977 = vpop.f32.mrb[0].mxu0
      %3978 = vmatprep.mubr.bf16.mxu0 0
      %3979 = vmatmul.mubr.bf16.gmra.mrb[0].mxu0 %v3871
      %v3980 = vpop.f32.mrb[0].mxu0
      %v3981 = vadd.f32 %v3825, %v3980
      %v3982 = vpop.f32.mrb[0].mxu0
      %v3983 = vpop.f32.mrb[0].mxu0
      %v3984 = vadd.f32 %v3825, %v3983
      %v3985 = vpop.f32.mrb[0].mxu0
      %3986 = vmatprep.mubr.bf16.mxu0 0
      %3987 = vmatmul.mubr.bf16.gmra.mrb[0].mxu0 %v3874
      %v3988 = vpop.f32.mrb[0].mxu0
      %v3989 = vadd.f32 %v3825, %v3988
      %v3990 = vpop.f32.mrb[0].mxu0
      %v3991 = vpop.f32.mrb[0].mxu0
      %v3992 = vadd.f32 %v3825, %v3991
      %v3993 = vpop.f32.mrb[0].mxu0
      %3994 = vmatprep.mubr.bf16.mxu0 0
      %3995 = vmatmul.mubr.bf16.gmra.mrb[0].mxu0 %v3877
      %v3996 = vpop.f32.mrb[0].mxu0
      %v3997 = vadd.f32 %v3825, %v3996
      %v3998 = vpop.f32.mrb[0].mxu0
      %v3999 = vpop.f32.mrb[0].mxu0
      %v4000 = vadd.f32 %v3825, %v3999
      %v4001 = vpop.f32.mrb[0].mxu0
      %4002 = vmatprep.mubr.bf16.mxu0 0
      %4003 = vmatmul.mubr.bf16.gmra.mrb[0].mxu0 %v3880
      %v4004 = vpop.f32.mrb[0].mxu0
      %v4005 = vadd.f32 %v3825, %v4004
      %v4006 = vpop.f32.mrb[0].mxu0
      %v4007 = vpop.f32.mrb[0].mxu0
      %v4008 = vadd.f32 %v3825, %v4007
      %v4009 = vpop.f32.mrb[0].mxu0
      %4010 = vmatprep.mubr.bf16.mxu0 0
      %4011 = vmatmul.mubr.bf16.gmra.mrb[0].mxu0 %v3883
      %v4012 = vpop.f32.mrb[0].mxu0
      %v4013 = vadd.f32 %v3825, %v4012
      %v4014 = vpop.f32.mrb[0].mxu0
      %v4015 = vpop.f32.mrb[0].mxu0
      %v4016 = vadd.f32 %v3825, %v4015
      %v4017 = vpop.f32.mrb[0].mxu0
      %4018 = vmatprep.mubr.bf16.mxu0 0
      %4019 = vmatmul.mubr.bf16.gmra.mrb[0].mxu0 %v3886
      %v4020 = vpop.f32.mrb[0].mxu0
      %v4021 = vadd.f32 %v3825, %v4020
      %v4022 = vpop.f32.mrb[0].mxu0
      %v4023 = vpop.f32.mrb[0].mxu0
      %v4024 = vadd.f32 %v3825, %v4023
      %v4025 = vpop.f32.mrb[0].mxu0
      %4026 = vmatprep.mubr.bf16.mxu0 0
      %4027 = vmatmul.mubr.bf16.gmra.mrb[0].mxu0 %v3889
      %v4028 = vpop.f32.mrb[0].mxu0
      %v4029 = vadd.f32 %v3825, %v4028
      %v4030 = vpop.f32.mrb[0].mxu0
      %v4031 = vpop.f32.mrb[0].mxu0
      %v4032 = vadd.f32 %v3825, %v4031
      %v4033 = vpop.f32.mrb[0].mxu0
      %4034 = vmatprep.mubr.bf16.mxu0 0
      %4035 = vmatmul.mubr.bf16.gmra.mrb[0].mxu0 %v3892
      %v4036 = vpop.f32.mrb[0].mxu0
      %v4037 = vadd.f32 %v3825, %v4036
      %v4038 = vpop.f32.mrb[0].mxu0
      %v4039 = vpop.f32.mrb[0].mxu0
      %v4040 = vadd.f32 %v3825, %v4039
      %v4041 = vpop.f32.mrb[0].mxu0
      %4042 = vmatprep.mubr.bf16.mxu0 0
      %4043 = vmatmul.mubr.bf16.gmra.mrb[0].mxu0 %v3895
      %v4044 = vpop.f32.mrb[0].mxu0
      %v4045 = vadd.f32 %v3825, %v4044
      %v4046 = vpop.f32.mrb[0].mxu0
      %v4047 = vpop.f32.mrb[0].mxu0
      %v4048 = vadd.f32 %v3825, %v4047
      %v4049 = vpop.f32.mrb[0].mxu0
      %4050 = vmatprep.mubr.bf16.mxu0 0
      %4051 = vmatmul.mubr.bf16.gmra.mrb[0].mxu0 %v3898
      %v4052 = vpop.f32.mrb[0].mxu0
      %v4053 = vadd.f32 %v3825, %v4052
      %v4054 = vpop.f32.mrb[0].mxu0
      %v4055 = vpop.f32.mrb[0].mxu0
      %v4056 = vadd.f32 %v3825, %v4055
      %v4057 = vpop.f32.mrb[0].mxu0
      %4058 = vmatprep.mubr.bf16.mxu0 0
      %4059 = vmatmul.mubr.bf16.gmra.mrb[0].mxu0 %v3901
      %v4060 = vpop.f32.mrb[0].mxu0
      %v4061 = vadd.f32 %v3825, %v4060
      %v4062 = vpop.f32.mrb[0].mxu0
      %v4063 = vpop.f32.mrb[0].mxu0
      %v4064 = vadd.f32 %v3825, %v4063
      %v4065 = vpop.f32.mrb[0].mxu0
      %4066 = vdwg.mxu0
      %v4067 = vmax.f32 %v3941, 0.0
      %v4068 = vmax.f32 %v3944, 0.0
      %v4069 = vmax.f32 %v3949, 0.0
      %v4070 = vmax.f32 %v3952, 0.0
      %v4071 = vmax.f32 %v3957, 0.0
      %v4072 = vmax.f32 %v3960, 0.0
      %v4073 = vmax.f32 %v3965, 0.0
      %v4074 = vmax.f32 %v3968, 0.0
      %v4075 = vmax.f32 %v3973, 0.0
      %v4076 = vmax.f32 %v3976, 0.0
      %v4077 = vmax.f32 %v3981, 0.0
      %v4078 = vmax.f32 %v3984, 0.0
      %v4079 = vmax.f32 %v3989, 0.0
      %v4080 = vmax.f32 %v3992, 0.0
      %v4081 = vmax.f32 %v3997, 0.0
      %v4082 = vmax.f32 %v4000, 0.0
      %v4083 = vmax.f32 %v4005, 0.0
      %v4084 = vmax.f32 %v4008, 0.0
      %v4085 = vmax.f32 %v4013, 0.0
      %v4086 = vmax.f32 %v4016, 0.0
      %v4087 = vmax.f32 %v4021, 0.0
      %v4088 = vmax.f32 %v4024, 0.0
      %v4089 = vmax.f32 %v4029, 0.0
      %v4090 = vmax.f32 %v4032, 0.0
      %v4091 = vmax.f32 %v4037, 0.0
      %v4092 = vmax.f32 %v4040, 0.0
      %v4093 = vmax.f32 %v4045, 0.0
      %v4094 = vmax.f32 %v4048, 0.0
      %v4095 = vmax.f32 %v4053, 0.0
      %v4096 = vmax.f32 %v4056, 0.0
      %v4097 = vmax.f32 %v4061, 0.0
      %v4098 = vmax.f32 %v4064, 0.0
      %4099 = vst.msk [vmem:[%s325] sm:$0xff] %vm409, %v4067
      %4100 = vst.msk [vmem:[%s325 + $0x8] sm:$0xff] %vm409, %v4068
      %4101 = vst.msk [vmem:[%s325 + $0x10] sm:$0xff] %vm409, %v4069
      %4102 = vst.msk [vmem:[%s325 + $0x18] sm:$0xff] %vm409, %v4070
      %4103 = vst.msk [vmem:[%s325 + $0x20] sm:$0xff] %vm409, %v4071
      %4104 = vst.msk [vmem:[%s325 + $0x28] sm:$0xff] %vm409, %v4072
      %4105 = vst.msk [vmem:[%s325 + $0x30] sm:$0xff] %vm409, %v4073
      %4106 = vst.msk [vmem:[%s325 + $0x38] sm:$0xff] %vm409, %v4074
      %4107 = vst.msk [vmem:[%s325 + $0x40] sm:$0xff] %vm409, %v4075
      %4108 = vst.msk [vmem:[%s325 + $0x48] sm:$0xff] %vm409, %v4076
      %4109 = vst.msk [vmem:[%s325 + $0x50] sm:$0xff] %vm409, %v4077
      %4110 = vst.msk [vmem:[%s325 + $0x58] sm:$0xff] %vm409, %v4078
      %4111 = vst.msk [vmem:[%s325 + $0x60] sm:$0xff] %vm409, %v4079
      %4112 = vst.msk [vmem:[%s325 + $0x68] sm:$0xff] %vm409, %v4080
      %4113 = vst.msk [vmem:[%s325 + $0x70] sm:$0xff] %vm409, %v4081
      %4114 = vst.msk [vmem:[%s325 + $0x78] sm:$0xff] %vm409, %v4082
      %4115 = vst.msk [vmem:[%s325 + $0x80] sm:$0xff] %vm409, %v4083
      %4116 = vst.msk [vmem:[%s325 + $0x88] sm:$0xff] %vm409, %v4084
      %4117 = vst.msk [vmem:[%s325 + $0x90] sm:$0xff] %vm409, %v4085
      %4118 = vst.msk [vmem:[%s325 + $0x98] sm:$0xff] %vm409, %v4086
      %4119 = vst.msk [vmem:[%s325 + $0xa0] sm:$0xff] %vm409, %v4087
      %4120 = vst.msk [vmem:[%s325 + $0xa8] sm:$0xff] %vm409, %v4088
      %4121 = vst.msk [vmem:[%s325 + $0xb0] sm:$0xff] %vm409, %v4089
      %4122 = vst.msk [vmem:[%s325 + $0xb8] sm:$0xff] %vm409, %v4090
      %4123 = vst.msk [vmem:[%s325 + $0xc0] sm:$0xff] %vm409, %v4091
      %4124 = vst.msk [vmem:[%s325 + $0xc8] sm:$0xff] %vm409, %v4092
      %4125 = vst.msk [vmem:[%s325 + $0xd0] sm:$0xff] %vm409, %v4093
      %4126 = vst.msk [vmem:[%s325 + $0xd8] sm:$0xff] %vm409, %v4094
      %4127 = vst.msk [vmem:[%s325 + $0xe0] sm:$0xff] %vm409, %v4095
      %4128 = vst.msk [vmem:[%s325 + $0xe8] sm:$0xff] %vm409, %v4096
      %4129 = vst.msk [vmem:[%s325 + $0xf0] sm:$0xff] %vm409, %v4097
      %4130 = vst.msk [vmem:[%s325 + $0xf8] sm:$0xff] %vm409, %v4098
      %p4131 = scmp.lt.s32.totalorder %s19, 1
      %s4132 = scalar_select %p4131, %s19, 1
      %s4133 = smul.addr %s4132, 32
      %s4134 = smul.addr %s4133, 8
      %s4135 = scalar_lea.vmem %s8, %s4134
      // Predicated region
      $region53: #{up_sum_block_forward.1} parent=51 // pred_check
        %p4136 = pneg %p215
      $region54: #{up_sum_block_forward.1} parent=51 // pred_check_branch
        %4138 = sbr.rel (%p4136) target = $region56
      $region55: #{up_sum_block_forward.1} parent=51 // pred_region
        _
      $region56: #{up_sum_block_forward.1} parent=51 // pred_fallthru
        _
    $region52: #{up_sum_block_forward.1} parent=5 // pred_fallthru
      _
    %p4139 = scmp.le.s32.totalorder 2, %s14
    // Predicated region
    $region57: #{up_sum_block_forward.1} parent=5 // pred_check
      %p4140 = pneg %p4139
    $region58: #{up_sum_block_forward.1} parent=5 // pred_check_branch
      %4142 = sbr.rel (%p4140) target = $region60
    $region59: #{up_sum_block_forward.1} parent=5 // pred_region
      %s4143 = ssub.s32 %s14, 2
      // Predicated region
      $region61: #{up_sum_block_forward.1} parent=59 // pred_check
        %p4144 = pneg %p221
      $region62: #{up_sum_block_forward.1} parent=59 // pred_check_branch
        %4146 = sbr.rel (%p4144) target = $region64
      $region63: #{up_sum_block_forward.1} parent=59 // pred_region
        %p4147 = scmp.lt.s32.totalorder %s20, 1
        %s4148 = scalar_select %p4147, %s20, 1
        %s4149 = smul.addr %s4148, 32
        %s4150 = smul.addr %s4149, 8
        %s4151 = scalar_lea.vmem %s8, %s4150
      $region64: #{up_sum_block_forward.1} parent=59 // pred_fallthru
        _
    $region60: #{up_sum_block_forward.1} parent=5 // pred_fallthru
      _
  $region6: #{up_sum_block_forward.1} parent=0 // loop_footer
    %s18 = sadd.s32 1, %s14
  $region7: #{up_sum_block_forward.1} parent=0 // loop_footer_branch
    %13 = sbr.rel target = $region3
  $region8: #{up_sum_block_forward.1} parent=0 // loop_exit
    _

</llo_original>
